<compile_context>
chip_gen: v5e
topology: v5e:2x2
jax: 0.10.0
libtpu: 0.0.40
codegen_flags: <defaults>
</compile_context>

<pallas_src>
import jax
import jax.numpy as jnp
from jax.experimental import pallas as pl
from jax.experimental.pallas import tpu as pltpu


# ----------------------------------------------------------------------------- config

CFG = dict(
    hidden_channels=64,
    out_channels=4,
    num_blocks=2,
    int_emb_size=32,
    basis_emb_size=8,
    out_emb_channels=64,
    num_spherical=7,
    num_radial=6,
    num_before_skip=1,
    num_after_skip=2,
    num_output_layers=2,
)

_ROW_TILE = 1024                   # row tile for large E/T (VMEM use is only a few MiB)
_MXU_DTYPE = jnp.bfloat16          # MXU operand dtype (f32 accumulation kept)
_ACT_DTYPE = jnp.bfloat16          # HBM activation dtype between kernels
_COMPILER_PARAMS = pltpu.CompilerParams(
    dimension_semantics=("parallel",),      # row grid shards across v7x's 2 TensorCores
    vmem_limit_bytes=32 * 1024 * 1024,      # modest explicit budget, safe on v5e/v6e/v7x
)


# ----------------------------------------------------------------------------- helpers

def _round_up(x, m):
    return ((x + m - 1) // m) * m


def _swish(v):
    # single-EUP form: x * sigmoid(x) with sigmoid(x) = 0.5*(tanh(x/2)+1)
    return v * (0.5 * jnp.tanh(0.5 * v) + 0.5)


def _dot(a, b):
    # MXU matmul: bf16 operands, f32 accumulation.
    return jnp.dot(a.astype(_MXU_DTYPE), b.astype(_MXU_DTYPE),
                   preferred_element_type=jnp.float32)


def _row_call(kernel, row_inputs, const_inputs, out_widths, out_dtype):
    """Run `kernel` tiled over the row (first) dimension of `row_inputs`.

    row_inputs  : list of (M, k) arrays, tiled over rows.
    const_inputs: arrays passed as full (untiled) VMEM-resident blocks.
    out_widths  : output feature widths; outputs are (M, w) of out_dtype.
    """
    M = row_inputs[0].shape[0]
    TM = _ROW_TILE if M >= _ROW_TILE else _round_up(max(M, 1), 16)
    Mp = _round_up(M, TM)
    if Mp != M:
        # NOTE: padded rows hold swish(bias) garbage; callers slice [:M] before any
        # segment accumulation (invariant kept below).
        row_inputs = [jnp.pad(a, ((0, Mp - M), (0, 0))) for a in row_inputs]

    in_specs = [pl.BlockSpec((TM, a.shape[1]), lambda i: (i, 0)) for a in row_inputs]
    in_specs += [
        pl.BlockSpec(c.shape, (lambda i, nd=c.ndim: (0,) * nd)) for c in const_inputs
    ]
    out_specs = tuple(pl.BlockSpec((TM, w), lambda i: (i, 0)) for w in out_widths)
    out_shape = tuple(jax.ShapeDtypeStruct((Mp, w), out_dtype) for w in out_widths)

    single = len(out_widths) == 1
    res = pl.pallas_call(
        kernel,
        grid=(Mp // TM,),
        in_specs=in_specs,
        out_specs=out_specs[0] if single else out_specs,
        out_shape=out_shape[0] if single else out_shape,
        compiler_params=_COMPILER_PARAMS,
    )(*row_inputs, *const_inputs)

    if single:
        return res[:M]
    return tuple(r[:M] for r in res)


# ----------------------------------------------------------------------------- kernels

def _apply_residuals(h, refs):
    # refs = [w1, b1, w2, b2] * n   -- ResidualLayer: x + swish(lin2(swish(lin1(x))))
    for r in range(len(refs) // 4):
        w1, b1, w2, b2 = refs[4 * r: 4 * r + 4]
        t = _swish(_dot(h, w1[...]) + b1[...])
        t = _swish(_dot(t, w2[...]) + b2[...])
        h = h + t
    return h


def _make_start_kernel(H):
    """EmbeddingBlock + output-block-0 edge message + InteractionPPBlock_pre[0], fused."""
    def kernel(xij_ref, rbf_ref,
               eb_ref, wij_ref, wr_ref, elb_ref, we_ref, wo_ref,
               wint_ref, wr2_ref, wx_ref, bx_ref, wd_ref,
               xx_ref, xkj_ref, m_ref):
        rbf = rbf_ref[...]
        # EmbeddingBlock: swish(lin(cat[x_i, x_j, swish(rbf_emb + bias)]))
        r = _swish(_dot(rbf, we_ref[...]) + eb_ref[...])
        # x_i|x_j arrive pre-concatenated (2H lanes) -> one 128-K matmul for the MXU
        x = _swish(_dot(xij_ref[...], wij_ref[...]) + _dot(r, wr_ref[...]) + elb_ref[...])
        # output block 0 edge message (segment-summed to atoms outside the kernel)
        m_ref[...] = (_dot(rbf, wo_ref[...]) * x).astype(m_ref.dtype)
        # InteractionPPBlock_pre[0]: single (H, 2H) lin_x matmul, in-register lane split
        rbf_h = _dot(_dot(rbf, wint_ref[...]), wr2_ref[...])
        xx2 = _swish(_dot(x, wx_ref[...]) + bx_ref[...])
        x_ji = xx2[:, :H]
        x_kj = xx2[:, H:] * rbf_h
        xkj_ref[...] = _swish(_dot(x_kj, wd_ref[...])).astype(xkj_ref.dtype)
        # lane-dense packed state [x | x_ji]: one full 128-lane store
        xx_ref[...] = jnp.concatenate([x, x_ji], axis=-1).astype(xx_ref.dtype)
    return kernel


def _make_block_kernel(H, n_before, n_after, has_pre):
    """InteractionPPBlock_post[b] + output edge message (+ next block's pre), fused."""
    n_post = 1 + 4 * n_before + 2 + 4 * n_after   # w_up, before*, w_lin, b_lin, after*

    def kernel(*refs):
        xx_ref, xkje_ref, rbf_ref = refs[:3]
        c = list(refs[3:])
        post = c[:n_post]
        c = c[n_post:]
        wo_ref = c[0]
        c = c[1:]
        if has_pre:
            wint_ref, wr2_ref, wx_ref, bx_ref, wd_ref = c[:5]
            c = c[5:]
        outs = c

        w_up = post[0]
        before = post[1:1 + 4 * n_before]
        w_lin = post[1 + 4 * n_before]
        b_lin = post[2 + 4 * n_before]
        after = post[3 + 4 * n_before:]

        xx = xx_ref[...]
        x = xx[:, :H].astype(jnp.float32)
        x_ji = xx[:, H:].astype(jnp.float32)
        x_kj = _swish(_dot(xkje_ref[...], w_up[...]))       # lin_up (no bias)
        h = x_ji + x_kj
        h = _apply_residuals(h, before)
        h = _swish(_dot(h, w_lin[...]) + b_lin[...]) + x
        h = _apply_residuals(h, after)

        rbf = rbf_ref[...]
        m = _dot(rbf, wo_ref[...]) * h                      # output block edge message
        if has_pre:
            xx_out, xkj_out, m_out = outs
            m_out[...] = m.astype(m_out.dtype)
            rbf_h = _dot(_dot(rbf, wint_ref[...]), wr2_ref[...])
            xx2 = _swish(_dot(h, wx_ref[...]) + bx_ref[...])
            x_ji_n = xx2[:, :H]
            x_kj_n = xx2[:, H:] * rbf_h
            xkj_out[...] = _swish(_dot(x_kj_n, wd_ref[...])).astype(xkj_out.dtype)
            xx_out[...] = jnp.concatenate([h, x_ji_n], axis=-1).astype(xx_out.dtype)
        else:
            (m_out,) = outs
            m_out[...] = m.astype(m_out.dtype)
    return kernel


def _make_sbf_kernel():
    """lin_sbf for all interaction blocks: exactly two matmuls, one full-width store."""
    def kernel(sbf_ref, w1_ref, w2_ref, o_ref):
        s1 = _dot(sbf_ref[...], w1_ref[...])          # (T, NB*Bk)
        o_ref[...] = _dot(s1, w2_ref[...]).astype(o_ref.dtype)   # block-diag second weight
    return kernel


def _make_epilogue_kernel(n_blk, n_lin):
    """OutputPPBlock_epilogue (BatchLinear lin_up + swish BatchLinears) + output_lin, fused.

    The concat-over-blocks @ output_lin is expressed as a per-block sum of
    y_b @ output_lin_w[b]; per-block P arrays arrive as separate lane-dense inputs.
    """
    def kernel(*refs):
        p_refs = refs[:n_blk]
        c = refs[n_blk:]
        up_w, up_b = c[0], c[1]
        lin_refs = c[2:2 + 2 * n_lin]
        outlin = c[2 + 2 * n_lin]
        o_ref = c[3 + 2 * n_lin]
        acc = jnp.zeros(o_ref.shape, jnp.float32)
        for b in range(n_blk):
            y = _dot(p_refs[b][...], up_w[b]) + up_b[b]
            for l in range(n_lin):
                y = _swish(_dot(y, lin_refs[2 * l][b]) + lin_refs[2 * l + 1][b])
            acc = acc + _dot(y, outlin[b])
        o_ref[...] = acc.astype(o_ref.dtype)
    return kernel


def output_epilogue(P_list, params, cfg):
    A = P_list[0].shape[0]
    n_blk = len(P_list)
    H = cfg["hidden_channels"]
    O = cfg["out_emb_channels"]
    OC = cfg["out_channels"]
    NL = cfg["num_output_layers"]

    TA = _ROW_TILE if A >= _ROW_TILE else _round_up(max(A, 1), 16)
    Ap = _round_up(A, TA)
    if Ap != A:
        P_list = [jnp.pad(p, ((0, Ap - A), (0, 0))) for p in P_list]

    consts = [params["out_up_w"], params["out_up_b"].reshape(n_blk, 1, O)]
    for lw, lb in params["out_lins"]:
        consts += [lw, lb.reshape(n_blk, 1, O)]
    consts.append(params["output_lin_w"].reshape(n_blk, O, OC))

    in_specs = [pl.BlockSpec((TA, H), lambda i: (i, 0)) for _ in P_list]
    in_specs += [
        pl.BlockSpec(c.shape, (lambda i, nd=c.ndim: (0,) * nd)) for c in consts
    ]

    out = pl.pallas_call(
        _make_epilogue_kernel(n_blk, NL),
        grid=(Ap // TA,),
        in_specs=in_specs,
        out_specs=pl.BlockSpec((TA, OC), lambda i: (i, 0)),
        out_shape=jax.ShapeDtypeStruct((Ap, OC), jnp.float32),
        compiler_params=_COMPILER_PARAMS,
    )(*P_list, *consts)
    return out[:A]


# ----------------------------------------------------------------------------- params

class _KeyGen:
    def __init__(self, key):
        self.key = key

    def __call__(self):
        self.key, sub = jax.random.split(self.key)
        return sub


def init_params(key, cfg):
    # Deterministic synthetic init (shapes from the module __init__).
    # NOTE: the reference zero-inits output_lin; small random values keep the demo non-trivial.
    kg = _KeyGen(key)
    H = cfg["hidden_channels"]
    I = cfg["int_emb_size"]
    Bk = cfg["basis_emb_size"]
    O = cfg["out_emb_channels"]
    Sp = cfg["num_spherical"]
    R = cfg["num_radial"]
    NB = cfg["num_blocks"]
    OC = cfg["out_channels"]
    NL = cfg["num_output_layers"]

    def rnd(shape, s=0.1):
        return s * jax.random.normal(kg(), shape, jnp.float32)

    def res_params():
        return {"w1": rnd((H, H)), "b1": rnd((H,)), "w2": rnd((H, H)), "b2": rnd((H,))}

    params = {
        "emb_table": rnd((95, H), 1.0),
        "emb_bias": rnd((H,)),
        "emb_lin_w": rnd((3 * H, H)),
        "emb_lin_b": rnd((H,)),
        "lin_rbf_w": rnd((R, NB * Bk + (NB + 2) * H)),
        "lin_sbf": rnd((NB, Sp * R + I, Bk)),
        "pre": [
            {
                "w_rbf2": rnd((Bk, H)),
                "w_x": rnd((H, 2 * H)),
                "b_x": rnd((2 * H,)),
                "w_down": rnd((H, I)),
            }
            for _ in range(NB)
        ],
        "post": [
            {
                "w_up": rnd((I, H)),
                "before": [res_params() for _ in range(cfg["num_before_skip"])],
                "w_lin": rnd((H, H)),
                "b_lin": rnd((H,)),
                "after": [res_params() for _ in range(cfg["num_after_skip"])],
            }
            for _ in range(NB)
        ],
        "out_up_w": rnd((NB + 1, H, O)),
        "out_up_b": rnd((NB + 1, O)),
        "out_lins": [(rnd((NB + 1, O, O)), rnd((NB + 1, O))) for _ in range(NL)],
        "output_lin_w": rnd(((NB + 1) * O, OC)),
    }
    return params


# ----------------------------------------------------------------------------- forward

def dimenet_pp_forward(params, cfg, z, rbf_raw, sbf_raw, idx_i, idx_j, idx_kj, idx_ji,
                       num_atoms):
    """Composed DimeNet++ forward over precomputed radial/spherical bases.

    z       : (A,)  atom types int32
    rbf_raw : (E, num_radial)
    sbf_raw : (T, num_spherical * num_radial)
    idx_i, idx_j   : (E,) edge endpoints
    idx_kj, idx_ji : (T,) triplet -> edge indices
    """
    H = cfg["hidden_channels"]
    I = cfg["int_emb_size"]
    Bk = cfg["basis_emb_size"]
    NB = cfg["num_blocks"]
    S = cfg["num_spherical"] * cfg["num_radial"]
    nbefore = cfg["num_before_skip"]
    nafter = cfg["num_after_skip"]
    E = rbf_raw.shape[0]
    act_dt = _ACT_DTYPE

    # -- split the fused lin_rbf weight once (tiny trace-time slices) ----------------------
    lw = params["lin_rbf_w"]                               # (R, NB*Bk + (NB+2)*H)
    off = 0
    W_emb = lw[:, off:off + H]; off += H
    W_out = [lw[:, off:off + H]]; off += H
    W_int = []
    for _ in range(NB):
        W_int.append(lw[:, off:off + Bk]); off += Bk
        W_out.append(lw[:, off:off + H]); off += H

    ew = params["emb_lin_w"]                               # (3H, H)
    w_ij = ew[:2 * H]                                      # stacked (x_i | x_j) weight
    w_r = ew[2 * H:]

    def pre_consts(b):
        p = params["pre"][b]
        return [W_int[b], p["w_rbf2"], p["w_x"], p["b_x"].reshape(1, 2 * H), p["w_down"]]

    def post_consts(b):
        p = params["post"][b]
        c = [p["w_up"]]
        for rp in p["before"]:
            c += [rp["w1"], rp["b1"].reshape(1, H), rp["w2"], rp["b2"].reshape(1, H)]
        c += [p["w_lin"], p["b_lin"].reshape(1, H)]
        for rp in p["after"]:
            c += [rp["w1"], rp["b1"].reshape(1, H), rp["w2"], rp["b2"].reshape(1, H)]
        return c

    # -- spherical-basis projections for all blocks: two matmuls total ---------------------
    W1all = jnp.concatenate([params["lin_sbf"][b, :S, :] for b in range(NB)], axis=1)
    W2bd = jax.scipy.linalg.block_diag(
        *[params["lin_sbf"][b, S:, :].T for b in range(NB)])         # (NB*Bk, NB*I)
    sbf2_all = _row_call(_make_sbf_kernel(), [sbf_raw.astype(act_dt)],
                         [W1all, W2bd], [NB * I], act_dt)

    # -- atom embedding + edge-endpoint gathers (glue), pre-concatenated 2H-lane input -----
    atom_emb = params["emb_table"].astype(act_dt)[z]
    xij = jnp.concatenate([atom_emb[idx_i], atom_emb[idx_j]], axis=-1)   # (E, 2H) bf16
    rbf_b = rbf_raw.astype(act_dt)

    # -- block 0: embedding + output message 0 + pre[0], one fused kernel ------------------
    start_c = [params["emb_bias"].reshape(1, H), w_ij, w_r,
               params["emb_lin_b"].reshape(1, H), W_emb, W_out[0]] + pre_consts(0)
    xx, x_kj, m = _row_call(_make_start_kernel(H), [xij, rbf_b], start_c,
                            [2 * H, I, H], act_dt)

    # segment accumulation in f32 (activations stored bf16)
    P_list = [jax.ops.segment_sum(m.astype(jnp.float32), idx_i, num_segments=num_atoms)]

    for b in range(NB):
        sbf2_b = sbf2_all[:, b * I:(b + 1) * I]
        # TODO(synk): at OC20 scale, pre-sort triplets by idx_ji and fuse this gather * sbf
        #             * segment-sum (and the m -> atom scatter) into a sorted-segment Pallas
        #             kernel with PrefetchScalarGridSpec-prefetched indices.
        x_kj_t = x_kj[idx_kj].astype(jnp.float32) * sbf2_b.astype(jnp.float32)
        x_kj_e = jax.ops.segment_sum(x_kj_t, idx_ji, num_segments=E).astype(act_dt)

        has_pre = b < NB - 1
        consts = post_consts(b) + [W_out[b + 1]]
        if has_pre:
            consts += pre_consts(b + 1)
            xx, x_kj, m = _row_call(
                _make_block_kernel(H, nbefore, nafter, True),
                [xx, x_kj_e, rbf_b], consts, [2 * H, I, H], act_dt)
        else:
            m = _row_call(
                _make_block_kernel(H, nbefore, nafter, False),
                [xx, x_kj_e, rbf_b], consts, [H], act_dt)
        P_list.append(jax.ops.segment_sum(m.astype(jnp.float32), idx_i,
                                          num_segments=num_atoms))

    return output_epilogue(P_list, params, cfg)            # (A, out_channels)


# ----------------------------------------------------------------------------- main

if __name__ == "__main__":
    # TODO(synk): reference DimeNetPlusPlus.forward raises NotImplementedError; rbf/sbf bases
    #             and graph indices are synthesized here instead of being derived from pos.
    key = jax.random.PRNGKey(0)
    k_par, k_z, k_i, k_j, k_kj, k_ji, k_rbf, k_sbf = jax.random.split(key, 8)

    num_atoms, num_edges, num_triplets = 16, 64, 128
    cfg = CFG
    params = init_params(k_par, cfg)

    z = jax.random.randint(k_z, (num_atoms,), 0, 95, dtype=jnp.int32)
    idx_i = jax.random.randint(k_i, (num_edges,), 0, num_atoms, dtype=jnp.int32)
    idx_j = jax.random.randint(k_j, (num_edges,), 0, num_atoms, dtype=jnp.int32)
    idx_kj = jax.random.randint(k_kj, (num_triplets,), 0, num_edges, dtype=jnp.int32)
    idx_ji = jax.random.randint(k_ji, (num_triplets,), 0, num_edges, dtype=jnp.int32)
    rbf_raw = jax.random.normal(k_rbf, (num_edges, cfg["num_radial"]), jnp.float32)
    sbf_raw = jax.random.normal(
        k_sbf, (num_triplets, cfg["num_spherical"] * cfg["num_radial"]), jnp.float32)

    fwd = jax.jit(
        lambda p, zz, rbf, sbf, ii, ij, ikj, iji: dimenet_pp_forward(
            p, cfg, zz, rbf, sbf, ii, ij, ikj, iji, num_atoms))

    out = fwd(params, z, rbf_raw, sbf_raw, idx_i, idx_j, idx_kj, idx_ji)
    out = jax.block_until_ready(out)
    assert out.shape == (num_atoms, cfg["out_channels"])
    assert bool(jnp.all(jnp.isfinite(out)))
    print("KERNEL_OK")
</pallas_src>

<mosaic_0001>
module attributes {stable_mosaic.version = 11 : i64} {
  func.func @kernel(%arg0: i32, %arg1: memref<64x128xbf16, #tpu.memory_space<vmem>>, %arg2: memref<64x6xbf16, #tpu.memory_space<vmem>>, %arg3: memref<1x64xf32, #tpu.memory_space<vmem>>, %arg4: memref<128x64xf32, #tpu.memory_space<vmem>>, %arg5: memref<64x64xf32, #tpu.memory_space<vmem>>, %arg6: memref<1x64xf32, #tpu.memory_space<vmem>>, %arg7: memref<6x64xf32, #tpu.memory_space<vmem>>, %arg8: memref<6x64xf32, #tpu.memory_space<vmem>>, %arg9: memref<6x8xf32, #tpu.memory_space<vmem>>, %arg10: memref<8x64xf32, #tpu.memory_space<vmem>>, %arg11: memref<64x128xf32, #tpu.memory_space<vmem>>, %arg12: memref<1x128xf32, #tpu.memory_space<vmem>>, %arg13: memref<64x32xf32, #tpu.memory_space<vmem>>, %arg14: memref<64x128xbf16, #tpu.memory_space<vmem>>, %arg15: memref<64x32xbf16, #tpu.memory_space<vmem>>, %arg16: memref<64x64xbf16, #tpu.memory_space<vmem>>) attributes {dimension_semantics = [#tpu.dimension_semantics<parallel>], iteration_bounds = array<i64: 1>, scalar_prefetch = 0 : i64, scratch_operands = 0 : i64, tpu.core_type = #tpu.core_type<tc>, window_params = [{transform_indices = @transform_0, window_bounds = array<i64: 64, 128>}, {transform_indices = @transform_1, window_bounds = array<i64: 64, 6>}, {pipeline_mode = #tpu.pipeline_mode<synchronous>, transform_indices = @transform_2, window_bounds = array<i64: 1, 64>}, {pipeline_mode = #tpu.pipeline_mode<synchronous>, transform_indices = @transform_3, window_bounds = array<i64: 128, 64>}, {pipeline_mode = #tpu.pipeline_mode<synchronous>, transform_indices = @transform_4, window_bounds = array<i64: 64, 64>}, {pipeline_mode = #tpu.pipeline_mode<synchronous>, transform_indices = @transform_5, window_bounds = array<i64: 1, 64>}, {pipeline_mode = #tpu.pipeline_mode<synchronous>, transform_indices = @transform_6, window_bounds = array<i64: 6, 64>}, {pipeline_mode = #tpu.pipeline_mode<synchronous>, transform_indices = @transform_7, window_bounds = array<i64: 6, 64>}, {pipeline_mode = #tpu.pipeline_mode<synchronous>, transform_indices = @transform_8, window_bounds = array<i64: 6, 8>}, {pipeline_mode = #tpu.pipeline_mode<synchronous>, transform_indices = @transform_9, window_bounds = array<i64: 8, 64>}, {pipeline_mode = #tpu.pipeline_mode<synchronous>, transform_indices = @transform_10, window_bounds = array<i64: 64, 128>}, {pipeline_mode = #tpu.pipeline_mode<synchronous>, transform_indices = @transform_11, window_bounds = array<i64: 1, 128>}, {pipeline_mode = #tpu.pipeline_mode<synchronous>, transform_indices = @transform_12, window_bounds = array<i64: 64, 32>}, {transform_indices = @transform_13, window_bounds = array<i64: 64, 128>}, {transform_indices = @transform_14, window_bounds = array<i64: 64, 32>}, {transform_indices = @transform_15, window_bounds = array<i64: 64, 64>}]} {
    %c0 = arith.constant 0 : index
    %c0_0 = arith.constant 0 : index
    %0 = vector.load %arg2[%c0, %c0_0] : memref<64x6xbf16, #tpu.memory_space<vmem>>, vector<64x6xbf16>
    %c0_1 = arith.constant 0 : index
    %c0_2 = arith.constant 0 : index
    %1 = vector.load %arg7[%c0_1, %c0_2] : memref<6x64xf32, #tpu.memory_space<vmem>>, vector<6x64xf32>
    %2 = arith.truncf %1 : vector<6x64xf32> to vector<6x64xbf16>
    %cst = arith.constant dense<0.000000e+00> : vector<64x64xf32>
    %3 = tpu.matmul %0, %2, %cst {dimension_numbers = #tpu.dot_dimension_numbers<[1], [0], [0], [1], [0, 0, 1, 1], [], []>} : vector<64x6xbf16>, vector<6x64xbf16>, vector<64x64xf32> -> vector<64x64xf32>
    %c0_3 = arith.constant 0 : index
    %c0_4 = arith.constant 0 : index
    %4 = vector.load %arg3[%c0_3, %c0_4] : memref<1x64xf32, #tpu.memory_space<vmem>>, vector<1x64xf32>
    %5 = vector.broadcast %4 : vector<1x64xf32> to vector<64x64xf32>
    %6 = arith.addf %3, %5 : vector<64x64xf32>
    %cst_5 = arith.constant 5.000000e-01 : f32
    %7 = vector.broadcast %cst_5 : f32 to vector<64x64xf32>
    %8 = arith.mulf %7, %6 : vector<64x64xf32>
    %9 = math.tanh %8 : vector<64x64xf32>
    %cst_6 = arith.constant 5.000000e-01 : f32
    %10 = vector.broadcast %cst_6 : f32 to vector<64x64xf32>
    %11 = arith.mulf %10, %9 : vector<64x64xf32>
    %cst_7 = arith.constant 5.000000e-01 : f32
    %12 = vector.broadcast %cst_7 : f32 to vector<64x64xf32>
    %13 = arith.addf %11, %12 : vector<64x64xf32>
    %14 = arith.mulf %6, %13 : vector<64x64xf32>
    %c0_8 = arith.constant 0 : index
    %c0_9 = arith.constant 0 : index
    %15 = vector.load %arg1[%c0_8, %c0_9] : memref<64x128xbf16, #tpu.memory_space<vmem>>, vector<64x128xbf16>
    %c0_10 = arith.constant 0 : index
    %c0_11 = arith.constant 0 : index
    %16 = vector.load %arg4[%c0_10, %c0_11] : memref<128x64xf32, #tpu.memory_space<vmem>>, vector<128x64xf32>
    %17 = arith.truncf %16 : vector<128x64xf32> to vector<128x64xbf16>
    %cst_12 = arith.constant dense<0.000000e+00> : vector<64x64xf32>
    %18 = tpu.matmul %15, %17, %cst_12 {dimension_numbers = #tpu.dot_dimension_numbers<[1], [0], [0], [1], [0, 0, 1, 1], [], []>} : vector<64x128xbf16>, vector<128x64xbf16>, vector<64x64xf32> -> vector<64x64xf32>
    %c0_13 = arith.constant 0 : index
    %c0_14 = arith.constant 0 : index
    %19 = vector.load %arg5[%c0_13, %c0_14] : memref<64x64xf32, #tpu.memory_space<vmem>>, vector<64x64xf32>
    %20 = arith.truncf %14 : vector<64x64xf32> to vector<64x64xbf16>
    %21 = arith.truncf %19 : vector<64x64xf32> to vector<64x64xbf16>
    %cst_15 = arith.constant dense<0.000000e+00> : vector<64x64xf32>
    %22 = tpu.matmul %20, %21, %cst_15 {dimension_numbers = #tpu.dot_dimension_numbers<[1], [0], [0], [1], [0, 0, 1, 1], [], []>} : vector<64x64xbf16>, vector<64x64xbf16>, vector<64x64xf32> -> vector<64x64xf32>
    %23 = arith.addf %18, %22 : vector<64x64xf32>
    %c0_16 = arith.constant 0 : index
    %c0_17 = arith.constant 0 : index
    %24 = vector.load %arg6[%c0_16, %c0_17] : memref<1x64xf32, #tpu.memory_space<vmem>>, vector<1x64xf32>
    %25 = vector.broadcast %24 : vector<1x64xf32> to vector<64x64xf32>
    %26 = arith.addf %23, %25 : vector<64x64xf32>
    %cst_18 = arith.constant 5.000000e-01 : f32
    %27 = vector.broadcast %cst_18 : f32 to vector<64x64xf32>
    %28 = arith.mulf %27, %26 : vector<64x64xf32>
    %29 = math.tanh %28 : vector<64x64xf32>
    %cst_19 = arith.constant 5.000000e-01 : f32
    %30 = vector.broadcast %cst_19 : f32 to vector<64x64xf32>
    %31 = arith.mulf %30, %29 : vector<64x64xf32>
    %cst_20 = arith.constant 5.000000e-01 : f32
    %32 = vector.broadcast %cst_20 : f32 to vector<64x64xf32>
    %33 = arith.addf %31, %32 : vector<64x64xf32>
    %34 = arith.mulf %26, %33 : vector<64x64xf32>
    %c0_21 = arith.constant 0 : index
    %c0_22 = arith.constant 0 : index
    %35 = vector.load %arg8[%c0_21, %c0_22] : memref<6x64xf32, #tpu.memory_space<vmem>>, vector<6x64xf32>
    %36 = arith.truncf %35 : vector<6x64xf32> to vector<6x64xbf16>
    %cst_23 = arith.constant dense<0.000000e+00> : vector<64x64xf32>
    %37 = tpu.matmul %0, %36, %cst_23 {dimension_numbers = #tpu.dot_dimension_numbers<[1], [0], [0], [1], [0, 0, 1, 1], [], []>} : vector<64x6xbf16>, vector<6x64xbf16>, vector<64x64xf32> -> vector<64x64xf32>
    %38 = arith.mulf %37, %34 : vector<64x64xf32>
    %39 = arith.truncf %38 : vector<64x64xf32> to vector<64x64xbf16>
    %c0_24 = arith.constant 0 : index
    %c0_25 = arith.constant 0 : index
    %40 = vector.load %arg16[%c0_24, %c0_25] : memref<64x64xbf16, #tpu.memory_space<vmem>>, vector<64x64xbf16>
    tpu.vector_store %arg16[%c0_24, %c0_25], %39 {strides = array<i32>} : memref<64x64xbf16, #tpu.memory_space<vmem>>, vector<64x64xbf16>,
    %c0_26 = arith.constant 0 : index
    %c0_27 = arith.constant 0 : index
    %41 = vector.load %arg9[%c0_26, %c0_27] : memref<6x8xf32, #tpu.memory_space<vmem>>, vector<6x8xf32>
    %42 = arith.truncf %41 : vector<6x8xf32> to vector<6x8xbf16>
    %cst_28 = arith.constant dense<0.000000e+00> : vector<64x8xf32>
    %43 = tpu.matmul %0, %42, %cst_28 {dimension_numbers = #tpu.dot_dimension_numbers<[1], [0], [0], [1], [0, 0, 1, 1], [], []>} : vector<64x6xbf16>, vector<6x8xbf16>, vector<64x8xf32> -> vector<64x8xf32>
    %c0_29 = arith.constant 0 : index
    %c0_30 = arith.constant 0 : index
    %44 = vector.load %arg10[%c0_29, %c0_30] : memref<8x64xf32, #tpu.memory_space<vmem>>, vector<8x64xf32>
    %45 = arith.truncf %43 : vector<64x8xf32> to vector<64x8xbf16>
    %46 = arith.truncf %44 : vector<8x64xf32> to vector<8x64xbf16>
    %cst_31 = arith.constant dense<0.000000e+00> : vector<64x64xf32>
    %47 = tpu.matmul %45, %46, %cst_31 {dimension_numbers = #tpu.dot_dimension_numbers<[1], [0], [0], [1], [0, 0, 1, 1], [], []>} : vector<64x8xbf16>, vector<8x64xbf16>, vector<64x64xf32> -> vector<64x64xf32>
    %c0_32 = arith.constant 0 : index
    %c0_33 = arith.constant 0 : index
    %48 = vector.load %arg11[%c0_32, %c0_33] : memref<64x128xf32, #tpu.memory_space<vmem>>, vector<64x128xf32>
    %49 = arith.truncf %34 : vector<64x64xf32> to vector<64x64xbf16>
    %50 = arith.truncf %48 : vector<64x128xf32> to vector<64x128xbf16>
    %cst_34 = arith.constant dense<0.000000e+00> : vector<64x128xf32>
    %51 = tpu.matmul %49, %50, %cst_34 {dimension_numbers = #tpu.dot_dimension_numbers<[1], [0], [0], [1], [0, 0, 1, 1], [], []>} : vector<64x64xbf16>, vector<64x128xbf16>, vector<64x128xf32> -> vector<64x128xf32>
    %c0_35 = arith.constant 0 : index
    %c0_36 = arith.constant 0 : index
    %52 = vector.load %arg12[%c0_35, %c0_36] : memref<1x128xf32, #tpu.memory_space<vmem>>, vector<1x128xf32>
    %53 = vector.broadcast %52 : vector<1x128xf32> to vector<64x128xf32>
    %54 = arith.addf %51, %53 : vector<64x128xf32>
    %cst_37 = arith.constant 5.000000e-01 : f32
    %55 = vector.broadcast %cst_37 : f32 to vector<64x128xf32>
    %56 = arith.mulf %55, %54 : vector<64x128xf32>
    %57 = math.tanh %56 : vector<64x128xf32>
    %cst_38 = arith.constant 5.000000e-01 : f32
    %58 = vector.broadcast %cst_38 : f32 to vector<64x128xf32>
    %59 = arith.mulf %58, %57 : vector<64x128xf32>
    %cst_39 = arith.constant 5.000000e-01 : f32
    %60 = vector.broadcast %cst_39 : f32 to vector<64x128xf32>
    %61 = arith.addf %59, %60 : vector<64x128xf32>
    %62 = arith.mulf %54, %61 : vector<64x128xf32>
    %63 = vector.extract_strided_slice %62 {offsets = [0, 0], sizes = [64, 64], strides = [1, 1]} : vector<64x128xf32> to vector<64x64xf32>
    %64 = vector.extract_strided_slice %62 {offsets = [0, 64], sizes = [64, 64], strides = [1, 1]} : vector<64x128xf32> to vector<64x64xf32>
    %65 = arith.mulf %64, %47 : vector<64x64xf32>
    %c0_40 = arith.constant 0 : index
    %c0_41 = arith.constant 0 : index
    %66 = vector.load %arg13[%c0_40, %c0_41] : memref<64x32xf32, #tpu.memory_space<vmem>>, vector<64x32xf32>
    %67 = arith.truncf %65 : vector<64x64xf32> to vector<64x64xbf16>
    %68 = arith.truncf %66 : vector<64x32xf32> to vector<64x32xbf16>
    %cst_42 = arith.constant dense<0.000000e+00> : vector<64x32xf32>
    %69 = tpu.matmul %67, %68, %cst_42 {dimension_numbers = #tpu.dot_dimension_numbers<[1], [0], [0], [1], [0, 0, 1, 1], [], []>} : vector<64x64xbf16>, vector<64x32xbf16>, vector<64x32xf32> -> vector<64x32xf32>
    %cst_43 = arith.constant 5.000000e-01 : f32
    %70 = vector.broadcast %cst_43 : f32 to vector<64x32xf32>
    %71 = arith.mulf %70, %69 : vector<64x32xf32>
    %72 = math.tanh %71 : vector<64x32xf32>
    %cst_44 = arith.constant 5.000000e-01 : f32
    %73 = vector.broadcast %cst_44 : f32 to vector<64x32xf32>
    %74 = arith.mulf %73, %72 : vector<64x32xf32>
    %cst_45 = arith.constant 5.000000e-01 : f32
    %75 = vector.broadcast %cst_45 : f32 to vector<64x32xf32>
    %76 = arith.addf %74, %75 : vector<64x32xf32>
    %77 = arith.mulf %69, %76 : vector<64x32xf32>
    %78 = arith.truncf %77 : vector<64x32xf32> to vector<64x32xbf16>
    %c0_46 = arith.constant 0 : index
    %c0_47 = arith.constant 0 : index
    %79 = vector.load %arg15[%c0_46, %c0_47] : memref<64x32xbf16, #tpu.memory_space<vmem>>, vector<64x32xbf16>
    tpu.vector_store %arg15[%c0_46, %c0_47], %78 {strides = array<i32>} : memref<64x32xbf16, #tpu.memory_space<vmem>>, vector<64x32xbf16>,
    %80 = tpu.concatenate %34, %63 in 1 : vector<64x64xf32>, vector<64x64xf32> -> vector<64x128xf32>
    %81 = arith.truncf %80 : vector<64x128xf32> to vector<64x128xbf16>
    %c0_48 = arith.constant 0 : index
    %c0_49 = arith.constant 0 : index
    %82 = vector.load %arg14[%c0_48, %c0_49] : memref<64x128xbf16, #tpu.memory_space<vmem>>, vector<64x128xbf16>
    tpu.vector_store %arg14[%c0_48, %c0_49], %81 {strides = array<i32>} : memref<64x128xbf16, #tpu.memory_space<vmem>>, vector<64x128xbf16>,
    return
  }
  func.func @transform_0(%arg0: i32) -> (i32, i32) {
    %c0_i32 = arith.constant 0 : i32
    %c0_i32_0 = arith.constant 0 : i32
    return %arg0, %c0_i32 : i32, i32
  }
  func.func @transform_1(%arg0: i32) -> (i32, i32) {
    %c0_i32 = arith.constant 0 : i32
    %c0_i32_0 = arith.constant 0 : i32
    return %arg0, %c0_i32 : i32, i32
  }
  func.func @transform_2(%arg0: i32) -> (i32, i32) {
    %c0_i32 = arith.constant 0 : i32
    %c0_i32_0 = arith.constant 0 : i32
    %c0_i32_1 = arith.constant 0 : i32
    return %c0_i32, %c0_i32_0 : i32, i32
  }
  func.func @transform_3(%arg0: i32) -> (i32, i32) {
    %c0_i32 = arith.constant 0 : i32
    %c0_i32_0 = arith.constant 0 : i32
    %c0_i32_1 = arith.constant 0 : i32
    return %c0_i32, %c0_i32_0 : i32, i32
  }
  func.func @transform_4(%arg0: i32) -> (i32, i32) {
    %c0_i32 = arith.constant 0 : i32
    %c0_i32_0 = arith.constant 0 : i32
    %c0_i32_1 = arith.constant 0 : i32
    return %c0_i32, %c0_i32_0 : i32, i32
  }
  func.func @transform_5(%arg0: i32) -> (i32, i32) {
    %c0_i32 = arith.constant 0 : i32
    %c0_i32_0 = arith.constant 0 : i32
    %c0_i32_1 = arith.constant 0 : i32
    return %c0_i32, %c0_i32_0 : i32, i32
  }
  func.func @transform_6(%arg0: i32) -> (i32, i32) {
    %c0_i32 = arith.constant 0 : i32
    %c0_i32_0 = arith.constant 0 : i32
    %c0_i32_1 = arith.constant 0 : i32
    return %c0_i32, %c0_i32_0 : i32, i32
  }
  func.func @transform_7(%arg0: i32) -> (i32, i32) {
    %c0_i32 = arith.constant 0 : i32
    %c0_i32_0 = arith.constant 0 : i32
    %c0_i32_1 = arith.constant 0 : i32
    return %c0_i32, %c0_i32_0 : i32, i32
  }
  func.func @transform_8(%arg0: i32) -> (i32, i32) {
    %c0_i32 = arith.constant 0 : i32
    %c0_i32_0 = arith.constant 0 : i32
    %c0_i32_1 = arith.constant 0 : i32
    return %c0_i32, %c0_i32_0 : i32, i32
  }
  func.func @transform_9(%arg0: i32) -> (i32, i32) {
    %c0_i32 = arith.constant 0 : i32
    %c0_i32_0 = arith.constant 0 : i32
    %c0_i32_1 = arith.constant 0 : i32
    return %c0_i32, %c0_i32_0 : i32, i32
  }
  func.func @transform_10(%arg0: i32) -> (i32, i32) {
    %c0_i32 = arith.constant 0 : i32
    %c0_i32_0 = arith.constant 0 : i32
    %c0_i32_1 = arith.constant 0 : i32
    return %c0_i32, %c0_i32_0 : i32, i32
  }
  func.func @transform_11(%arg0: i32) -> (i32, i32) {
    %c0_i32 = arith.constant 0 : i32
    %c0_i32_0 = arith.constant 0 : i32
    %c0_i32_1 = arith.constant 0 : i32
    return %c0_i32, %c0_i32_0 : i32, i32
  }
  func.func @transform_12(%arg0: i32) -> (i32, i32) {
    %c0_i32 = arith.constant 0 : i32
    %c0_i32_0 = arith.constant 0 : i32
    %c0_i32_1 = arith.constant 0 : i32
    return %c0_i32, %c0_i32_0 : i32, i32
  }
  func.func @transform_13(%arg0: i32) -> (i32, i32) {
    %c0_i32 = arith.constant 0 : i32
    %c0_i32_0 = arith.constant 0 : i32
    return %arg0, %c0_i32 : i32, i32
  }
  func.func @transform_14(%arg0: i32) -> (i32, i32) {
    %c0_i32 = arith.constant 0 : i32
    %c0_i32_0 = arith.constant 0 : i32
    return %arg0, %c0_i32 : i32, i32
  }
  func.func @transform_15(%arg0: i32) -> (i32, i32) {
    %c0_i32 = arith.constant 0 : i32
    %c0_i32_0 = arith.constant 0 : i32
    return %arg0, %c0_i32 : i32, i32
  }
}

module attributes {stable_mosaic.version = 11 : i64} {
  func.func @kernel(%arg0: i32, %arg1: memref<128x42xbf16, #tpu.memory_space<vmem>>, %arg2: memref<42x16xf32, #tpu.memory_space<vmem>>, %arg3: memref<16x64xf32, #tpu.memory_space<vmem>>, %arg4: memref<128x64xbf16, #tpu.memory_space<vmem>>) attributes {dimension_semantics = [#tpu.dimension_semantics<parallel>], iteration_bounds = array<i64: 1>, scalar_prefetch = 0 : i64, scratch_operands = 0 : i64, tpu.core_type = #tpu.core_type<tc>, window_params = [{transform_indices = @transform_0, window_bounds = array<i64: 128, 42>}, {pipeline_mode = #tpu.pipeline_mode<synchronous>, transform_indices = @transform_1, window_bounds = array<i64: 42, 16>}, {pipeline_mode = #tpu.pipeline_mode<synchronous>, transform_indices = @transform_2, window_bounds = array<i64: 16, 64>}, {transform_indices = @transform_3, window_bounds = array<i64: 128, 64>}]} {
    %c0 = arith.constant 0 : index
    %c0_0 = arith.constant 0 : index
    %0 = vector.load %arg1[%c0, %c0_0] : memref<128x42xbf16, #tpu.memory_space<vmem>>, vector<128x42xbf16>
    %c0_1 = arith.constant 0 : index
    %c0_2 = arith.constant 0 : index
    %1 = vector.load %arg2[%c0_1, %c0_2] : memref<42x16xf32, #tpu.memory_space<vmem>>, vector<42x16xf32>
    %2 = arith.truncf %1 : vector<42x16xf32> to vector<42x16xbf16>
    %cst = arith.constant dense<0.000000e+00> : vector<128x16xf32>
    %3 = tpu.matmul %0, %2, %cst {dimension_numbers = #tpu.dot_dimension_numbers<[1], [0], [0], [1], [0, 0, 1, 1], [], []>} : vector<128x42xbf16>, vector<42x16xbf16>, vector<128x16xf32> -> vector<128x16xf32>
    %c0_3 = arith.constant 0 : index
    %c0_4 = arith.constant 0 : index
    %4 = vector.load %arg3[%c0_3, %c0_4] : memref<16x64xf32, #tpu.memory_space<vmem>>, vector<16x64xf32>
    %5 = arith.truncf %3 : vector<128x16xf32> to vector<128x16xbf16>
    %6 = arith.truncf %4 : vector<16x64xf32> to vector<16x64xbf16>
    %cst_5 = arith.constant dense<0.000000e+00> : vector<128x64xf32>
    %7 = tpu.matmul %5, %6, %cst_5 {dimension_numbers = #tpu.dot_dimension_numbers<[1], [0], [0], [1], [0, 0, 1, 1], [], []>} : vector<128x16xbf16>, vector<16x64xbf16>, vector<128x64xf32> -> vector<128x64xf32>
    %8 = arith.truncf %7 : vector<128x64xf32> to vector<128x64xbf16>
    %c0_6 = arith.constant 0 : index
    %c0_7 = arith.constant 0 : index
    %9 = vector.load %arg4[%c0_6, %c0_7] : memref<128x64xbf16, #tpu.memory_space<vmem>>, vector<128x64xbf16>
    tpu.vector_store %arg4[%c0_6, %c0_7], %8 {strides = array<i32>} : memref<128x64xbf16, #tpu.memory_space<vmem>>, vector<128x64xbf16>,
    return
  }
  func.func @transform_0(%arg0: i32) -> (i32, i32) {
    %c0_i32 = arith.constant 0 : i32
    %c0_i32_0 = arith.constant 0 : i32
    return %arg0, %c0_i32 : i32, i32
  }
  func.func @transform_1(%arg0: i32) -> (i32, i32) {
    %c0_i32 = arith.constant 0 : i32
    %c0_i32_0 = arith.constant 0 : i32
    %c0_i32_1 = arith.constant 0 : i32
    return %c0_i32, %c0_i32_0 : i32, i32
  }
  func.func @transform_2(%arg0: i32) -> (i32, i32) {
    %c0_i32 = arith.constant 0 : i32
    %c0_i32_0 = arith.constant 0 : i32
    %c0_i32_1 = arith.constant 0 : i32
    return %c0_i32, %c0_i32_0 : i32, i32
  }
  func.func @transform_3(%arg0: i32) -> (i32, i32) {
    %c0_i32 = arith.constant 0 : i32
    %c0_i32_0 = arith.constant 0 : i32
    return %arg0, %c0_i32 : i32, i32
  }
}

module attributes {stable_mosaic.version = 11 : i64} {
  func.func @kernel(%arg0: i32, %arg1: memref<64x128xbf16, #tpu.memory_space<vmem>>, %arg2: memref<64x32xbf16, #tpu.memory_space<vmem>>, %arg3: memref<64x6xbf16, #tpu.memory_space<vmem>>, %arg4: memref<32x64xf32, #tpu.memory_space<vmem>>, %arg5: memref<64x64xf32, #tpu.memory_space<vmem>>, %arg6: memref<1x64xf32, #tpu.memory_space<vmem>>, %arg7: memref<64x64xf32, #tpu.memory_space<vmem>>, %arg8: memref<1x64xf32, #tpu.memory_space<vmem>>, %arg9: memref<64x64xf32, #tpu.memory_space<vmem>>, %arg10: memref<1x64xf32, #tpu.memory_space<vmem>>, %arg11: memref<64x64xf32, #tpu.memory_space<vmem>>, %arg12: memref<1x64xf32, #tpu.memory_space<vmem>>, %arg13: memref<64x64xf32, #tpu.memory_space<vmem>>, %arg14: memref<1x64xf32, #tpu.memory_space<vmem>>, %arg15: memref<64x64xf32, #tpu.memory_space<vmem>>, %arg16: memref<1x64xf32, #tpu.memory_space<vmem>>, %arg17: memref<64x64xf32, #tpu.memory_space<vmem>>, %arg18: memref<1x64xf32, #tpu.memory_space<vmem>>, %arg19: memref<6x64xf32, #tpu.memory_space<vmem>>, %arg20: memref<6x8xf32, #tpu.memory_space<vmem>>, %arg21: memref<8x64xf32, #tpu.memory_space<vmem>>, %arg22: memref<64x128xf32, #tpu.memory_space<vmem>>, %arg23: memref<1x128xf32, #tpu.memory_space<vmem>>, %arg24: memref<64x32xf32, #tpu.memory_space<vmem>>, %arg25: memref<64x128xbf16, #tpu.memory_space<vmem>>, %arg26: memref<64x32xbf16, #tpu.memory_space<vmem>>, %arg27: memref<64x64xbf16, #tpu.memory_space<vmem>>) attributes {dimension_semantics = [#tpu.dimension_semantics<parallel>], iteration_bounds = array<i64: 1>, scalar_prefetch = 0 : i64, scratch_operands = 0 : i64, tpu.core_type = #tpu.core_type<tc>, window_params = [{transform_indices = @transform_0, window_bounds = array<i64: 64, 128>}, {transform_indices = @transform_1, window_bounds = array<i64: 64, 32>}, {transform_indices = @transform_2, window_bounds = array<i64: 64, 6>}, {pipeline_mode = #tpu.pipeline_mode<synchronous>, transform_indices = @transform_3, window_bounds = array<i64: 32, 64>}, {pipeline_mode = #tpu.pipeline_mode<synchronous>, transform_indices = @transform_4, window_bounds = array<i64: 64, 64>}, {pipeline_mode = #tpu.pipeline_mode<synchronous>, transform_indices = @transform_5, window_bounds = array<i64: 1, 64>}, {pipeline_mode = #tpu.pipeline_mode<synchronous>, transform_indices = @transform_6, window_bounds = array<i64: 64, 64>}, {pipeline_mode = #tpu.pipeline_mode<synchronous>, transform_indices = @transform_7, window_bounds = array<i64: 1, 64>}, {pipeline_mode = #tpu.pipeline_mode<synchronous>, transform_indices = @transform_8, window_bounds = array<i64: 64, 64>}, {pipeline_mode = #tpu.pipeline_mode<synchronous>, transform_indices = @transform_9, window_bounds = array<i64: 1, 64>}, {pipeline_mode = #tpu.pipeline_mode<synchronous>, transform_indices = @transform_10, window_bounds = array<i64: 64, 64>}, {pipeline_mode = #tpu.pipeline_mode<synchronous>, transform_indices = @transform_11, window_bounds = array<i64: 1, 64>}, {pipeline_mode = #tpu.pipeline_mode<synchronous>, transform_indices = @transform_12, window_bounds = array<i64: 64, 64>}, {pipeline_mode = #tpu.pipeline_mode<synchronous>, transform_indices = @transform_13, window_bounds = array<i64: 1, 64>}, {pipeline_mode = #tpu.pipeline_mode<synchronous>, transform_indices = @transform_14, window_bounds = array<i64: 64, 64>}, {pipeline_mode = #tpu.pipeline_mode<synchronous>, transform_indices = @transform_15, window_bounds = array<i64: 1, 64>}, {pipeline_mode = #tpu.pipeline_mode<synchronous>, transform_indices = @transform_16, window_bounds = array<i64: 64, 64>}, {pipeline_mode = #tpu.pipeline_mode<synchronous>, transform_indices = @transform_17, window_bounds = array<i64: 1, 64>}, {pipeline_mode = #tpu.pipeline_mode<synchronous>, transform_indices = @transform_18, window_bounds = array<i64: 6, 64>}, {pipeline_mode = #tpu.pipeline_mode<synchronous>, transform_indices = @transform_19, window_bounds = array<i64: 6, 8>}, {pipeline_mode = #tpu.pipeline_mode<synchronous>, transform_indices = @transform_20, window_bounds = array<i64: 8, 64>}, {pipeline_mode = #tpu.pipeline_mode<synchronous>, transform_indices = @transform_21, window_bounds = array<i64: 64, 128>}, {pipeline_mode = #tpu.pipeline_mode<synchronous>, transform_indices = @transform_22, window_bounds = array<i64: 1, 128>}, {pipeline_mode = #tpu.pipeline_mode<synchronous>, transform_indices = @transform_23, window_bounds = array<i64: 64, 32>}, {transform_indices = @transform_24, window_bounds = array<i64: 64, 128>}, {transform_indices = @transform_25, window_bounds = array<i64: 64, 32>}, {transform_indices = @transform_26, window_bounds = array<i64: 64, 64>}]} {
    %c0 = arith.constant 0 : index
    %c0_0 = arith.constant 0 : index
    %0 = vector.load %arg1[%c0, %c0_0] : memref<64x128xbf16, #tpu.memory_space<vmem>>, vector<64x128xbf16>
    %1 = vector.extract_strided_slice %0 {offsets = [0, 0], sizes = [64, 64], strides = [1, 1]} : vector<64x128xbf16> to vector<64x64xbf16>
    %2 = arith.extf %1 : vector<64x64xbf16> to vector<64x64xf32>
    %3 = vector.extract_strided_slice %0 {offsets = [0, 64], sizes = [64, 64], strides = [1, 1]} : vector<64x128xbf16> to vector<64x64xbf16>
    %4 = arith.extf %3 : vector<64x64xbf16> to vector<64x64xf32>
    %c0_1 = arith.constant 0 : index
    %c0_2 = arith.constant 0 : index
    %5 = vector.load %arg2[%c0_1, %c0_2] : memref<64x32xbf16, #tpu.memory_space<vmem>>, vector<64x32xbf16>
    %c0_3 = arith.constant 0 : index
    %c0_4 = arith.constant 0 : index
    %6 = vector.load %arg4[%c0_3, %c0_4] : memref<32x64xf32, #tpu.memory_space<vmem>>, vector<32x64xf32>
    %7 = arith.truncf %6 : vector<32x64xf32> to vector<32x64xbf16>
    %cst = arith.constant dense<0.000000e+00> : vector<64x64xf32>
    %8 = tpu.matmul %5, %7, %cst {dimension_numbers = #tpu.dot_dimension_numbers<[1], [0], [0], [1], [0, 0, 1, 1], [], []>} : vector<64x32xbf16>, vector<32x64xbf16>, vector<64x64xf32> -> vector<64x64xf32>
    %cst_5 = arith.constant 5.000000e-01 : f32
    %9 = vector.broadcast %cst_5 : f32 to vector<64x64xf32>
    %10 = arith.mulf %9, %8 : vector<64x64xf32>
    %11 = math.tanh %10 : vector<64x64xf32>
    %cst_6 = arith.constant 5.000000e-01 : f32
    %12 = vector.broadcast %cst_6 : f32 to vector<64x64xf32>
    %13 = arith.mulf %12, %11 : vector<64x64xf32>
    %cst_7 = arith.constant 5.000000e-01 : f32
    %14 = vector.broadcast %cst_7 : f32 to vector<64x64xf32>
    %15 = arith.addf %13, %14 : vector<64x64xf32>
    %16 = arith.mulf %8, %15 : vector<64x64xf32>
    %17 = arith.addf %4, %16 : vector<64x64xf32>
    %c0_8 = arith.constant 0 : index
    %c0_9 = arith.constant 0 : index
    %18 = vector.load %arg5[%c0_8, %c0_9] : memref<64x64xf32, #tpu.memory_space<vmem>>, vector<64x64xf32>
    %19 = arith.truncf %17 : vector<64x64xf32> to vector<64x64xbf16>
    %20 = arith.truncf %18 : vector<64x64xf32> to vector<64x64xbf16>
    %cst_10 = arith.constant dense<0.000000e+00> : vector<64x64xf32>
    %21 = tpu.matmul %19, %20, %cst_10 {dimension_numbers = #tpu.dot_dimension_numbers<[1], [0], [0], [1], [0, 0, 1, 1], [], []>} : vector<64x64xbf16>, vector<64x64xbf16>, vector<64x64xf32> -> vector<64x64xf32>
    %c0_11 = arith.constant 0 : index
    %c0_12 = arith.constant 0 : index
    %22 = vector.load %arg6[%c0_11, %c0_12] : memref<1x64xf32, #tpu.memory_space<vmem>>, vector<1x64xf32>
    %23 = vector.broadcast %22 : vector<1x64xf32> to vector<64x64xf32>
    %24 = arith.addf %21, %23 : vector<64x64xf32>
    %cst_13 = arith.constant 5.000000e-01 : f32
    %25 = vector.broadcast %cst_13 : f32 to vector<64x64xf32>
    %26 = arith.mulf %25, %24 : vector<64x64xf32>
    %27 = math.tanh %26 : vector<64x64xf32>
    %cst_14 = arith.constant 5.000000e-01 : f32
    %28 = vector.broadcast %cst_14 : f32 to vector<64x64xf32>
    %29 = arith.mulf %28, %27 : vector<64x64xf32>
    %cst_15 = arith.constant 5.000000e-01 : f32
    %30 = vector.broadcast %cst_15 : f32 to vector<64x64xf32>
    %31 = arith.addf %29, %30 : vector<64x64xf32>
    %32 = arith.mulf %24, %31 : vector<64x64xf32>
    %c0_16 = arith.constant 0 : index
    %c0_17 = arith.constant 0 : index
    %33 = vector.load %arg7[%c0_16, %c0_17] : memref<64x64xf32, #tpu.memory_space<vmem>>, vector<64x64xf32>
    %34 = arith.truncf %32 : vector<64x64xf32> to vector<64x64xbf16>
    %35 = arith.truncf %33 : vector<64x64xf32> to vector<64x64xbf16>
    %cst_18 = arith.constant dense<0.000000e+00> : vector<64x64xf32>
    %36 = tpu.matmul %34, %35, %cst_18 {dimension_numbers = #tpu.dot_dimension_numbers<[1], [0], [0], [1], [0, 0, 1, 1], [], []>} : vector<64x64xbf16>, vector<64x64xbf16>, vector<64x64xf32> -> vector<64x64xf32>
    %c0_19 = arith.constant 0 : index
    %c0_20 = arith.constant 0 : index
    %37 = vector.load %arg8[%c0_19, %c0_20] : memref<1x64xf32, #tpu.memory_space<vmem>>, vector<1x64xf32>
    %38 = vector.broadcast %37 : vector<1x64xf32> to vector<64x64xf32>
    %39 = arith.addf %36, %38 : vector<64x64xf32>
    %cst_21 = arith.constant 5.000000e-01 : f32
    %40 = vector.broadcast %cst_21 : f32 to vector<64x64xf32>
    %41 = arith.mulf %40, %39 : vector<64x64xf32>
    %42 = math.tanh %41 : vector<64x64xf32>
    %cst_22 = arith.constant 5.000000e-01 : f32
    %43 = vector.broadcast %cst_22 : f32 to vector<64x64xf32>
    %44 = arith.mulf %43, %42 : vector<64x64xf32>
    %cst_23 = arith.constant 5.000000e-01 : f32
    %45 = vector.broadcast %cst_23 : f32 to vector<64x64xf32>
    %46 = arith.addf %44, %45 : vector<64x64xf32>
    %47 = arith.mulf %39, %46 : vector<64x64xf32>
    %48 = arith.addf %17, %47 : vector<64x64xf32>
    %c0_24 = arith.constant 0 : index
    %c0_25 = arith.constant 0 : index
    %49 = vector.load %arg9[%c0_24, %c0_25] : memref<64x64xf32, #tpu.memory_space<vmem>>, vector<64x64xf32>
    %50 = arith.truncf %48 : vector<64x64xf32> to vector<64x64xbf16>
    %51 = arith.truncf %49 : vector<64x64xf32> to vector<64x64xbf16>
    %cst_26 = arith.constant dense<0.000000e+00> : vector<64x64xf32>
    %52 = tpu.matmul %50, %51, %cst_26 {dimension_numbers = #tpu.dot_dimension_numbers<[1], [0], [0], [1], [0, 0, 1, 1], [], []>} : vector<64x64xbf16>, vector<64x64xbf16>, vector<64x64xf32> -> vector<64x64xf32>
    %c0_27 = arith.constant 0 : index
    %c0_28 = arith.constant 0 : index
    %53 = vector.load %arg10[%c0_27, %c0_28] : memref<1x64xf32, #tpu.memory_space<vmem>>, vector<1x64xf32>
    %54 = vector.broadcast %53 : vector<1x64xf32> to vector<64x64xf32>
    %55 = arith.addf %52, %54 : vector<64x64xf32>
    %cst_29 = arith.constant 5.000000e-01 : f32
    %56 = vector.broadcast %cst_29 : f32 to vector<64x64xf32>
    %57 = arith.mulf %56, %55 : vector<64x64xf32>
    %58 = math.tanh %57 : vector<64x64xf32>
    %cst_30 = arith.constant 5.000000e-01 : f32
    %59 = vector.broadcast %cst_30 : f32 to vector<64x64xf32>
    %60 = arith.mulf %59, %58 : vector<64x64xf32>
    %cst_31 = arith.constant 5.000000e-01 : f32
    %61 = vector.broadcast %cst_31 : f32 to vector<64x64xf32>
    %62 = arith.addf %60, %61 : vector<64x64xf32>
    %63 = arith.mulf %55, %62 : vector<64x64xf32>
    %64 = arith.addf %63, %2 : vector<64x64xf32>
    %c0_32 = arith.constant 0 : index
    %c0_33 = arith.constant 0 : index
    %65 = vector.load %arg11[%c0_32, %c0_33] : memref<64x64xf32, #tpu.memory_space<vmem>>, vector<64x64xf32>
    %66 = arith.truncf %64 : vector<64x64xf32> to vector<64x64xbf16>
    %67 = arith.truncf %65 : vector<64x64xf32> to vector<64x64xbf16>
    %cst_34 = arith.constant dense<0.000000e+00> : vector<64x64xf32>
    %68 = tpu.matmul %66, %67, %cst_34 {dimension_numbers = #tpu.dot_dimension_numbers<[1], [0], [0], [1], [0, 0, 1, 1], [], []>} : vector<64x64xbf16>, vector<64x64xbf16>, vector<64x64xf32> -> vector<64x64xf32>
    %c0_35 = arith.constant 0 : index
    %c0_36 = arith.constant 0 : index
    %69 = vector.load %arg12[%c0_35, %c0_36] : memref<1x64xf32, #tpu.memory_space<vmem>>, vector<1x64xf32>
    %70 = vector.broadcast %69 : vector<1x64xf32> to vector<64x64xf32>
    %71 = arith.addf %68, %70 : vector<64x64xf32>
    %cst_37 = arith.constant 5.000000e-01 : f32
    %72 = vector.broadcast %cst_37 : f32 to vector<64x64xf32>
    %73 = arith.mulf %72, %71 : vector<64x64xf32>
    %74 = math.tanh %73 : vector<64x64xf32>
    %cst_38 = arith.constant 5.000000e-01 : f32
    %75 = vector.broadcast %cst_38 : f32 to vector<64x64xf32>
    %76 = arith.mulf %75, %74 : vector<64x64xf32>
    %cst_39 = arith.constant 5.000000e-01 : f32
    %77 = vector.broadcast %cst_39 : f32 to vector<64x64xf32>
    %78 = arith.addf %76, %77 : vector<64x64xf32>
    %79 = arith.mulf %71, %78 : vector<64x64xf32>
    %c0_40 = arith.constant 0 : index
    %c0_41 = arith.constant 0 : index
    %80 = vector.load %arg13[%c0_40, %c0_41] : memref<64x64xf32, #tpu.memory_space<vmem>>, vector<64x64xf32>
    %81 = arith.truncf %79 : vector<64x64xf32> to vector<64x64xbf16>
    %82 = arith.truncf %80 : vector<64x64xf32> to vector<64x64xbf16>
    %cst_42 = arith.constant dense<0.000000e+00> : vector<64x64xf32>
    %83 = tpu.matmul %81, %82, %cst_42 {dimension_numbers = #tpu.dot_dimension_numbers<[1], [0], [0], [1], [0, 0, 1, 1], [], []>} : vector<64x64xbf16>, vector<64x64xbf16>, vector<64x64xf32> -> vector<64x64xf32>
    %c0_43 = arith.constant 0 : index
    %c0_44 = arith.constant 0 : index
    %84 = vector.load %arg14[%c0_43, %c0_44] : memref<1x64xf32, #tpu.memory_space<vmem>>, vector<1x64xf32>
    %85 = vector.broadcast %84 : vector<1x64xf32> to vector<64x64xf32>
    %86 = arith.addf %83, %85 : vector<64x64xf32>
    %cst_45 = arith.constant 5.000000e-01 : f32
    %87 = vector.broadcast %cst_45 : f32 to vector<64x64xf32>
    %88 = arith.mulf %87, %86 : vector<64x64xf32>
    %89 = math.tanh %88 : vector<64x64xf32>
    %cst_46 = arith.constant 5.000000e-01 : f32
    %90 = vector.broadcast %cst_46 : f32 to vector<64x64xf32>
    %91 = arith.mulf %90, %89 : vector<64x64xf32>
    %cst_47 = arith.constant 5.000000e-01 : f32
    %92 = vector.broadcast %cst_47 : f32 to vector<64x64xf32>
    %93 = arith.addf %91, %92 : vector<64x64xf32>
    %94 = arith.mulf %86, %93 : vector<64x64xf32>
    %95 = arith.addf %64, %94 : vector<64x64xf32>
    %c0_48 = arith.constant 0 : index
    %c0_49 = arith.constant 0 : index
    %96 = vector.load %arg15[%c0_48, %c0_49] : memref<64x64xf32, #tpu.memory_space<vmem>>, vector<64x64xf32>
    %97 = arith.truncf %95 : vector<64x64xf32> to vector<64x64xbf16>
    %98 = arith.truncf %96 : vector<64x64xf32> to vector<64x64xbf16>
    %cst_50 = arith.constant dense<0.000000e+00> : vector<64x64xf32>
    %99 = tpu.matmul %97, %98, %cst_50 {dimension_numbers = #tpu.dot_dimension_numbers<[1], [0], [0], [1], [0, 0, 1, 1], [], []>} : vector<64x64xbf16>, vector<64x64xbf16>, vector<64x64xf32> -> vector<64x64xf32>
    %c0_51 = arith.constant 0 : index
    %c0_52 = arith.constant 0 : index
    %100 = vector.load %arg16[%c0_51, %c0_52] : memref<1x64xf32, #tpu.memory_space<vmem>>, vector<1x64xf32>
    %101 = vector.broadcast %100 : vector<1x64xf32> to vector<64x64xf32>
    %102 = arith.addf %99, %101 : vector<64x64xf32>
    %cst_53 = arith.constant 5.000000e-01 : f32
    %103 = vector.broadcast %cst_53 : f32 to vector<64x64xf32>
    %104 = arith.mulf %103, %102 : vector<64x64xf32>
    %105 = math.tanh %104 : vector<64x64xf32>
    %cst_54 = arith.constant 5.000000e-01 : f32
    %106 = vector.broadcast %cst_54 : f32 to vector<64x64xf32>
    %107 = arith.mulf %106, %105 : vector<64x64xf32>
    %cst_55 = arith.constant 5.000000e-01 : f32
    %108 = vector.broadcast %cst_55 : f32 to vector<64x64xf32>
    %109 = arith.addf %107, %108 : vector<64x64xf32>
    %110 = arith.mulf %102, %109 : vector<64x64xf32>
    %c0_56 = arith.constant 0 : index
    %c0_57 = arith.constant 0 : index
    %111 = vector.load %arg17[%c0_56, %c0_57] : memref<64x64xf32, #tpu.memory_space<vmem>>, vector<64x64xf32>
    %112 = arith.truncf %110 : vector<64x64xf32> to vector<64x64xbf16>
    %113 = arith.truncf %111 : vector<64x64xf32> to vector<64x64xbf16>
    %cst_58 = arith.constant dense<0.000000e+00> : vector<64x64xf32>
    %114 = tpu.matmul %112, %113, %cst_58 {dimension_numbers = #tpu.dot_dimension_numbers<[1], [0], [0], [1], [0, 0, 1, 1], [], []>} : vector<64x64xbf16>, vector<64x64xbf16>, vector<64x64xf32> -> vector<64x64xf32>
    %c0_59 = arith.constant 0 : index
    %c0_60 = arith.constant 0 : index
    %115 = vector.load %arg18[%c0_59, %c0_60] : memref<1x64xf32, #tpu.memory_space<vmem>>, vector<1x64xf32>
    %116 = vector.broadcast %115 : vector<1x64xf32> to vector<64x64xf32>
    %117 = arith.addf %114, %116 : vector<64x64xf32>
    %cst_61 = arith.constant 5.000000e-01 : f32
    %118 = vector.broadcast %cst_61 : f32 to vector<64x64xf32>
    %119 = arith.mulf %118, %117 : vector<64x64xf32>
    %120 = math.tanh %119 : vector<64x64xf32>
    %cst_62 = arith.constant 5.000000e-01 : f32
    %121 = vector.broadcast %cst_62 : f32 to vector<64x64xf32>
    %122 = arith.mulf %121, %120 : vector<64x64xf32>
    %cst_63 = arith.constant 5.000000e-01 : f32
    %123 = vector.broadcast %cst_63 : f32 to vector<64x64xf32>
    %124 = arith.addf %122, %123 : vector<64x64xf32>
    %125 = arith.mulf %117, %124 : vector<64x64xf32>
    %126 = arith.addf %95, %125 : vector<64x64xf32>
    %c0_64 = arith.constant 0 : index
    %c0_65 = arith.constant 0 : index
    %127 = vector.load %arg3[%c0_64, %c0_65] : memref<64x6xbf16, #tpu.memory_space<vmem>>, vector<64x6xbf16>
    %c0_66 = arith.constant 0 : index
    %c0_67 = arith.constant 0 : index
    %128 = vector.load %arg19[%c0_66, %c0_67] : memref<6x64xf32, #tpu.memory_space<vmem>>, vector<6x64xf32>
    %129 = arith.truncf %128 : vector<6x64xf32> to vector<6x64xbf16>
    %cst_68 = arith.constant dense<0.000000e+00> : vector<64x64xf32>
    %130 = tpu.matmul %127, %129, %cst_68 {dimension_numbers = #tpu.dot_dimension_numbers<[1], [0], [0], [1], [0, 0, 1, 1], [], []>} : vector<64x6xbf16>, vector<6x64xbf16>, vector<64x64xf32> -> vector<64x64xf32>
    %131 = arith.mulf %130, %126 : vector<64x64xf32>
    %132 = arith.truncf %131 : vector<64x64xf32> to vector<64x64xbf16>
    %c0_69 = arith.constant 0 : index
    %c0_70 = arith.constant 0 : index
    %133 = vector.load %arg27[%c0_69, %c0_70] : memref<64x64xbf16, #tpu.memory_space<vmem>>, vector<64x64xbf16>
    tpu.vector_store %arg27[%c0_69, %c0_70], %132 {strides = array<i32>} : memref<64x64xbf16, #tpu.memory_space<vmem>>, vector<64x64xbf16>,
    %c0_71 = arith.constant 0 : index
    %c0_72 = arith.constant 0 : index
    %134 = vector.load %arg20[%c0_71, %c0_72] : memref<6x8xf32, #tpu.memory_space<vmem>>, vector<6x8xf32>
    %135 = arith.truncf %134 : vector<6x8xf32> to vector<6x8xbf16>
    %cst_73 = arith.constant dense<0.000000e+00> : vector<64x8xf32>
    %136 = tpu.matmul %127, %135, %cst_73 {dimension_numbers = #tpu.dot_dimension_numbers<[1], [0], [0], [1], [0, 0, 1, 1], [], []>} : vector<64x6xbf16>, vector<6x8xbf16>, vector<64x8xf32> -> vector<64x8xf32>
    %c0_74 = arith.constant 0 : index
    %c0_75 = arith.constant 0 : index
    %137 = vector.load %arg21[%c0_74, %c0_75] : memref<8x64xf32, #tpu.memory_space<vmem>>, vector<8x64xf32>
    %138 = arith.truncf %136 : vector<64x8xf32> to vector<64x8xbf16>
    %139 = arith.truncf %137 : vector<8x64xf32> to vector<8x64xbf16>
    %cst_76 = arith.constant dense<0.000000e+00> : vector<64x64xf32>
    %140 = tpu.matmul %138, %139, %cst_76 {dimension_numbers = #tpu.dot_dimension_numbers<[1], [0], [0], [1], [0, 0, 1, 1], [], []>} : vector<64x8xbf16>, vector<8x64xbf16>, vector<64x64xf32> -> vector<64x64xf32>
    %c0_77 = arith.constant 0 : index
    %c0_78 = arith.constant 0 : index
    %141 = vector.load %arg22[%c0_77, %c0_78] : memref<64x128xf32, #tpu.memory_space<vmem>>, vector<64x128xf32>
    %142 = arith.truncf %126 : vector<64x64xf32> to vector<64x64xbf16>
    %143 = arith.truncf %141 : vector<64x128xf32> to vector<64x128xbf16>
    %cst_79 = arith.constant dense<0.000000e+00> : vector<64x128xf32>
    %144 = tpu.matmul %142, %143, %cst_79 {dimension_numbers = #tpu.dot_dimension_numbers<[1], [0], [0], [1], [0, 0, 1, 1], [], []>} : vector<64x64xbf16>, vector<64x128xbf16>, vector<64x128xf32> -> vector<64x128xf32>
    %c0_80 = arith.constant 0 : index
    %c0_81 = arith.constant 0 : index
    %145 = vector.load %arg23[%c0_80, %c0_81] : memref<1x128xf32, #tpu.memory_space<vmem>>, vector<1x128xf32>
    %146 = vector.broadcast %145 : vector<1x128xf32> to vector<64x128xf32>
    %147 = arith.addf %144, %146 : vector<64x128xf32>
    %cst_82 = arith.constant 5.000000e-01 : f32
    %148 = vector.broadcast %cst_82 : f32 to vector<64x128xf32>
    %149 = arith.mulf %148, %147 : vector<64x128xf32>
    %150 = math.tanh %149 : vector<64x128xf32>
    %cst_83 = arith.constant 5.000000e-01 : f32
    %151 = vector.broadcast %cst_83 : f32 to vector<64x128xf32>
    %152 = arith.mulf %151, %150 : vector<64x128xf32>
    %cst_84 = arith.constant 5.000000e-01 : f32
    %153 = vector.broadcast %cst_84 : f32 to vector<64x128xf32>
    %154 = arith.addf %152, %153 : vector<64x128xf32>
    %155 = arith.mulf %147, %154 : vector<64x128xf32>
    %156 = vector.extract_strided_slice %155 {offsets = [0, 0], sizes = [64, 64], strides = [1, 1]} : vector<64x128xf32> to vector<64x64xf32>
    %157 = vector.extract_strided_slice %155 {offsets = [0, 64], sizes = [64, 64], strides = [1, 1]} : vector<64x128xf32> to vector<64x64xf32>
    %158 = arith.mulf %157, %140 : vector<64x64xf32>
    %c0_85 = arith.constant 0 : index
    %c0_86 = arith.constant 0 : index
    %159 = vector.load %arg24[%c0_85, %c0_86] : memref<64x32xf32, #tpu.memory_space<vmem>>, vector<64x32xf32>
    %160 = arith.truncf %158 : vector<64x64xf32> to vector<64x64xbf16>
    %161 = arith.truncf %159 : vector<64x32xf32> to vector<64x32xbf16>
    %cst_87 = arith.constant dense<0.000000e+00> : vector<64x32xf32>
    %162 = tpu.matmul %160, %161, %cst_87 {dimension_numbers = #tpu.dot_dimension_numbers<[1], [0], [0], [1], [0, 0, 1, 1], [], []>} : vector<64x64xbf16>, vector<64x32xbf16>, vector<64x32xf32> -> vector<64x32xf32>
    %cst_88 = arith.constant 5.000000e-01 : f32
    %163 = vector.broadcast %cst_88 : f32 to vector<64x32xf32>
    %164 = arith.mulf %163, %162 : vector<64x32xf32>
    %165 = math.tanh %164 : vector<64x32xf32>
    %cst_89 = arith.constant 5.000000e-01 : f32
    %166 = vector.broadcast %cst_89 : f32 to vector<64x32xf32>
    %167 = arith.mulf %166, %165 : vector<64x32xf32>
    %cst_90 = arith.constant 5.000000e-01 : f32
    %168 = vector.broadcast %cst_90 : f32 to vector<64x32xf32>
    %169 = arith.addf %167, %168 : vector<64x32xf32>
    %170 = arith.mulf %162, %169 : vector<64x32xf32>
    %171 = arith.truncf %170 : vector<64x32xf32> to vector<64x32xbf16>
    %c0_91 = arith.constant 0 : index
    %c0_92 = arith.constant 0 : index
    %172 = vector.load %arg26[%c0_91, %c0_92] : memref<64x32xbf16, #tpu.memory_space<vmem>>, vector<64x32xbf16>
    tpu.vector_store %arg26[%c0_91, %c0_92], %171 {strides = array<i32>} : memref<64x32xbf16, #tpu.memory_space<vmem>>, vector<64x32xbf16>,
    %173 = tpu.concatenate %126, %156 in 1 : vector<64x64xf32>, vector<64x64xf32> -> vector<64x128xf32>
    %174 = arith.truncf %173 : vector<64x128xf32> to vector<64x128xbf16>
    %c0_93 = arith.constant 0 : index
    %c0_94 = arith.constant 0 : index
    %175 = vector.load %arg25[%c0_93, %c0_94] : memref<64x128xbf16, #tpu.memory_space<vmem>>, vector<64x128xbf16>
    tpu.vector_store %arg25[%c0_93, %c0_94], %174 {strides = array<i32>} : memref<64x128xbf16, #tpu.memory_space<vmem>>, vector<64x128xbf16>,
    return
  }
  func.func @transform_0(%arg0: i32) -> (i32, i32) {
    %c0_i32 = arith.constant 0 : i32
    %c0_i32_0 = arith.constant 0 : i32
    return %arg0, %c0_i32 : i32, i32
  }
  func.func @transform_1(%arg0: i32) -> (i32, i32) {
    %c0_i32 = arith.constant 0 : i32
    %c0_i32_0 = arith.constant 0 : i32
    return %arg0, %c0_i32 : i32, i32
  }
  func.func @transform_2(%arg0: i32) -> (i32, i32) {
    %c0_i32 = arith.constant 0 : i32
    %c0_i32_0 = arith.constant 0 : i32
    return %arg0, %c0_i32 : i32, i32
  }
  func.func @transform_3(%arg0: i32) -> (i32, i32) {
    %c0_i32 = arith.constant 0 : i32
    %c0_i32_0 = arith.constant 0 : i32
    %c0_i32_1 = arith.constant 0 : i32
    return %c0_i32, %c0_i32_0 : i32, i32
  }
  func.func @transform_4(%arg0: i32) -> (i32, i32) {
    %c0_i32 = arith.constant 0 : i32
    %c0_i32_0 = arith.constant 0 : i32
    %c0_i32_1 = arith.constant 0 : i32
    return %c0_i32, %c0_i32_0 : i32, i32
  }
  func.func @transform_5(%arg0: i32) -> (i32, i32) {
    %c0_i32 = arith.constant 0 : i32
    %c0_i32_0 = arith.constant 0 : i32
    %c0_i32_1 = arith.constant 0 : i32
    return %c0_i32, %c0_i32_0 : i32, i32
  }
  func.func @transform_6(%arg0: i32) -> (i32, i32) {
    %c0_i32 = arith.constant 0 : i32
    %c0_i32_0 = arith.constant 0 : i32
    %c0_i32_1 = arith.constant 0 : i32
    return %c0_i32, %c0_i32_0 : i32, i32
  }
  func.func @transform_7(%arg0: i32) -> (i32, i32) {
    %c0_i32 = arith.constant 0 : i32
    %c0_i32_0 = arith.constant 0 : i32
    %c0_i32_1 = arith.constant 0 : i32
    return %c0_i32, %c0_i32_0 : i32, i32
  }
  func.func @transform_8(%arg0: i32) -> (i32, i32) {
    %c0_i32 = arith.constant 0 : i32
    %c0_i32_0 = arith.constant 0 : i32
    %c0_i32_1 = arith.constant 0 : i32
    return %c0_i32, %c0_i32_0 : i32, i32
  }
  func.func @transform_9(%arg0: i32) -> (i32, i32) {
    %c0_i32 = arith.constant 0 : i32
    %c0_i32_0 = arith.constant 0 : i32
    %c0_i32_1 = arith.constant 0 : i32
    return %c0_i32, %c0_i32_0 : i32, i32
  }
  func.func @transform_10(%arg0: i32) -> (i32, i32) {
    %c0_i32 = arith.constant 0 : i32
    %c0_i32_0 = arith.constant 0 : i32
    %c0_i32_1 = arith.constant 0 : i32
    return %c0_i32, %c0_i32_0 : i32, i32
  }
  func.func @transform_11(%arg0: i32) -> (i32, i32) {
    %c0_i32 = arith.constant 0 : i32
    %c0_i32_0 = arith.constant 0 : i32
    %c0_i32_1 = arith.constant 0 : i32
    return %c0_i32, %c0_i32_0 : i32, i32
  }
  func.func @transform_12(%arg0: i32) -> (i32, i32) {
    %c0_i32 = arith.constant 0 : i32
    %c0_i32_0 = arith.constant 0 : i32
    %c0_i32_1 = arith.constant 0 : i32
    return %c0_i32, %c0_i32_0 : i32, i32
  }
  func.func @transform_13(%arg0: i32) -> (i32, i32) {
    %c0_i32 = arith.constant 0 : i32
    %c0_i32_0 = arith.constant 0 : i32
    %c0_i32_1 = arith.constant 0 : i32
    return %c0_i32, %c0_i32_0 : i32, i32
  }
  func.func @transform_14(%arg0: i32) -> (i32, i32) {
    %c0_i32 = arith.constant 0 : i32
    %c0_i32_0 = arith.constant 0 : i32
    %c0_i32_1 = arith.constant 0 : i32
    return %c0_i32, %c0_i32_0 : i32, i32
  }
  func.func @transform_15(%arg0: i32) -> (i32, i32) {
    %c0_i32 = arith.constant 0 : i32
    %c0_i32_0 = arith.constant 0 : i32
    %c0_i32_1 = arith.constant 0 : i32
    return %c0_i32, %c0_i32_0 : i32, i32
  }
  func.func @transform_16(%arg0: i32) -> (i32, i32) {
    %c0_i32 = arith.constant 0 : i32
    %c0_i32_0 = arith.constant 0 : i32
    %c0_i32_1 = arith.constant 0 : i32
    return %c0_i32, %c0_i32_0 : i32, i32
  }
  func.func @transform_17(%arg0: i32) -> (i32, i32) {
    %c0_i32 = arith.constant 0 : i32
    %c0_i32_0 = arith.constant 0 : i32
    %c0_i32_1 = arith.constant 0 : i32
    return %c0_i32, %c0_i32_0 : i32, i32
  }
  func.func @transform_18(%arg0: i32) -> (i32, i32) {
    %c0_i32 = arith.constant 0 : i32
    %c0_i32_0 = arith.constant 0 : i32
    %c0_i32_1 = arith.constant 0 : i32
    return %c0_i32, %c0_i32_0 : i32, i32
  }
  func.func @transform_19(%arg0: i32) -> (i32, i32) {
    %c0_i32 = arith.constant 0 : i32
    %c0_i32_0 = arith.constant 0 : i32
    %c0_i32_1 = arith.constant 0 : i32
    return %c0_i32, %c0_i32_0 : i32, i32
  }
  func.func @transform_20(%arg0: i32) -> (i32, i32) {
    %c0_i32 = arith.constant 0 : i32
    %c0_i32_0 = arith.constant 0 : i32
    %c0_i32_1 = arith.constant 0 : i32
    return %c0_i32, %c0_i32_0 : i32, i32
  }
  func.func @transform_21(%arg0: i32) -> (i32, i32) {
    %c0_i32 = arith.constant 0 : i32
    %c0_i32_0 = arith.constant 0 : i32
    %c0_i32_1 = arith.constant 0 : i32
    return %c0_i32, %c0_i32_0 : i32, i32
  }
  func.func @transform_22(%arg0: i32) -> (i32, i32) {
    %c0_i32 = arith.constant 0 : i32
    %c0_i32_0 = arith.constant 0 : i32
    %c0_i32_1 = arith.constant 0 : i32
    return %c0_i32, %c0_i32_0 : i32, i32
  }
  func.func @transform_23(%arg0: i32) -> (i32, i32) {
    %c0_i32 = arith.constant 0 : i32
    %c0_i32_0 = arith.constant 0 : i32
    %c0_i32_1 = arith.constant 0 : i32
    return %c0_i32, %c0_i32_0 : i32, i32
  }
  func.func @transform_24(%arg0: i32) -> (i32, i32) {
    %c0_i32 = arith.constant 0 : i32
    %c0_i32_0 = arith.constant 0 : i32
    return %arg0, %c0_i32 : i32, i32
  }
  func.func @transform_25(%arg0: i32) -> (i32, i32) {
    %c0_i32 = arith.constant 0 : i32
    %c0_i32_0 = arith.constant 0 : i32
    return %arg0, %c0_i32 : i32, i32
  }
  func.func @transform_26(%arg0: i32) -> (i32, i32) {
    %c0_i32 = arith.constant 0 : i32
    %c0_i32_0 = arith.constant 0 : i32
    return %arg0, %c0_i32 : i32, i32
  }
}

module attributes {stable_mosaic.version = 11 : i64} {
  func.func @kernel(%arg0: i32, %arg1: memref<64x128xbf16, #tpu.memory_space<vmem>>, %arg2: memref<64x32xbf16, #tpu.memory_space<vmem>>, %arg3: memref<64x6xbf16, #tpu.memory_space<vmem>>, %arg4: memref<32x64xf32, #tpu.memory_space<vmem>>, %arg5: memref<64x64xf32, #tpu.memory_space<vmem>>, %arg6: memref<1x64xf32, #tpu.memory_space<vmem>>, %arg7: memref<64x64xf32, #tpu.memory_space<vmem>>, %arg8: memref<1x64xf32, #tpu.memory_space<vmem>>, %arg9: memref<64x64xf32, #tpu.memory_space<vmem>>, %arg10: memref<1x64xf32, #tpu.memory_space<vmem>>, %arg11: memref<64x64xf32, #tpu.memory_space<vmem>>, %arg12: memref<1x64xf32, #tpu.memory_space<vmem>>, %arg13: memref<64x64xf32, #tpu.memory_space<vmem>>, %arg14: memref<1x64xf32, #tpu.memory_space<vmem>>, %arg15: memref<64x64xf32, #tpu.memory_space<vmem>>, %arg16: memref<1x64xf32, #tpu.memory_space<vmem>>, %arg17: memref<64x64xf32, #tpu.memory_space<vmem>>, %arg18: memref<1x64xf32, #tpu.memory_space<vmem>>, %arg19: memref<6x64xf32, #tpu.memory_space<vmem>>, %arg20: memref<64x64xbf16, #tpu.memory_space<vmem>>) attributes {dimension_semantics = [#tpu.dimension_semantics<parallel>], iteration_bounds = array<i64: 1>, scalar_prefetch = 0 : i64, scratch_operands = 0 : i64, tpu.core_type = #tpu.core_type<tc>, window_params = [{transform_indices = @transform_0, window_bounds = array<i64: 64, 128>}, {transform_indices = @transform_1, window_bounds = array<i64: 64, 32>}, {transform_indices = @transform_2, window_bounds = array<i64: 64, 6>}, {pipeline_mode = #tpu.pipeline_mode<synchronous>, transform_indices = @transform_3, window_bounds = array<i64: 32, 64>}, {pipeline_mode = #tpu.pipeline_mode<synchronous>, transform_indices = @transform_4, window_bounds = array<i64: 64, 64>}, {pipeline_mode = #tpu.pipeline_mode<synchronous>, transform_indices = @transform_5, window_bounds = array<i64: 1, 64>}, {pipeline_mode = #tpu.pipeline_mode<synchronous>, transform_indices = @transform_6, window_bounds = array<i64: 64, 64>}, {pipeline_mode = #tpu.pipeline_mode<synchronous>, transform_indices = @transform_7, window_bounds = array<i64: 1, 64>}, {pipeline_mode = #tpu.pipeline_mode<synchronous>, transform_indices = @transform_8, window_bounds = array<i64: 64, 64>}, {pipeline_mode = #tpu.pipeline_mode<synchronous>, transform_indices = @transform_9, window_bounds = array<i64: 1, 64>}, {pipeline_mode = #tpu.pipeline_mode<synchronous>, transform_indices = @transform_10, window_bounds = array<i64: 64, 64>}, {pipeline_mode = #tpu.pipeline_mode<synchronous>, transform_indices = @transform_11, window_bounds = array<i64: 1, 64>}, {pipeline_mode = #tpu.pipeline_mode<synchronous>, transform_indices = @transform_12, window_bounds = array<i64: 64, 64>}, {pipeline_mode = #tpu.pipeline_mode<synchronous>, transform_indices = @transform_13, window_bounds = array<i64: 1, 64>}, {pipeline_mode = #tpu.pipeline_mode<synchronous>, transform_indices = @transform_14, window_bounds = array<i64: 64, 64>}, {pipeline_mode = #tpu.pipeline_mode<synchronous>, transform_indices = @transform_15, window_bounds = array<i64: 1, 64>}, {pipeline_mode = #tpu.pipeline_mode<synchronous>, transform_indices = @transform_16, window_bounds = array<i64: 64, 64>}, {pipeline_mode = #tpu.pipeline_mode<synchronous>, transform_indices = @transform_17, window_bounds = array<i64: 1, 64>}, {pipeline_mode = #tpu.pipeline_mode<synchronous>, transform_indices = @transform_18, window_bounds = array<i64: 6, 64>}, {transform_indices = @transform_19, window_bounds = array<i64: 64, 64>}]} {
    %c0 = arith.constant 0 : index
    %c0_0 = arith.constant 0 : index
    %0 = vector.load %arg1[%c0, %c0_0] : memref<64x128xbf16, #tpu.memory_space<vmem>>, vector<64x128xbf16>
    %1 = vector.extract_strided_slice %0 {offsets = [0, 0], sizes = [64, 64], strides = [1, 1]} : vector<64x128xbf16> to vector<64x64xbf16>
    %2 = arith.extf %1 : vector<64x64xbf16> to vector<64x64xf32>
    %3 = vector.extract_strided_slice %0 {offsets = [0, 64], sizes = [64, 64], strides = [1, 1]} : vector<64x128xbf16> to vector<64x64xbf16>
    %4 = arith.extf %3 : vector<64x64xbf16> to vector<64x64xf32>
    %c0_1 = arith.constant 0 : index
    %c0_2 = arith.constant 0 : index
    %5 = vector.load %arg2[%c0_1, %c0_2] : memref<64x32xbf16, #tpu.memory_space<vmem>>, vector<64x32xbf16>
    %c0_3 = arith.constant 0 : index
    %c0_4 = arith.constant 0 : index
    %6 = vector.load %arg4[%c0_3, %c0_4] : memref<32x64xf32, #tpu.memory_space<vmem>>, vector<32x64xf32>
    %7 = arith.truncf %6 : vector<32x64xf32> to vector<32x64xbf16>
    %cst = arith.constant dense<0.000000e+00> : vector<64x64xf32>
    %8 = tpu.matmul %5, %7, %cst {dimension_numbers = #tpu.dot_dimension_numbers<[1], [0], [0], [1], [0, 0, 1, 1], [], []>} : vector<64x32xbf16>, vector<32x64xbf16>, vector<64x64xf32> -> vector<64x64xf32>
    %cst_5 = arith.constant 5.000000e-01 : f32
    %9 = vector.broadcast %cst_5 : f32 to vector<64x64xf32>
    %10 = arith.mulf %9, %8 : vector<64x64xf32>
    %11 = math.tanh %10 : vector<64x64xf32>
    %cst_6 = arith.constant 5.000000e-01 : f32
    %12 = vector.broadcast %cst_6 : f32 to vector<64x64xf32>
    %13 = arith.mulf %12, %11 : vector<64x64xf32>
    %cst_7 = arith.constant 5.000000e-01 : f32
    %14 = vector.broadcast %cst_7 : f32 to vector<64x64xf32>
    %15 = arith.addf %13, %14 : vector<64x64xf32>
    %16 = arith.mulf %8, %15 : vector<64x64xf32>
    %17 = arith.addf %4, %16 : vector<64x64xf32>
    %c0_8 = arith.constant 0 : index
    %c0_9 = arith.constant 0 : index
    %18 = vector.load %arg5[%c0_8, %c0_9] : memref<64x64xf32, #tpu.memory_space<vmem>>, vector<64x64xf32>
    %19 = arith.truncf %17 : vector<64x64xf32> to vector<64x64xbf16>
    %20 = arith.truncf %18 : vector<64x64xf32> to vector<64x64xbf16>
    %cst_10 = arith.constant dense<0.000000e+00> : vector<64x64xf32>
    %21 = tpu.matmul %19, %20, %cst_10 {dimension_numbers = #tpu.dot_dimension_numbers<[1], [0], [0], [1], [0, 0, 1, 1], [], []>} : vector<64x64xbf16>, vector<64x64xbf16>, vector<64x64xf32> -> vector<64x64xf32>
    %c0_11 = arith.constant 0 : index
    %c0_12 = arith.constant 0 : index
    %22 = vector.load %arg6[%c0_11, %c0_12] : memref<1x64xf32, #tpu.memory_space<vmem>>, vector<1x64xf32>
    %23 = vector.broadcast %22 : vector<1x64xf32> to vector<64x64xf32>
    %24 = arith.addf %21, %23 : vector<64x64xf32>
    %cst_13 = arith.constant 5.000000e-01 : f32
    %25 = vector.broadcast %cst_13 : f32 to vector<64x64xf32>
    %26 = arith.mulf %25, %24 : vector<64x64xf32>
    %27 = math.tanh %26 : vector<64x64xf32>
    %cst_14 = arith.constant 5.000000e-01 : f32
    %28 = vector.broadcast %cst_14 : f32 to vector<64x64xf32>
    %29 = arith.mulf %28, %27 : vector<64x64xf32>
    %cst_15 = arith.constant 5.000000e-01 : f32
    %30 = vector.broadcast %cst_15 : f32 to vector<64x64xf32>
    %31 = arith.addf %29, %30 : vector<64x64xf32>
    %32 = arith.mulf %24, %31 : vector<64x64xf32>
    %c0_16 = arith.constant 0 : index
    %c0_17 = arith.constant 0 : index
    %33 = vector.load %arg7[%c0_16, %c0_17] : memref<64x64xf32, #tpu.memory_space<vmem>>, vector<64x64xf32>
    %34 = arith.truncf %32 : vector<64x64xf32> to vector<64x64xbf16>
    %35 = arith.truncf %33 : vector<64x64xf32> to vector<64x64xbf16>
    %cst_18 = arith.constant dense<0.000000e+00> : vector<64x64xf32>
    %36 = tpu.matmul %34, %35, %cst_18 {dimension_numbers = #tpu.dot_dimension_numbers<[1], [0], [0], [1], [0, 0, 1, 1], [], []>} : vector<64x64xbf16>, vector<64x64xbf16>, vector<64x64xf32> -> vector<64x64xf32>
    %c0_19 = arith.constant 0 : index
    %c0_20 = arith.constant 0 : index
    %37 = vector.load %arg8[%c0_19, %c0_20] : memref<1x64xf32, #tpu.memory_space<vmem>>, vector<1x64xf32>
    %38 = vector.broadcast %37 : vector<1x64xf32> to vector<64x64xf32>
    %39 = arith.addf %36, %38 : vector<64x64xf32>
    %cst_21 = arith.constant 5.000000e-01 : f32
    %40 = vector.broadcast %cst_21 : f32 to vector<64x64xf32>
    %41 = arith.mulf %40, %39 : vector<64x64xf32>
    %42 = math.tanh %41 : vector<64x64xf32>
    %cst_22 = arith.constant 5.000000e-01 : f32
    %43 = vector.broadcast %cst_22 : f32 to vector<64x64xf32>
    %44 = arith.mulf %43, %42 : vector<64x64xf32>
    %cst_23 = arith.constant 5.000000e-01 : f32
    %45 = vector.broadcast %cst_23 : f32 to vector<64x64xf32>
    %46 = arith.addf %44, %45 : vector<64x64xf32>
    %47 = arith.mulf %39, %46 : vector<64x64xf32>
    %48 = arith.addf %17, %47 : vector<64x64xf32>
    %c0_24 = arith.constant 0 : index
    %c0_25 = arith.constant 0 : index
    %49 = vector.load %arg9[%c0_24, %c0_25] : memref<64x64xf32, #tpu.memory_space<vmem>>, vector<64x64xf32>
    %50 = arith.truncf %48 : vector<64x64xf32> to vector<64x64xbf16>
    %51 = arith.truncf %49 : vector<64x64xf32> to vector<64x64xbf16>
    %cst_26 = arith.constant dense<0.000000e+00> : vector<64x64xf32>
    %52 = tpu.matmul %50, %51, %cst_26 {dimension_numbers = #tpu.dot_dimension_numbers<[1], [0], [0], [1], [0, 0, 1, 1], [], []>} : vector<64x64xbf16>, vector<64x64xbf16>, vector<64x64xf32> -> vector<64x64xf32>
    %c0_27 = arith.constant 0 : index
    %c0_28 = arith.constant 0 : index
    %53 = vector.load %arg10[%c0_27, %c0_28] : memref<1x64xf32, #tpu.memory_space<vmem>>, vector<1x64xf32>
    %54 = vector.broadcast %53 : vector<1x64xf32> to vector<64x64xf32>
    %55 = arith.addf %52, %54 : vector<64x64xf32>
    %cst_29 = arith.constant 5.000000e-01 : f32
    %56 = vector.broadcast %cst_29 : f32 to vector<64x64xf32>
    %57 = arith.mulf %56, %55 : vector<64x64xf32>
    %58 = math.tanh %57 : vector<64x64xf32>
    %cst_30 = arith.constant 5.000000e-01 : f32
    %59 = vector.broadcast %cst_30 : f32 to vector<64x64xf32>
    %60 = arith.mulf %59, %58 : vector<64x64xf32>
    %cst_31 = arith.constant 5.000000e-01 : f32
    %61 = vector.broadcast %cst_31 : f32 to vector<64x64xf32>
    %62 = arith.addf %60, %61 : vector<64x64xf32>
    %63 = arith.mulf %55, %62 : vector<64x64xf32>
    %64 = arith.addf %63, %2 : vector<64x64xf32>
    %c0_32 = arith.constant 0 : index
    %c0_33 = arith.constant 0 : index
    %65 = vector.load %arg11[%c0_32, %c0_33] : memref<64x64xf32, #tpu.memory_space<vmem>>, vector<64x64xf32>
    %66 = arith.truncf %64 : vector<64x64xf32> to vector<64x64xbf16>
    %67 = arith.truncf %65 : vector<64x64xf32> to vector<64x64xbf16>
    %cst_34 = arith.constant dense<0.000000e+00> : vector<64x64xf32>
    %68 = tpu.matmul %66, %67, %cst_34 {dimension_numbers = #tpu.dot_dimension_numbers<[1], [0], [0], [1], [0, 0, 1, 1], [], []>} : vector<64x64xbf16>, vector<64x64xbf16>, vector<64x64xf32> -> vector<64x64xf32>
    %c0_35 = arith.constant 0 : index
    %c0_36 = arith.constant 0 : index
    %69 = vector.load %arg12[%c0_35, %c0_36] : memref<1x64xf32, #tpu.memory_space<vmem>>, vector<1x64xf32>
    %70 = vector.broadcast %69 : vector<1x64xf32> to vector<64x64xf32>
    %71 = arith.addf %68, %70 : vector<64x64xf32>
    %cst_37 = arith.constant 5.000000e-01 : f32
    %72 = vector.broadcast %cst_37 : f32 to vector<64x64xf32>
    %73 = arith.mulf %72, %71 : vector<64x64xf32>
    %74 = math.tanh %73 : vector<64x64xf32>
    %cst_38 = arith.constant 5.000000e-01 : f32
    %75 = vector.broadcast %cst_38 : f32 to vector<64x64xf32>
    %76 = arith.mulf %75, %74 : vector<64x64xf32>
    %cst_39 = arith.constant 5.000000e-01 : f32
    %77 = vector.broadcast %cst_39 : f32 to vector<64x64xf32>
    %78 = arith.addf %76, %77 : vector<64x64xf32>
    %79 = arith.mulf %71, %78 : vector<64x64xf32>
    %c0_40 = arith.constant 0 : index
    %c0_41 = arith.constant 0 : index
    %80 = vector.load %arg13[%c0_40, %c0_41] : memref<64x64xf32, #tpu.memory_space<vmem>>, vector<64x64xf32>
    %81 = arith.truncf %79 : vector<64x64xf32> to vector<64x64xbf16>
    %82 = arith.truncf %80 : vector<64x64xf32> to vector<64x64xbf16>
    %cst_42 = arith.constant dense<0.000000e+00> : vector<64x64xf32>
    %83 = tpu.matmul %81, %82, %cst_42 {dimension_numbers = #tpu.dot_dimension_numbers<[1], [0], [0], [1], [0, 0, 1, 1], [], []>} : vector<64x64xbf16>, vector<64x64xbf16>, vector<64x64xf32> -> vector<64x64xf32>
    %c0_43 = arith.constant 0 : index
    %c0_44 = arith.constant 0 : index
    %84 = vector.load %arg14[%c0_43, %c0_44] : memref<1x64xf32, #tpu.memory_space<vmem>>, vector<1x64xf32>
    %85 = vector.broadcast %84 : vector<1x64xf32> to vector<64x64xf32>
    %86 = arith.addf %83, %85 : vector<64x64xf32>
    %cst_45 = arith.constant 5.000000e-01 : f32
    %87 = vector.broadcast %cst_45 : f32 to vector<64x64xf32>
    %88 = arith.mulf %87, %86 : vector<64x64xf32>
    %89 = math.tanh %88 : vector<64x64xf32>
    %cst_46 = arith.constant 5.000000e-01 : f32
    %90 = vector.broadcast %cst_46 : f32 to vector<64x64xf32>
    %91 = arith.mulf %90, %89 : vector<64x64xf32>
    %cst_47 = arith.constant 5.000000e-01 : f32
    %92 = vector.broadcast %cst_47 : f32 to vector<64x64xf32>
    %93 = arith.addf %91, %92 : vector<64x64xf32>
    %94 = arith.mulf %86, %93 : vector<64x64xf32>
    %95 = arith.addf %64, %94 : vector<64x64xf32>
    %c0_48 = arith.constant 0 : index
    %c0_49 = arith.constant 0 : index
    %96 = vector.load %arg15[%c0_48, %c0_49] : memref<64x64xf32, #tpu.memory_space<vmem>>, vector<64x64xf32>
    %97 = arith.truncf %95 : vector<64x64xf32> to vector<64x64xbf16>
    %98 = arith.truncf %96 : vector<64x64xf32> to vector<64x64xbf16>
    %cst_50 = arith.constant dense<0.000000e+00> : vector<64x64xf32>
    %99 = tpu.matmul %97, %98, %cst_50 {dimension_numbers = #tpu.dot_dimension_numbers<[1], [0], [0], [1], [0, 0, 1, 1], [], []>} : vector<64x64xbf16>, vector<64x64xbf16>, vector<64x64xf32> -> vector<64x64xf32>
    %c0_51 = arith.constant 0 : index
    %c0_52 = arith.constant 0 : index
    %100 = vector.load %arg16[%c0_51, %c0_52] : memref<1x64xf32, #tpu.memory_space<vmem>>, vector<1x64xf32>
    %101 = vector.broadcast %100 : vector<1x64xf32> to vector<64x64xf32>
    %102 = arith.addf %99, %101 : vector<64x64xf32>
    %cst_53 = arith.constant 5.000000e-01 : f32
    %103 = vector.broadcast %cst_53 : f32 to vector<64x64xf32>
    %104 = arith.mulf %103, %102 : vector<64x64xf32>
    %105 = math.tanh %104 : vector<64x64xf32>
    %cst_54 = arith.constant 5.000000e-01 : f32
    %106 = vector.broadcast %cst_54 : f32 to vector<64x64xf32>
    %107 = arith.mulf %106, %105 : vector<64x64xf32>
    %cst_55 = arith.constant 5.000000e-01 : f32
    %108 = vector.broadcast %cst_55 : f32 to vector<64x64xf32>
    %109 = arith.addf %107, %108 : vector<64x64xf32>
    %110 = arith.mulf %102, %109 : vector<64x64xf32>
    %c0_56 = arith.constant 0 : index
    %c0_57 = arith.constant 0 : index
    %111 = vector.load %arg17[%c0_56, %c0_57] : memref<64x64xf32, #tpu.memory_space<vmem>>, vector<64x64xf32>
    %112 = arith.truncf %110 : vector<64x64xf32> to vector<64x64xbf16>
    %113 = arith.truncf %111 : vector<64x64xf32> to vector<64x64xbf16>
    %cst_58 = arith.constant dense<0.000000e+00> : vector<64x64xf32>
    %114 = tpu.matmul %112, %113, %cst_58 {dimension_numbers = #tpu.dot_dimension_numbers<[1], [0], [0], [1], [0, 0, 1, 1], [], []>} : vector<64x64xbf16>, vector<64x64xbf16>, vector<64x64xf32> -> vector<64x64xf32>
    %c0_59 = arith.constant 0 : index
    %c0_60 = arith.constant 0 : index
    %115 = vector.load %arg18[%c0_59, %c0_60] : memref<1x64xf32, #tpu.memory_space<vmem>>, vector<1x64xf32>
    %116 = vector.broadcast %115 : vector<1x64xf32> to vector<64x64xf32>
    %117 = arith.addf %114, %116 : vector<64x64xf32>
    %cst_61 = arith.constant 5.000000e-01 : f32
    %118 = vector.broadcast %cst_61 : f32 to vector<64x64xf32>
    %119 = arith.mulf %118, %117 : vector<64x64xf32>
    %120 = math.tanh %119 : vector<64x64xf32>
    %cst_62 = arith.constant 5.000000e-01 : f32
    %121 = vector.broadcast %cst_62 : f32 to vector<64x64xf32>
    %122 = arith.mulf %121, %120 : vector<64x64xf32>
    %cst_63 = arith.constant 5.000000e-01 : f32
    %123 = vector.broadcast %cst_63 : f32 to vector<64x64xf32>
    %124 = arith.addf %122, %123 : vector<64x64xf32>
    %125 = arith.mulf %117, %124 : vector<64x64xf32>
    %126 = arith.addf %95, %125 : vector<64x64xf32>
    %c0_64 = arith.constant 0 : index
    %c0_65 = arith.constant 0 : index
    %127 = vector.load %arg3[%c0_64, %c0_65] : memref<64x6xbf16, #tpu.memory_space<vmem>>, vector<64x6xbf16>
    %c0_66 = arith.constant 0 : index
    %c0_67 = arith.constant 0 : index
    %128 = vector.load %arg19[%c0_66, %c0_67] : memref<6x64xf32, #tpu.memory_space<vmem>>, vector<6x64xf32>
    %129 = arith.truncf %128 : vector<6x64xf32> to vector<6x64xbf16>
    %cst_68 = arith.constant dense<0.000000e+00> : vector<64x64xf32>
    %130 = tpu.matmul %127, %129, %cst_68 {dimension_numbers = #tpu.dot_dimension_numbers<[1], [0], [0], [1], [0, 0, 1, 1], [], []>} : vector<64x6xbf16>, vector<6x64xbf16>, vector<64x64xf32> -> vector<64x64xf32>
    %131 = arith.mulf %130, %126 : vector<64x64xf32>
    %132 = arith.truncf %131 : vector<64x64xf32> to vector<64x64xbf16>
    %c0_69 = arith.constant 0 : index
    %c0_70 = arith.constant 0 : index
    %133 = vector.load %arg20[%c0_69, %c0_70] : memref<64x64xbf16, #tpu.memory_space<vmem>>, vector<64x64xbf16>
    tpu.vector_store %arg20[%c0_69, %c0_70], %132 {strides = array<i32>} : memref<64x64xbf16, #tpu.memory_space<vmem>>, vector<64x64xbf16>,
    return
  }
  func.func @transform_0(%arg0: i32) -> (i32, i32) {
    %c0_i32 = arith.constant 0 : i32
    %c0_i32_0 = arith.constant 0 : i32
    return %arg0, %c0_i32 : i32, i32
  }
  func.func @transform_1(%arg0: i32) -> (i32, i32) {
    %c0_i32 = arith.constant 0 : i32
    %c0_i32_0 = arith.constant 0 : i32
    return %arg0, %c0_i32 : i32, i32
  }
  func.func @transform_2(%arg0: i32) -> (i32, i32) {
    %c0_i32 = arith.constant 0 : i32
    %c0_i32_0 = arith.constant 0 : i32
    return %arg0, %c0_i32 : i32, i32
  }
  func.func @transform_3(%arg0: i32) -> (i32, i32) {
    %c0_i32 = arith.constant 0 : i32
    %c0_i32_0 = arith.constant 0 : i32
    %c0_i32_1 = arith.constant 0 : i32
    return %c0_i32, %c0_i32_0 : i32, i32
  }
  func.func @transform_4(%arg0: i32) -> (i32, i32) {
    %c0_i32 = arith.constant 0 : i32
    %c0_i32_0 = arith.constant 0 : i32
    %c0_i32_1 = arith.constant 0 : i32
    return %c0_i32, %c0_i32_0 : i32, i32
  }
  func.func @transform_5(%arg0: i32) -> (i32, i32) {
    %c0_i32 = arith.constant 0 : i32
    %c0_i32_0 = arith.constant 0 : i32
    %c0_i32_1 = arith.constant 0 : i32
    return %c0_i32, %c0_i32_0 : i32, i32
  }
  func.func @transform_6(%arg0: i32) -> (i32, i32) {
    %c0_i32 = arith.constant 0 : i32
    %c0_i32_0 = arith.constant 0 : i32
    %c0_i32_1 = arith.constant 0 : i32
    return %c0_i32, %c0_i32_0 : i32, i32
  }
  func.func @transform_7(%arg0: i32) -> (i32, i32) {
    %c0_i32 = arith.constant 0 : i32
    %c0_i32_0 = arith.constant 0 : i32
    %c0_i32_1 = arith.constant 0 : i32
    return %c0_i32, %c0_i32_0 : i32, i32
  }
  func.func @transform_8(%arg0: i32) -> (i32, i32) {
    %c0_i32 = arith.constant 0 : i32
    %c0_i32_0 = arith.constant 0 : i32
    %c0_i32_1 = arith.constant 0 : i32
    return %c0_i32, %c0_i32_0 : i32, i32
  }
  func.func @transform_9(%arg0: i32) -> (i32, i32) {
    %c0_i32 = arith.constant 0 : i32
    %c0_i32_0 = arith.constant 0 : i32
    %c0_i32_1 = arith.constant 0 : i32
    return %c0_i32, %c0_i32_0 : i32, i32
  }
  func.func @transform_10(%arg0: i32) -> (i32, i32) {
    %c0_i32 = arith.constant 0 : i32
    %c0_i32_0 = arith.constant 0 : i32
    %c0_i32_1 = arith.constant 0 : i32
    return %c0_i32, %c0_i32_0 : i32, i32
  }
  func.func @transform_11(%arg0: i32) -> (i32, i32) {
    %c0_i32 = arith.constant 0 : i32
    %c0_i32_0 = arith.constant 0 : i32
    %c0_i32_1 = arith.constant 0 : i32
    return %c0_i32, %c0_i32_0 : i32, i32
  }
  func.func @transform_12(%arg0: i32) -> (i32, i32) {
    %c0_i32 = arith.constant 0 : i32
    %c0_i32_0 = arith.constant 0 : i32
    %c0_i32_1 = arith.constant 0 : i32
    return %c0_i32, %c0_i32_0 : i32, i32
  }
  func.func @transform_13(%arg0: i32) -> (i32, i32) {
    %c0_i32 = arith.constant 0 : i32
    %c0_i32_0 = arith.constant 0 : i32
    %c0_i32_1 = arith.constant 0 : i32
    return %c0_i32, %c0_i32_0 : i32, i32
  }
  func.func @transform_14(%arg0: i32) -> (i32, i32) {
    %c0_i32 = arith.constant 0 : i32
    %c0_i32_0 = arith.constant 0 : i32
    %c0_i32_1 = arith.constant 0 : i32
    return %c0_i32, %c0_i32_0 : i32, i32
  }
  func.func @transform_15(%arg0: i32) -> (i32, i32) {
    %c0_i32 = arith.constant 0 : i32
    %c0_i32_0 = arith.constant 0 : i32
    %c0_i32_1 = arith.constant 0 : i32
    return %c0_i32, %c0_i32_0 : i32, i32
  }
  func.func @transform_16(%arg0: i32) -> (i32, i32) {
    %c0_i32 = arith.constant 0 : i32
    %c0_i32_0 = arith.constant 0 : i32
    %c0_i32_1 = arith.constant 0 : i32
    return %c0_i32, %c0_i32_0 : i32, i32
  }
  func.func @transform_17(%arg0: i32) -> (i32, i32) {
    %c0_i32 = arith.constant 0 : i32
    %c0_i32_0 = arith.constant 0 : i32
    %c0_i32_1 = arith.constant 0 : i32
    return %c0_i32, %c0_i32_0 : i32, i32
  }
  func.func @transform_18(%arg0: i32) -> (i32, i32) {
    %c0_i32 = arith.constant 0 : i32
    %c0_i32_0 = arith.constant 0 : i32
    %c0_i32_1 = arith.constant 0 : i32
    return %c0_i32, %c0_i32_0 : i32, i32
  }
  func.func @transform_19(%arg0: i32) -> (i32, i32) {
    %c0_i32 = arith.constant 0 : i32
    %c0_i32_0 = arith.constant 0 : i32
    return %arg0, %c0_i32 : i32, i32
  }
}

module attributes {stable_mosaic.version = 11 : i64} {
  func.func @kernel(%arg0: i32, %arg1: memref<16x64xf32, #tpu.memory_space<vmem>>, %arg2: memref<16x64xf32, #tpu.memory_space<vmem>>, %arg3: memref<16x64xf32, #tpu.memory_space<vmem>>, %arg4: memref<3x64x64xf32, #tpu.memory_space<vmem>>, %arg5: memref<3x1x64xf32, #tpu.memory_space<vmem>>, %arg6: memref<3x64x64xf32, #tpu.memory_space<vmem>>, %arg7: memref<3x1x64xf32, #tpu.memory_space<vmem>>, %arg8: memref<3x64x64xf32, #tpu.memory_space<vmem>>, %arg9: memref<3x1x64xf32, #tpu.memory_space<vmem>>, %arg10: memref<3x64x4xf32, #tpu.memory_space<vmem>>, %arg11: memref<16x4xf32, #tpu.memory_space<vmem>>) attributes {dimension_semantics = [#tpu.dimension_semantics<parallel>], iteration_bounds = array<i64: 1>, scalar_prefetch = 0 : i64, scratch_operands = 0 : i64, tpu.core_type = #tpu.core_type<tc>, window_params = [{transform_indices = @transform_0, window_bounds = array<i64: 16, 64>}, {transform_indices = @transform_1, window_bounds = array<i64: 16, 64>}, {transform_indices = @transform_2, window_bounds = array<i64: 16, 64>}, {pipeline_mode = #tpu.pipeline_mode<synchronous>, transform_indices = @transform_3, window_bounds = array<i64: 3, 64, 64>}, {pipeline_mode = #tpu.pipeline_mode<synchronous>, transform_indices = @transform_4, window_bounds = array<i64: 3, 1, 64>}, {pipeline_mode = #tpu.pipeline_mode<synchronous>, transform_indices = @transform_5, window_bounds = array<i64: 3, 64, 64>}, {pipeline_mode = #tpu.pipeline_mode<synchronous>, transform_indices = @transform_6, window_bounds = array<i64: 3, 1, 64>}, {pipeline_mode = #tpu.pipeline_mode<synchronous>, transform_indices = @transform_7, window_bounds = array<i64: 3, 64, 64>}, {pipeline_mode = #tpu.pipeline_mode<synchronous>, transform_indices = @transform_8, window_bounds = array<i64: 3, 1, 64>}, {pipeline_mode = #tpu.pipeline_mode<synchronous>, transform_indices = @transform_9, window_bounds = array<i64: 3, 64, 4>}, {transform_indices = @transform_10, window_bounds = array<i64: 16, 4>}]} {
    %cst = arith.constant 0.000000e+00 : f32
    %0 = vector.broadcast %cst : f32 to vector<16x4xf32>
    %c0 = arith.constant 0 : index
    %c0_0 = arith.constant 0 : index
    %1 = vector.load %arg1[%c0, %c0_0] : memref<16x64xf32, #tpu.memory_space<vmem>>, vector<16x64xf32>
    %c0_1 = arith.constant 0 : index
    %c0_2 = arith.constant 0 : index
    %c0_3 = arith.constant 0 : index
    %2 = vector.load %arg4[%c0_1, %c0_2, %c0_3] : memref<3x64x64xf32, #tpu.memory_space<vmem>>, vector<1x64x64xf32>
    %3 = vector.shape_cast %2 : vector<1x64x64xf32> to vector<64x64xf32>
    %4 = arith.truncf %1 : vector<16x64xf32> to vector<16x64xbf16>
    %5 = arith.truncf %3 : vector<64x64xf32> to vector<64x64xbf16>
    %cst_4 = arith.constant dense<0.000000e+00> : vector<16x64xf32>
    %6 = tpu.matmul %4, %5, %cst_4 {dimension_numbers = #tpu.dot_dimension_numbers<[1], [0], [0], [1], [0, 0, 1, 1], [], []>} : vector<16x64xbf16>, vector<64x64xbf16>, vector<16x64xf32> -> vector<16x64xf32>
    %c0_5 = arith.constant 0 : index
    %c0_6 = arith.constant 0 : index
    %c0_7 = arith.constant 0 : index
    %7 = vector.load %arg5[%c0_5, %c0_6, %c0_7] : memref<3x1x64xf32, #tpu.memory_space<vmem>>, vector<1x1x64xf32>
    %8 = vector.shape_cast %7 : vector<1x1x64xf32> to vector<1x64xf32>
    %9 = vector.broadcast %8 : vector<1x64xf32> to vector<16x64xf32>
    %10 = arith.addf %6, %9 : vector<16x64xf32>
    %c0_8 = arith.constant 0 : index
    %c0_9 = arith.constant 0 : index
    %c0_10 = arith.constant 0 : index
    %11 = vector.load %arg6[%c0_8, %c0_9, %c0_10] : memref<3x64x64xf32, #tpu.memory_space<vmem>>, vector<1x64x64xf32>
    %12 = vector.shape_cast %11 : vector<1x64x64xf32> to vector<64x64xf32>
    %13 = arith.truncf %10 : vector<16x64xf32> to vector<16x64xbf16>
    %14 = arith.truncf %12 : vector<64x64xf32> to vector<64x64xbf16>
    %cst_11 = arith.constant dense<0.000000e+00> : vector<16x64xf32>
    %15 = tpu.matmul %13, %14, %cst_11 {dimension_numbers = #tpu.dot_dimension_numbers<[1], [0], [0], [1], [0, 0, 1, 1], [], []>} : vector<16x64xbf16>, vector<64x64xbf16>, vector<16x64xf32> -> vector<16x64xf32>
    %c0_12 = arith.constant 0 : index
    %c0_13 = arith.constant 0 : index
    %c0_14 = arith.constant 0 : index
    %16 = vector.load %arg7[%c0_12, %c0_13, %c0_14] : memref<3x1x64xf32, #tpu.memory_space<vmem>>, vector<1x1x64xf32>
    %17 = vector.shape_cast %16 : vector<1x1x64xf32> to vector<1x64xf32>
    %18 = vector.broadcast %17 : vector<1x64xf32> to vector<16x64xf32>
    %19 = arith.addf %15, %18 : vector<16x64xf32>
    %cst_15 = arith.constant 5.000000e-01 : f32
    %20 = vector.broadcast %cst_15 : f32 to vector<16x64xf32>
    %21 = arith.mulf %20, %19 : vector<16x64xf32>
    %22 = math.tanh %21 : vector<16x64xf32>
    %cst_16 = arith.constant 5.000000e-01 : f32
    %23 = vector.broadcast %cst_16 : f32 to vector<16x64xf32>
    %24 = arith.mulf %23, %22 : vector<16x64xf32>
    %cst_17 = arith.constant 5.000000e-01 : f32
    %25 = vector.broadcast %cst_17 : f32 to vector<16x64xf32>
    %26 = arith.addf %24, %25 : vector<16x64xf32>
    %27 = arith.mulf %19, %26 : vector<16x64xf32>
    %c0_18 = arith.constant 0 : index
    %c0_19 = arith.constant 0 : index
    %c0_20 = arith.constant 0 : index
    %28 = vector.load %arg8[%c0_18, %c0_19, %c0_20] : memref<3x64x64xf32, #tpu.memory_space<vmem>>, vector<1x64x64xf32>
    %29 = vector.shape_cast %28 : vector<1x64x64xf32> to vector<64x64xf32>
    %30 = arith.truncf %27 : vector<16x64xf32> to vector<16x64xbf16>
    %31 = arith.truncf %29 : vector<64x64xf32> to vector<64x64xbf16>
    %cst_21 = arith.constant dense<0.000000e+00> : vector<16x64xf32>
    %32 = tpu.matmul %30, %31, %cst_21 {dimension_numbers = #tpu.dot_dimension_numbers<[1], [0], [0], [1], [0, 0, 1, 1], [], []>} : vector<16x64xbf16>, vector<64x64xbf16>, vector<16x64xf32> -> vector<16x64xf32>
    %c0_22 = arith.constant 0 : index
    %c0_23 = arith.constant 0 : index
    %c0_24 = arith.constant 0 : index
    %33 = vector.load %arg9[%c0_22, %c0_23, %c0_24] : memref<3x1x64xf32, #tpu.memory_space<vmem>>, vector<1x1x64xf32>
    %34 = vector.shape_cast %33 : vector<1x1x64xf32> to vector<1x64xf32>
    %35 = vector.broadcast %34 : vector<1x64xf32> to vector<16x64xf32>
    %36 = arith.addf %32, %35 : vector<16x64xf32>
    %cst_25 = arith.constant 5.000000e-01 : f32
    %37 = vector.broadcast %cst_25 : f32 to vector<16x64xf32>
    %38 = arith.mulf %37, %36 : vector<16x64xf32>
    %39 = math.tanh %38 : vector<16x64xf32>
    %cst_26 = arith.constant 5.000000e-01 : f32
    %40 = vector.broadcast %cst_26 : f32 to vector<16x64xf32>
    %41 = arith.mulf %40, %39 : vector<16x64xf32>
    %cst_27 = arith.constant 5.000000e-01 : f32
    %42 = vector.broadcast %cst_27 : f32 to vector<16x64xf32>
    %43 = arith.addf %41, %42 : vector<16x64xf32>
    %44 = arith.mulf %36, %43 : vector<16x64xf32>
    %c0_28 = arith.constant 0 : index
    %c0_29 = arith.constant 0 : index
    %c0_30 = arith.constant 0 : index
    %45 = vector.load %arg10[%c0_28, %c0_29, %c0_30] : memref<3x64x4xf32, #tpu.memory_space<vmem>>, vector<1x64x4xf32>
    %46 = vector.shape_cast %45 : vector<1x64x4xf32> to vector<64x4xf32>
    %47 = arith.truncf %44 : vector<16x64xf32> to vector<16x64xbf16>
    %48 = arith.truncf %46 : vector<64x4xf32> to vector<64x4xbf16>
    %cst_31 = arith.constant dense<0.000000e+00> : vector<16x4xf32>
    %49 = tpu.matmul %47, %48, %cst_31 {dimension_numbers = #tpu.dot_dimension_numbers<[1], [0], [0], [1], [0, 0, 1, 1], [], []>} : vector<16x64xbf16>, vector<64x4xbf16>, vector<16x4xf32> -> vector<16x4xf32>
    %50 = arith.addf %0, %49 : vector<16x4xf32>
    %c0_32 = arith.constant 0 : index
    %c0_33 = arith.constant 0 : index
    %51 = vector.load %arg2[%c0_32, %c0_33] : memref<16x64xf32, #tpu.memory_space<vmem>>, vector<16x64xf32>
    %c1 = arith.constant 1 : index
    %c0_34 = arith.constant 0 : index
    %c0_35 = arith.constant 0 : index
    %52 = vector.load %arg4[%c1, %c0_34, %c0_35] : memref<3x64x64xf32, #tpu.memory_space<vmem>>, vector<1x64x64xf32>
    %53 = vector.shape_cast %52 : vector<1x64x64xf32> to vector<64x64xf32>
    %54 = arith.truncf %51 : vector<16x64xf32> to vector<16x64xbf16>
    %55 = arith.truncf %53 : vector<64x64xf32> to vector<64x64xbf16>
    %cst_36 = arith.constant dense<0.000000e+00> : vector<16x64xf32>
    %56 = tpu.matmul %54, %55, %cst_36 {dimension_numbers = #tpu.dot_dimension_numbers<[1], [0], [0], [1], [0, 0, 1, 1], [], []>} : vector<16x64xbf16>, vector<64x64xbf16>, vector<16x64xf32> -> vector<16x64xf32>
    %c1_37 = arith.constant 1 : index
    %c0_38 = arith.constant 0 : index
    %c0_39 = arith.constant 0 : index
    %57 = vector.load %arg5[%c1_37, %c0_38, %c0_39] : memref<3x1x64xf32, #tpu.memory_space<vmem>>, vector<1x1x64xf32>
    %58 = vector.shape_cast %57 : vector<1x1x64xf32> to vector<1x64xf32>
    %59 = vector.broadcast %58 : vector<1x64xf32> to vector<16x64xf32>
    %60 = arith.addf %56, %59 : vector<16x64xf32>
    %c1_40 = arith.constant 1 : index
    %c0_41 = arith.constant 0 : index
    %c0_42 = arith.constant 0 : index
    %61 = vector.load %arg6[%c1_40, %c0_41, %c0_42] : memref<3x64x64xf32, #tpu.memory_space<vmem>>, vector<1x64x64xf32>
    %62 = vector.shape_cast %61 : vector<1x64x64xf32> to vector<64x64xf32>
    %63 = arith.truncf %60 : vector<16x64xf32> to vector<16x64xbf16>
    %64 = arith.truncf %62 : vector<64x64xf32> to vector<64x64xbf16>
    %cst_43 = arith.constant dense<0.000000e+00> : vector<16x64xf32>
    %65 = tpu.matmul %63, %64, %cst_43 {dimension_numbers = #tpu.dot_dimension_numbers<[1], [0], [0], [1], [0, 0, 1, 1], [], []>} : vector<16x64xbf16>, vector<64x64xbf16>, vector<16x64xf32> -> vector<16x64xf32>
    %c1_44 = arith.constant 1 : index
    %c0_45 = arith.constant 0 : index
    %c0_46 = arith.constant 0 : index
    %66 = vector.load %arg7[%c1_44, %c0_45, %c0_46] : memref<3x1x64xf32, #tpu.memory_space<vmem>>, vector<1x1x64xf32>
    %67 = vector.shape_cast %66 : vector<1x1x64xf32> to vector<1x64xf32>
    %68 = vector.broadcast %67 : vector<1x64xf32> to vector<16x64xf32>
    %69 = arith.addf %65, %68 : vector<16x64xf32>
    %cst_47 = arith.constant 5.000000e-01 : f32
    %70 = vector.broadcast %cst_47 : f32 to vector<16x64xf32>
    %71 = arith.mulf %70, %69 : vector<16x64xf32>
    %72 = math.tanh %71 : vector<16x64xf32>
    %cst_48 = arith.constant 5.000000e-01 : f32
    %73 = vector.broadcast %cst_48 : f32 to vector<16x64xf32>
    %74 = arith.mulf %73, %72 : vector<16x64xf32>
    %cst_49 = arith.constant 5.000000e-01 : f32
    %75 = vector.broadcast %cst_49 : f32 to vector<16x64xf32>
    %76 = arith.addf %74, %75 : vector<16x64xf32>
    %77 = arith.mulf %69, %76 : vector<16x64xf32>
    %c1_50 = arith.constant 1 : index
    %c0_51 = arith.constant 0 : index
    %c0_52 = arith.constant 0 : index
    %78 = vector.load %arg8[%c1_50, %c0_51, %c0_52] : memref<3x64x64xf32, #tpu.memory_space<vmem>>, vector<1x64x64xf32>
    %79 = vector.shape_cast %78 : vector<1x64x64xf32> to vector<64x64xf32>
    %80 = arith.truncf %77 : vector<16x64xf32> to vector<16x64xbf16>
    %81 = arith.truncf %79 : vector<64x64xf32> to vector<64x64xbf16>
    %cst_53 = arith.constant dense<0.000000e+00> : vector<16x64xf32>
    %82 = tpu.matmul %80, %81, %cst_53 {dimension_numbers = #tpu.dot_dimension_numbers<[1], [0], [0], [1], [0, 0, 1, 1], [], []>} : vector<16x64xbf16>, vector<64x64xbf16>, vector<16x64xf32> -> vector<16x64xf32>
    %c1_54 = arith.constant 1 : index
    %c0_55 = arith.constant 0 : index
    %c0_56 = arith.constant 0 : index
    %83 = vector.load %arg9[%c1_54, %c0_55, %c0_56] : memref<3x1x64xf32, #tpu.memory_space<vmem>>, vector<1x1x64xf32>
    %84 = vector.shape_cast %83 : vector<1x1x64xf32> to vector<1x64xf32>
    %85 = vector.broadcast %84 : vector<1x64xf32> to vector<16x64xf32>
    %86 = arith.addf %82, %85 : vector<16x64xf32>
    %cst_57 = arith.constant 5.000000e-01 : f32
    %87 = vector.broadcast %cst_57 : f32 to vector<16x64xf32>
    %88 = arith.mulf %87, %86 : vector<16x64xf32>
    %89 = math.tanh %88 : vector<16x64xf32>
    %cst_58 = arith.constant 5.000000e-01 : f32
    %90 = vector.broadcast %cst_58 : f32 to vector<16x64xf32>
    %91 = arith.mulf %90, %89 : vector<16x64xf32>
    %cst_59 = arith.constant 5.000000e-01 : f32
    %92 = vector.broadcast %cst_59 : f32 to vector<16x64xf32>
    %93 = arith.addf %91, %92 : vector<16x64xf32>
    %94 = arith.mulf %86, %93 : vector<16x64xf32>
    %c1_60 = arith.constant 1 : index
    %c0_61 = arith.constant 0 : index
    %c0_62 = arith.constant 0 : index
    %95 = vector.load %arg10[%c1_60, %c0_61, %c0_62] : memref<3x64x4xf32, #tpu.memory_space<vmem>>, vector<1x64x4xf32>
    %96 = vector.shape_cast %95 : vector<1x64x4xf32> to vector<64x4xf32>
    %97 = arith.truncf %94 : vector<16x64xf32> to vector<16x64xbf16>
    %98 = arith.truncf %96 : vector<64x4xf32> to vector<64x4xbf16>
    %cst_63 = arith.constant dense<0.000000e+00> : vector<16x4xf32>
    %99 = tpu.matmul %97, %98, %cst_63 {dimension_numbers = #tpu.dot_dimension_numbers<[1], [0], [0], [1], [0, 0, 1, 1], [], []>} : vector<16x64xbf16>, vector<64x4xbf16>, vector<16x4xf32> -> vector<16x4xf32>
    %100 = arith.addf %50, %99 : vector<16x4xf32>
    %c0_64 = arith.constant 0 : index
    %c0_65 = arith.constant 0 : index
    %101 = vector.load %arg3[%c0_64, %c0_65] : memref<16x64xf32, #tpu.memory_space<vmem>>, vector<16x64xf32>
    %c2 = arith.constant 2 : index
    %c0_66 = arith.constant 0 : index
    %c0_67 = arith.constant 0 : index
    %102 = vector.load %arg4[%c2, %c0_66, %c0_67] : memref<3x64x64xf32, #tpu.memory_space<vmem>>, vector<1x64x64xf32>
    %103 = vector.shape_cast %102 : vector<1x64x64xf32> to vector<64x64xf32>
    %104 = arith.truncf %101 : vector<16x64xf32> to vector<16x64xbf16>
    %105 = arith.truncf %103 : vector<64x64xf32> to vector<64x64xbf16>
    %cst_68 = arith.constant dense<0.000000e+00> : vector<16x64xf32>
    %106 = tpu.matmul %104, %105, %cst_68 {dimension_numbers = #tpu.dot_dimension_numbers<[1], [0], [0], [1], [0, 0, 1, 1], [], []>} : vector<16x64xbf16>, vector<64x64xbf16>, vector<16x64xf32> -> vector<16x64xf32>
    %c2_69 = arith.constant 2 : index
    %c0_70 = arith.constant 0 : index
    %c0_71 = arith.constant 0 : index
    %107 = vector.load %arg5[%c2_69, %c0_70, %c0_71] : memref<3x1x64xf32, #tpu.memory_space<vmem>>, vector<1x1x64xf32>
    %108 = vector.shape_cast %107 : vector<1x1x64xf32> to vector<1x64xf32>
    %109 = vector.broadcast %108 : vector<1x64xf32> to vector<16x64xf32>
    %110 = arith.addf %106, %109 : vector<16x64xf32>
    %c2_72 = arith.constant 2 : index
    %c0_73 = arith.constant 0 : index
    %c0_74 = arith.constant 0 : index
    %111 = vector.load %arg6[%c2_72, %c0_73, %c0_74] : memref<3x64x64xf32, #tpu.memory_space<vmem>>, vector<1x64x64xf32>
    %112 = vector.shape_cast %111 : vector<1x64x64xf32> to vector<64x64xf32>
    %113 = arith.truncf %110 : vector<16x64xf32> to vector<16x64xbf16>
    %114 = arith.truncf %112 : vector<64x64xf32> to vector<64x64xbf16>
    %cst_75 = arith.constant dense<0.000000e+00> : vector<16x64xf32>
    %115 = tpu.matmul %113, %114, %cst_75 {dimension_numbers = #tpu.dot_dimension_numbers<[1], [0], [0], [1], [0, 0, 1, 1], [], []>} : vector<16x64xbf16>, vector<64x64xbf16>, vector<16x64xf32> -> vector<16x64xf32>
    %c2_76 = arith.constant 2 : index
    %c0_77 = arith.constant 0 : index
    %c0_78 = arith.constant 0 : index
    %116 = vector.load %arg7[%c2_76, %c0_77, %c0_78] : memref<3x1x64xf32, #tpu.memory_space<vmem>>, vector<1x1x64xf32>
    %117 = vector.shape_cast %116 : vector<1x1x64xf32> to vector<1x64xf32>
    %118 = vector.broadcast %117 : vector<1x64xf32> to vector<16x64xf32>
    %119 = arith.addf %115, %118 : vector<16x64xf32>
    %cst_79 = arith.constant 5.000000e-01 : f32
    %120 = vector.broadcast %cst_79 : f32 to vector<16x64xf32>
    %121 = arith.mulf %120, %119 : vector<16x64xf32>
    %122 = math.tanh %121 : vector<16x64xf32>
    %cst_80 = arith.constant 5.000000e-01 : f32
    %123 = vector.broadcast %cst_80 : f32 to vector<16x64xf32>
    %124 = arith.mulf %123, %122 : vector<16x64xf32>
    %cst_81 = arith.constant 5.000000e-01 : f32
    %125 = vector.broadcast %cst_81 : f32 to vector<16x64xf32>
    %126 = arith.addf %124, %125 : vector<16x64xf32>
    %127 = arith.mulf %119, %126 : vector<16x64xf32>
    %c2_82 = arith.constant 2 : index
    %c0_83 = arith.constant 0 : index
    %c0_84 = arith.constant 0 : index
    %128 = vector.load %arg8[%c2_82, %c0_83, %c0_84] : memref<3x64x64xf32, #tpu.memory_space<vmem>>, vector<1x64x64xf32>
    %129 = vector.shape_cast %128 : vector<1x64x64xf32> to vector<64x64xf32>
    %130 = arith.truncf %127 : vector<16x64xf32> to vector<16x64xbf16>
    %131 = arith.truncf %129 : vector<64x64xf32> to vector<64x64xbf16>
    %cst_85 = arith.constant dense<0.000000e+00> : vector<16x64xf32>
    %132 = tpu.matmul %130, %131, %cst_85 {dimension_numbers = #tpu.dot_dimension_numbers<[1], [0], [0], [1], [0, 0, 1, 1], [], []>} : vector<16x64xbf16>, vector<64x64xbf16>, vector<16x64xf32> -> vector<16x64xf32>
    %c2_86 = arith.constant 2 : index
    %c0_87 = arith.constant 0 : index
    %c0_88 = arith.constant 0 : index
    %133 = vector.load %arg9[%c2_86, %c0_87, %c0_88] : memref<3x1x64xf32, #tpu.memory_space<vmem>>, vector<1x1x64xf32>
    %134 = vector.shape_cast %133 : vector<1x1x64xf32> to vector<1x64xf32>
    %135 = vector.broadcast %134 : vector<1x64xf32> to vector<16x64xf32>
    %136 = arith.addf %132, %135 : vector<16x64xf32>
    %cst_89 = arith.constant 5.000000e-01 : f32
    %137 = vector.broadcast %cst_89 : f32 to vector<16x64xf32>
    %138 = arith.mulf %137, %136 : vector<16x64xf32>
    %139 = math.tanh %138 : vector<16x64xf32>
    %cst_90 = arith.constant 5.000000e-01 : f32
    %140 = vector.broadcast %cst_90 : f32 to vector<16x64xf32>
    %141 = arith.mulf %140, %139 : vector<16x64xf32>
    %cst_91 = arith.constant 5.000000e-01 : f32
    %142 = vector.broadcast %cst_91 : f32 to vector<16x64xf32>
    %143 = arith.addf %141, %142 : vector<16x64xf32>
    %144 = arith.mulf %136, %143 : vector<16x64xf32>
    %c2_92 = arith.constant 2 : index
    %c0_93 = arith.constant 0 : index
    %c0_94 = arith.constant 0 : index
    %145 = vector.load %arg10[%c2_92, %c0_93, %c0_94] : memref<3x64x4xf32, #tpu.memory_space<vmem>>, vector<1x64x4xf32>
    %146 = vector.shape_cast %145 : vector<1x64x4xf32> to vector<64x4xf32>
    %147 = arith.truncf %144 : vector<16x64xf32> to vector<16x64xbf16>
    %148 = arith.truncf %146 : vector<64x4xf32> to vector<64x4xbf16>
    %cst_95 = arith.constant dense<0.000000e+00> : vector<16x4xf32>
    %149 = tpu.matmul %147, %148, %cst_95 {dimension_numbers = #tpu.dot_dimension_numbers<[1], [0], [0], [1], [0, 0, 1, 1], [], []>} : vector<16x64xbf16>, vector<64x4xbf16>, vector<16x4xf32> -> vector<16x4xf32>
    %150 = arith.addf %100, %149 : vector<16x4xf32>
    %c0_96 = arith.constant 0 : index
    %c0_97 = arith.constant 0 : index
    %151 = vector.load %arg11[%c0_96, %c0_97] : memref<16x4xf32, #tpu.memory_space<vmem>>, vector<16x4xf32>
    tpu.vector_store %arg11[%c0_96, %c0_97], %150 {strides = array<i32>} : memref<16x4xf32, #tpu.memory_space<vmem>>, vector<16x4xf32>,
    return
  }
  func.func @transform_0(%arg0: i32) -> (i32, i32) {
    %c0_i32 = arith.constant 0 : i32
    %c0_i32_0 = arith.constant 0 : i32
    return %arg0, %c0_i32 : i32, i32
  }
  func.func @transform_1(%arg0: i32) -> (i32, i32) {
    %c0_i32 = arith.constant 0 : i32
    %c0_i32_0 = arith.constant 0 : i32
    return %arg0, %c0_i32 : i32, i32
  }
  func.func @transform_2(%arg0: i32) -> (i32, i32) {
    %c0_i32 = arith.constant 0 : i32
    %c0_i32_0 = arith.constant 0 : i32
    return %arg0, %c0_i32 : i32, i32
  }
  func.func @transform_3(%arg0: i32) -> (i32, i32, i32) {
    %c0_i32 = arith.constant 0 : i32
    %c0_i32_0 = arith.constant 0 : i32
    %c0_i32_1 = arith.constant 0 : i32
    %c0_i32_2 = arith.constant 0 : i32
    return %c0_i32, %c0_i32_0, %c0_i32_1 : i32, i32, i32
  }
  func.func @transform_4(%arg0: i32) -> (i32, i32, i32) {
    %c0_i32 = arith.constant 0 : i32
    %c0_i32_0 = arith.constant 0 : i32
    %c0_i32_1 = arith.constant 0 : i32
    %c0_i32_2 = arith.constant 0 : i32
    return %c0_i32, %c0_i32_0, %c0_i32_1 : i32, i32, i32
  }
  func.func @transform_5(%arg0: i32) -> (i32, i32, i32) {
    %c0_i32 = arith.constant 0 : i32
    %c0_i32_0 = arith.constant 0 : i32
    %c0_i32_1 = arith.constant 0 : i32
    %c0_i32_2 = arith.constant 0 : i32
    return %c0_i32, %c0_i32_0, %c0_i32_1 : i32, i32, i32
  }
  func.func @transform_6(%arg0: i32) -> (i32, i32, i32) {
    %c0_i32 = arith.constant 0 : i32
    %c0_i32_0 = arith.constant 0 : i32
    %c0_i32_1 = arith.constant 0 : i32
    %c0_i32_2 = arith.constant 0 : i32
    return %c0_i32, %c0_i32_0, %c0_i32_1 : i32, i32, i32
  }
  func.func @transform_7(%arg0: i32) -> (i32, i32, i32) {
    %c0_i32 = arith.constant 0 : i32
    %c0_i32_0 = arith.constant 0 : i32
    %c0_i32_1 = arith.constant 0 : i32
    %c0_i32_2 = arith.constant 0 : i32
    return %c0_i32, %c0_i32_0, %c0_i32_1 : i32, i32, i32
  }
  func.func @transform_8(%arg0: i32) -> (i32, i32, i32) {
    %c0_i32 = arith.constant 0 : i32
    %c0_i32_0 = arith.constant 0 : i32
    %c0_i32_1 = arith.constant 0 : i32
    %c0_i32_2 = arith.constant 0 : i32
    return %c0_i32, %c0_i32_0, %c0_i32_1 : i32, i32, i32
  }
  func.func @transform_9(%arg0: i32) -> (i32, i32, i32) {
    %c0_i32 = arith.constant 0 : i32
    %c0_i32_0 = arith.constant 0 : i32
    %c0_i32_1 = arith.constant 0 : i32
    %c0_i32_2 = arith.constant 0 : i32
    return %c0_i32, %c0_i32_0, %c0_i32_1 : i32, i32, i32
  }
  func.func @transform_10(%arg0: i32) -> (i32, i32) {
    %c0_i32 = arith.constant 0 : i32
    %c0_i32_0 = arith.constant 0 : i32
    return %arg0, %c0_i32 : i32, i32
  }
}

</mosaic_0001>

<llo_original>
// kernel: _lambda_.6
$region0: #{_lambda_.6}
  #allocation0 [shape = 'u32[]', space=smem, size = 0x4, offset = 0x4, fixed_abs, tag = 'smem constant byte address 0x4 - core index']
  #allocation1 [shape = 'u32[72,128]{1,0:T(1,128)}', space=vmem, size = 0x9000, scoped, tag = 'internal scratch']
  %s0 = inlined_call_operand.vmem [shape: bf16[64,128], index: 0, kind: input, shape index: {}]
  %s1 = inlined_call_operand.vmem [shape: bf16[64,6], index: 1, kind: input, shape index: {}]
  %s2 = inlined_call_operand.vmem [shape: f32[1,64], index: 2, kind: input, shape index: {}]
  %s3 = inlined_call_operand.vmem [shape: f32[128,64], index: 3, kind: input, shape index: {}]
  %s4 = inlined_call_operand.vmem [shape: f32[64,64], index: 4, kind: input, shape index: {}]
  %s5 = inlined_call_operand.vmem [shape: f32[1,64], index: 5, kind: input, shape index: {}]
  %s6 = inlined_call_operand.vmem [shape: f32[6,64], index: 6, kind: input, shape index: {}]
  %s7 = inlined_call_operand.vmem [shape: f32[6,64], index: 7, kind: input, shape index: {}]
  %s8 = inlined_call_operand.vmem [shape: f32[6,8], index: 8, kind: input, shape index: {}]
  %s9 = inlined_call_operand.vmem [shape: f32[8,64], index: 9, kind: input, shape index: {}]
  %s10 = inlined_call_operand.vmem [shape: f32[64,128], index: 10, kind: input, shape index: {}]
  %s11 = inlined_call_operand.vmem [shape: f32[1,128], index: 11, kind: input, shape index: {}]
  %s12 = inlined_call_operand.vmem [shape: f32[64,32], index: 12, kind: input, shape index: {}]
  %s13 = inlined_call_operand.vmem [shape: bf16[64,128], index: 13, kind: output, shape index: {0}]
  %s14 = inlined_call_operand.vmem [shape: bf16[64,32], index: 14, kind: output, shape index: {1}]
  %s15 = inlined_call_operand.vmem [shape: bf16[64,64], index: 15, kind: output, shape index: {2}]
  %16 = xla_tuple %s13, %s14, %s15
  %s17 = sld [smem:[#allocation0]]
  $region78: #{_lambda_.6} parent=0
    _
  %s19 = ssub.s32 1, %s17
  %s20 = scalar_select 0, %s19, %s17
  // Predicated region
  $region2: #{_lambda_.6} parent=0 // pred_check
    _
  $region3: #{_lambda_.6} parent=0 // pred_check_branch
    %22 = sbr.rel (0) target = $region5
  $region4: #{_lambda_.6} parent=0 // pred_region
    _
  $region5: #{_lambda_.6} parent=0 // pred_fallthru
    _
  // Predicated region
  $region6: #{_lambda_.6} parent=0 // pred_check
    _
  $region7: #{_lambda_.6} parent=0 // pred_check_branch
    %24 = sbr.rel (0) target = $region9
  $region8: #{_lambda_.6} parent=0 // pred_region
    _
  $region9: #{_lambda_.6} parent=0 // pred_fallthru
    _
  // Predicated region
  $region10: #{_lambda_.6} parent=0 // pred_check
    _
  $region11: #{_lambda_.6} parent=0 // pred_check_branch
    %26 = sbr.rel (0) target = $region13
  $region12: #{_lambda_.6} parent=0 // pred_region
    _
  $region13: #{_lambda_.6} parent=0 // pred_fallthru
    _
  // Predicated region
  $region14: #{_lambda_.6} parent=0 // pred_check
    _
  $region15: #{_lambda_.6} parent=0 // pred_check_branch
    %28 = sbr.rel (0) target = $region17
  $region16: #{_lambda_.6} parent=0 // pred_region
    _
  $region17: #{_lambda_.6} parent=0 // pred_fallthru
    _
  // Predicated region
  $region18: #{_lambda_.6} parent=0 // pred_check
    _
  $region19: #{_lambda_.6} parent=0 // pred_check_branch
    %30 = sbr.rel (0) target = $region21
  $region20: #{_lambda_.6} parent=0 // pred_region
    _
  $region21: #{_lambda_.6} parent=0 // pred_fallthru
    _
  // Predicated region
  $region22: #{_lambda_.6} parent=0 // pred_check
    _
  $region23: #{_lambda_.6} parent=0 // pred_check_branch
    %32 = sbr.rel (0) target = $region25
  $region24: #{_lambda_.6} parent=0 // pred_region
    _
  $region25: #{_lambda_.6} parent=0 // pred_fallthru
    _
  // Predicated region
  $region26: #{_lambda_.6} parent=0 // pred_check
    _
  $region27: #{_lambda_.6} parent=0 // pred_check_branch
    %34 = sbr.rel (0) target = $region29
  $region28: #{_lambda_.6} parent=0 // pred_region
    _
  $region29: #{_lambda_.6} parent=0 // pred_fallthru
    _
  // Predicated region
  $region30: #{_lambda_.6} parent=0 // pred_check
    _
  $region31: #{_lambda_.6} parent=0 // pred_check_branch
    %36 = sbr.rel (0) target = $region33
  $region32: #{_lambda_.6} parent=0 // pred_region
    _
  $region33: #{_lambda_.6} parent=0 // pred_fallthru
    _
  // Predicated region
  $region34: #{_lambda_.6} parent=0 // pred_check
    _
  $region35: #{_lambda_.6} parent=0 // pred_check_branch
    %38 = sbr.rel (0) target = $region37
  $region36: #{_lambda_.6} parent=0 // pred_region
    _
  $region37: #{_lambda_.6} parent=0 // pred_fallthru
    _
  // Predicated region
  $region38: #{_lambda_.6} parent=0 // pred_check
    _
  $region39: #{_lambda_.6} parent=0 // pred_check_branch
    %40 = sbr.rel (0) target = $region41
  $region40: #{_lambda_.6} parent=0 // pred_region
    _
  $region41: #{_lambda_.6} parent=0 // pred_fallthru
    _
  // Predicated region
  $region42: #{_lambda_.6} parent=0 // pred_check
    _
  $region43: #{_lambda_.6} parent=0 // pred_check_branch
    %42 = sbr.rel (0) target = $region45
  $region44: #{_lambda_.6} parent=0 // pred_region
    _
  $region45: #{_lambda_.6} parent=0 // pred_fallthru
    _
  // Predicated region
  $region46: #{_lambda_.6} parent=0 // pred_check
    _
  $region47: #{_lambda_.6} parent=0 // pred_check_branch
    %44 = sbr.rel (0) target = $region49
  $region48: #{_lambda_.6} parent=0 // pred_region
    _
  $region49: #{_lambda_.6} parent=0 // pred_fallthru
    _
  // Predicated region
  $region50: #{_lambda_.6} parent=0 // pred_check
    _
  $region51: #{_lambda_.6} parent=0 // pred_check_branch
    %46 = sbr.rel (0) target = $region53
  $region52: #{_lambda_.6} parent=0 // pred_region
    _
  $region53: #{_lambda_.6} parent=0 // pred_fallthru
    _
  %v48 = vld [vmem:[%s1] sm:$0xf]
  %v49 = vld [vmem:[%s1 + $0x4] sm:$0xf]
  %v50 = vld [vmem:[%s1 + $0x8] sm:$0xf]
  %v51 = vld [vmem:[%s1 + $0xc] sm:$0xf]
  %v52 = vld [vmem:[%s1 + $0x10] sm:$0xf]
  %v53 = vld [vmem:[%s1 + $0x14] sm:$0xf]
  %v54 = vld [vmem:[%s1 + $0x18] sm:$0xf]
  %v55 = vld [vmem:[%s1 + $0x1c] sm:$0xf]
  %v56 = vld [vmem:[%s6] sm:$0x3f]
  %v57 = vpack.c.bf16 %v56, %v56
  %v58 = vld [vmem:[%s2] sm:$0x1]
  %v60 = vperm.slane %v58, 0
  %v70 = vunpack.c.l.b16 %v48
  %v71 = vunpack.c.l.b16 %v49
  %v72 = vunpack.c.l.b16 %v50
  %v73 = vunpack.c.l.b16 %v51
  %v74 = vunpack.c.l.b16 %v52
  %v75 = vunpack.c.l.b16 %v53
  %v76 = vunpack.c.l.b16 %v54
  %v77 = vunpack.c.l.b16 %v55
  %v78 = vpack.c.b16 %v71, %v70
  %v79 = vpack.c.b16 %v73, %v72
  %v80 = vpack.c.b16 %v75, %v74
  %v81 = vpack.c.b16 %v77, %v76
  %vm82 = vcmask 48128
  %v84 = vsel %vm82, %v78, 0
  %v87 = vsel %vm82, %v79, 0
  %v90 = vsel %vm82, %v80, 0
  %v93 = vsel %vm82, %v81, 0
  %vm95 = vcmask 1042432
  %v97 = vsel %vm95, %v57, 0
  %99 = vmatpush.bf16.msra.mxu0 0
  %100 = vmatpush.bf16.msra.mxu0 0
  %101 = vmatpush.bf16.msra.mxu0 0
  %102 = vmatpush.bf16.msra.mxu0 0
  %103 = vmatpush.bf16.msra.mxu0 0
  %104 = vmatpush.bf16.msra.mxu0 0
  %105 = vmatpush.bf16.msra.mxu0 0
  %106 = vmatpush.bf16.msra.mxu0 %v97
  %107 = vmatmul.bf16.gmra.mxu0 %v84
  %v108 = vpop.f32.mrf.mxu0
  %v109 = vadd.f32 %v60, %v108
  %v110 = vpop.f32.mrf.mxu0
  %v111 = vadd.f32 %v60, %v110
  %112 = vmatmul.bf16.gmra.mxu0 %v87
  %v113 = vpop.f32.mrf.mxu0
  %v114 = vadd.f32 %v60, %v113
  %v115 = vpop.f32.mrf.mxu0
  %v116 = vadd.f32 %v60, %v115
  %117 = vmatmul.bf16.gmra.mxu0 %v90
  %v118 = vpop.f32.mrf.mxu0
  %v119 = vadd.f32 %v60, %v118
  %v120 = vpop.f32.mrf.mxu0
  %v121 = vadd.f32 %v60, %v120
  %122 = vmatmul.bf16.gmra.mxu0 %v93
  %v123 = vpop.f32.mrf.mxu0
  %v124 = vadd.f32 %v60, %v123
  %v125 = vpop.f32.mrf.mxu0
  %v126 = vadd.f32 %v60, %v125
  %127 = vdwg.mxu0
  %v128 = vmul.f32 %v109, 0.5
  %v129 = vmul.f32 %v111, 0.5
  %v130 = vmul.f32 %v114, 0.5
  %v131 = vmul.f32 %v116, 0.5
  %v132 = vmul.f32 %v119, 0.5
  %v133 = vmul.f32 %v121, 0.5
  %v134 = vmul.f32 %v124, 0.5
  %v135 = vmul.f32 %v126, 0.5
  %v136 = vtanh.pop %v128
  %v137 = vtanh.pop %v129
  %v138 = vtanh.pop %v130
  %v139 = vtanh.pop %v131
  %v140 = vtanh.pop %v132
  %v141 = vtanh.pop %v133
  %v142 = vtanh.pop %v134
  %v143 = vtanh.pop %v135
  %v144 = vmul.f32 %v136, 0.5
  %v145 = vmul.f32 %v137, 0.5
  %v146 = vmul.f32 %v138, 0.5
  %v147 = vmul.f32 %v139, 0.5
  %v148 = vmul.f32 %v140, 0.5
  %v149 = vmul.f32 %v141, 0.5
  %v150 = vmul.f32 %v142, 0.5
  %v151 = vmul.f32 %v143, 0.5
  %v152 = vadd.f32 %v144, 0.5
  %v153 = vadd.f32 %v145, 0.5
  %v154 = vadd.f32 %v146, 0.5
  %v155 = vadd.f32 %v147, 0.5
  %v156 = vadd.f32 %v148, 0.5
  %v157 = vadd.f32 %v149, 0.5
  %v158 = vadd.f32 %v150, 0.5
  %v159 = vadd.f32 %v151, 0.5
  %v160 = vmul.f32 %v109, %v152
  %v161 = vmul.f32 %v111, %v153
  %v162 = vmul.f32 %v114, %v154
  %v163 = vmul.f32 %v116, %v155
  %v164 = vmul.f32 %v119, %v156
  %v165 = vmul.f32 %v121, %v157
  %v166 = vmul.f32 %v124, %v158
  %v167 = vmul.f32 %v126, %v159
  %v168 = vld [vmem:[%s0] sm:$0xf]
  %v169 = vld [vmem:[%s0 + $0x4] sm:$0xf]
  %v170 = vld [vmem:[%s0 + $0x8] sm:$0xf]
  %v171 = vld [vmem:[%s0 + $0xc] sm:$0xf]
  %v172 = vld [vmem:[%s0 + $0x10] sm:$0xf]
  %v173 = vld [vmem:[%s0 + $0x14] sm:$0xf]
  %v174 = vld [vmem:[%s0 + $0x18] sm:$0xf]
  %v175 = vld [vmem:[%s0 + $0x1c] sm:$0xf]
  %v176 = vld [vmem:[%s3] sm:$0xff]
  %v177 = vld [vmem:[%s3 + $0x8] sm:$0xff]
  %v178 = vld [vmem:[%s3 + $0x10] sm:$0xff]
  %v179 = vld [vmem:[%s3 + $0x18] sm:$0xff]
  %v180 = vld [vmem:[%s3 + $0x20] sm:$0xff]
  %v181 = vld [vmem:[%s3 + $0x28] sm:$0xff]
  %v182 = vld [vmem:[%s3 + $0x30] sm:$0xff]
  %v183 = vld [vmem:[%s3 + $0x38] sm:$0xff]
  %v184 = vld [vmem:[%s3 + $0x40] sm:$0xff]
  %v185 = vld [vmem:[%s3 + $0x48] sm:$0xff]
  %v186 = vld [vmem:[%s3 + $0x50] sm:$0xff]
  %v187 = vld [vmem:[%s3 + $0x58] sm:$0xff]
  %v188 = vld [vmem:[%s3 + $0x60] sm:$0xff]
  %v189 = vld [vmem:[%s3 + $0x68] sm:$0xff]
  %v190 = vld [vmem:[%s3 + $0x70] sm:$0xff]
  %v191 = vld [vmem:[%s3 + $0x78] sm:$0xff]
  %v192 = vpack.c.bf16 %v177, %v176
  %v193 = vpack.c.bf16 %v179, %v178
  %v194 = vpack.c.bf16 %v181, %v180
  %v195 = vpack.c.bf16 %v183, %v182
  %v196 = vpack.c.bf16 %v185, %v184
  %v197 = vpack.c.bf16 %v187, %v186
  %v198 = vpack.c.bf16 %v189, %v188
  %v199 = vpack.c.bf16 %v191, %v190
  %v200 = vld [vmem:[%s4] sm:$0xff]
  %v201 = vld [vmem:[%s4 + $0x8] sm:$0xff]
  %v202 = vld [vmem:[%s4 + $0x10] sm:$0xff]
  %v203 = vld [vmem:[%s4 + $0x18] sm:$0xff]
  %v204 = vld [vmem:[%s4 + $0x20] sm:$0xff]
  %v205 = vld [vmem:[%s4 + $0x28] sm:$0xff]
  %v206 = vld [vmem:[%s4 + $0x30] sm:$0xff]
  %v207 = vld [vmem:[%s4 + $0x38] sm:$0xff]
  %v208 = vpack.c.bf16 %v161, %v160
  %v209 = vpack.c.bf16 %v163, %v162
  %v210 = vpack.c.bf16 %v165, %v164
  %v211 = vpack.c.bf16 %v167, %v166
  %v212 = vpack.c.bf16 %v201, %v200
  %v213 = vpack.c.bf16 %v203, %v202
  %v214 = vpack.c.bf16 %v205, %v204
  %v215 = vpack.c.bf16 %v207, %v206
  %vm216 = vcmask 523264
  %v218 = vsel %vm216, %v208, 0
  %v221 = vsel %vm216, %v209, 0
  %v224 = vsel %vm216, %v210, 0
  %v227 = vsel %vm216, %v211, 0
  %229 = vmatpush.bf16.msra.mxu0 0
  %230 = vmatpush.bf16.msra.mxu0 0
  %231 = vmatpush.bf16.msra.mxu0 0
  %232 = vmatpush.bf16.msra.mxu0 0
  %233 = vmatpush.bf16.msra.mxu0 %v215
  %234 = vmatpush.bf16.msra.mxu0 %v214
  %235 = vmatpush.bf16.msra.mxu0 %v213
  %236 = vmatpush.bf16.msra.mxu0 %v212
  %237 = vmatmul.bf16.gmra.mxu0 %v218
  %v238 = vpop.f32.mrf.mxu0
  %v239 = vadd.f32 0.0, %v238
  %v240 = vpop.f32.mrf.mxu0
  %v241 = vadd.f32 0.0, %v240
  %242 = vmatmul.bf16.gmra.mxu0 %v221
  %v243 = vpop.f32.mrf.mxu0
  %v244 = vadd.f32 0.0, %v243
  %v245 = vpop.f32.mrf.mxu0
  %v246 = vadd.f32 0.0, %v245
  %247 = vmatmul.bf16.gmra.mxu0 %v224
  %v248 = vpop.f32.mrf.mxu0
  %v249 = vadd.f32 0.0, %v248
  %v250 = vpop.f32.mrf.mxu0
  %v251 = vadd.f32 0.0, %v250
  %252 = vmatmul.bf16.gmra.mxu0 %v227
  %v253 = vpop.f32.mrf.mxu0
  %v254 = vadd.f32 0.0, %v253
  %v255 = vpop.f32.mrf.mxu0
  %v256 = vadd.f32 0.0, %v255
  %257 = vdwg.mxu0
  %v266 = vunpack.c.l.b16 %v168
  %v267 = vunpack.c.l.b16 %v169
  %v268 = vunpack.c.l.b16 %v170
  %v269 = vunpack.c.l.b16 %v171
  %v270 = vunpack.c.l.b16 %v172
  %v271 = vunpack.c.l.b16 %v173
  %v272 = vunpack.c.l.b16 %v174
  %v273 = vunpack.c.l.b16 %v175
  %v274 = vpack.c.b16 %v267, %v266
  %v275 = vpack.c.b16 %v269, %v268
  %v276 = vpack.c.b16 %v271, %v270
  %v277 = vpack.c.b16 %v273, %v272
  %282 = vmatpush.bf16.msra.mxu0 %v199
  %283 = vmatpush.bf16.msra.mxu0 %v198
  %284 = vmatpush.bf16.msra.mxu0 %v197
  %285 = vmatpush.bf16.msra.mxu0 %v196
  %286 = vmatpush.bf16.msra.mxu0 %v195
  %287 = vmatpush.bf16.msra.mxu0 %v194
  %288 = vmatpush.bf16.msra.mxu0 %v193
  %289 = vmatpush.bf16.msra.mxu0 %v192
  %290 = vmatmul.bf16.gmra.mxu0 %v274
  %v291 = vpop.f32.mrf.mxu0
  %v292 = vadd.f32 %v239, %v291
  %v293 = vpop.f32.mrf.mxu0
  %v294 = vadd.f32 %v241, %v293
  %295 = vmatmul.bf16.gmra.mxu0 %v275
  %v296 = vpop.f32.mrf.mxu0
  %v297 = vadd.f32 %v244, %v296
  %v298 = vpop.f32.mrf.mxu0
  %v299 = vadd.f32 %v246, %v298
  %300 = vmatmul.bf16.gmra.mxu0 %v276
  %v301 = vpop.f32.mrf.mxu0
  %v302 = vadd.f32 %v249, %v301
  %v303 = vpop.f32.mrf.mxu0
  %v304 = vadd.f32 %v251, %v303
  %305 = vmatmul.bf16.gmra.mxu0 %v277
  %v306 = vpop.f32.mrf.mxu0
  %v307 = vadd.f32 %v254, %v306
  %v308 = vpop.f32.mrf.mxu0
  %v309 = vadd.f32 %v256, %v308
  %310 = vdwg.mxu0
  %v311 = vld [vmem:[%s5] sm:$0x1]
  %v313 = vperm.slane %v311, 0
  %v315 = vadd.f32 %v292, %v313
  %v316 = vadd.f32 %v294, %v313
  %v317 = vadd.f32 %v297, %v313
  %v318 = vadd.f32 %v299, %v313
  %v319 = vadd.f32 %v302, %v313
  %v320 = vadd.f32 %v304, %v313
  %v321 = vadd.f32 %v307, %v313
  %v322 = vadd.f32 %v309, %v313
  %v323 = vmul.f32 %v315, 0.5
  %v324 = vmul.f32 %v316, 0.5
  %v325 = vmul.f32 %v317, 0.5
  %v326 = vmul.f32 %v318, 0.5
  %v327 = vmul.f32 %v319, 0.5
  %v328 = vmul.f32 %v320, 0.5
  %v329 = vmul.f32 %v321, 0.5
  %v330 = vmul.f32 %v322, 0.5
  %v331 = vtanh.pop %v323
  %v332 = vtanh.pop %v324
  %v333 = vtanh.pop %v325
  %v334 = vtanh.pop %v326
  %v335 = vtanh.pop %v327
  %v336 = vtanh.pop %v328
  %v337 = vtanh.pop %v329
  %v338 = vtanh.pop %v330
  %v339 = vmul.f32 %v331, 0.5
  %v340 = vmul.f32 %v332, 0.5
  %v341 = vmul.f32 %v333, 0.5
  %v342 = vmul.f32 %v334, 0.5
  %v343 = vmul.f32 %v335, 0.5
  %v344 = vmul.f32 %v336, 0.5
  %v345 = vmul.f32 %v337, 0.5
  %v346 = vmul.f32 %v338, 0.5
  %v347 = vadd.f32 %v339, 0.5
  %v348 = vadd.f32 %v340, 0.5
  %v349 = vadd.f32 %v341, 0.5
  %v350 = vadd.f32 %v342, 0.5
  %v351 = vadd.f32 %v343, 0.5
  %v352 = vadd.f32 %v344, 0.5
  %v353 = vadd.f32 %v345, 0.5
  %v354 = vadd.f32 %v346, 0.5
  %v355 = vmul.f32 %v315, %v347
  %v356 = vmul.f32 %v316, %v348
  %v357 = vmul.f32 %v317, %v349
  %v358 = vmul.f32 %v318, %v350
  %v359 = vmul.f32 %v319, %v351
  %v360 = vmul.f32 %v320, %v352
  %v361 = vmul.f32 %v321, %v353
  %v362 = vmul.f32 %v322, %v354
  %v363 = vld [vmem:[%s7] sm:$0x3f]
  %v364 = vpack.c.bf16 %v363, %v363
  %v366 = vsel %vm95, %v364, 0
  %368 = vmatpush.bf16.msra.mxu0 0
  %369 = vmatpush.bf16.msra.mxu0 0
  %370 = vmatpush.bf16.msra.mxu0 0
  %371 = vmatpush.bf16.msra.mxu0 0
  %372 = vmatpush.bf16.msra.mxu0 0
  %373 = vmatpush.bf16.msra.mxu0 0
  %374 = vmatpush.bf16.msra.mxu0 0
  %375 = vmatpush.bf16.msra.mxu0 %v366
  %376 = vmatmul.bf16.gmra.mxu0 %v84
  %v377 = vpop.f32.mrf.mxu0
  %v378 = vadd.f32 0.0, %v377
  %v379 = vpop.f32.mrf.mxu0
  %v380 = vadd.f32 0.0, %v379
  %381 = vmatmul.bf16.gmra.mxu0 %v87
  %v382 = vpop.f32.mrf.mxu0
  %v383 = vadd.f32 0.0, %v382
  %v384 = vpop.f32.mrf.mxu0
  %v385 = vadd.f32 0.0, %v384
  %386 = vmatmul.bf16.gmra.mxu0 %v90
  %v387 = vpop.f32.mrf.mxu0
  %v388 = vadd.f32 0.0, %v387
  %v389 = vpop.f32.mrf.mxu0
  %v390 = vadd.f32 0.0, %v389
  %391 = vmatmul.bf16.gmra.mxu0 %v93
  %v392 = vpop.f32.mrf.mxu0
  %v393 = vadd.f32 0.0, %v392
  %v394 = vpop.f32.mrf.mxu0
  %v395 = vadd.f32 0.0, %v394
  %396 = vdwg.mxu0
  %v397 = vmul.f32 %v378, %v355
  %v398 = vmul.f32 %v380, %v356
  %v399 = vmul.f32 %v383, %v357
  %v400 = vmul.f32 %v385, %v358
  %v401 = vmul.f32 %v388, %v359
  %v402 = vmul.f32 %v390, %v360
  %v403 = vmul.f32 %v393, %v361
  %v404 = vmul.f32 %v395, %v362
  %v405 = vpack.c.bf16 %v397, %v397
  %v406 = vpack.c.bf16 %v398, %v398
  %v407 = vpack.c.bf16 %v399, %v399
  %v408 = vpack.c.bf16 %v400, %v400
  %v409 = vpack.c.bf16 %v401, %v401
  %v410 = vpack.c.bf16 %v402, %v402
  %v411 = vpack.c.bf16 %v403, %v403
  %v412 = vpack.c.bf16 %v404, %v404
  %vm413 = vcmask 519168
  %414 = vst.msk [vmem:[%s15] sm:$0xf] %vm413, %v405
  %415 = vst.msk [vmem:[%s15 + $0x4] sm:$0xf] %vm413, %v406
  %416 = vst.msk [vmem:[%s15 + $0x8] sm:$0xf] %vm413, %v407
  %417 = vst.msk [vmem:[%s15 + $0xc] sm:$0xf] %vm413, %v408
  %418 = vst.msk [vmem:[%s15 + $0x10] sm:$0xf] %vm413, %v409
  %419 = vst.msk [vmem:[%s15 + $0x14] sm:$0xf] %vm413, %v410
  %420 = vst.msk [vmem:[%s15 + $0x18] sm:$0xf] %vm413, %v411
  %421 = vst.msk [vmem:[%s15 + $0x1c] sm:$0xf] %vm413, %v412
  %v422 = vld [vmem:[%s8] sm:$0x3f]
  %v423 = vpack.c.bf16 %v422, %v422
  %v425 = vsel %vm95, %v423, 0
  %427 = vmatpush.bf16.msra.mxu0 0
  %428 = vmatpush.bf16.msra.mxu0 0
  %429 = vmatpush.bf16.msra.mxu0 0
  %430 = vmatpush.bf16.msra.mxu0 0
  %431 = vmatpush.bf16.msra.mxu0 0
  %432 = vmatpush.bf16.msra.mxu0 0
  %433 = vmatpush.bf16.msra.mxu0 0
  %434 = vmatpush.bf16.msra.mxu0 %v425
  %435 = vmatmul.bf16.gmra.mxu0 %v84
  %v436 = vpop.f32.mrf.mxu0
  %v437 = vadd.f32 0.0, %v436
  %v438 = vpop.f32.mrf.mxu0
  %v439 = vadd.f32 0.0, %v438
  %440 = vmatmul.bf16.gmra.mxu0 %v87
  %v441 = vpop.f32.mrf.mxu0
  %v442 = vadd.f32 0.0, %v441
  %v443 = vpop.f32.mrf.mxu0
  %v444 = vadd.f32 0.0, %v443
  %445 = vmatmul.bf16.gmra.mxu0 %v90
  %v446 = vpop.f32.mrf.mxu0
  %v447 = vadd.f32 0.0, %v446
  %v448 = vpop.f32.mrf.mxu0
  %v449 = vadd.f32 0.0, %v448
  %450 = vmatmul.bf16.gmra.mxu0 %v93
  %v451 = vpop.f32.mrf.mxu0
  %v452 = vadd.f32 0.0, %v451
  %v453 = vpop.f32.mrf.mxu0
  %v454 = vadd.f32 0.0, %v453
  %455 = vdwg.mxu0
  %v456 = vld [vmem:[%s9] sm:$0xff]
  %v457 = vpack.c.bf16 %v439, %v437
  %v458 = vpack.c.bf16 %v444, %v442
  %v459 = vpack.c.bf16 %v449, %v447
  %v460 = vpack.c.bf16 %v454, %v452
  %v461 = vpack.c.bf16 %v456, %v456
  %vm462 = vcmask 64512
  %v464 = vsel %vm462, %v457, 0
  %v467 = vsel %vm462, %v458, 0
  %v470 = vsel %vm462, %v459, 0
  %v473 = vsel %vm462, %v460, 0
  %vm475 = vcmask 1043456
  %v477 = vsel %vm475, %v461, 0
  %479 = vmatpush.bf16.msra.mxu0 0
  %480 = vmatpush.bf16.msra.mxu0 0
  %481 = vmatpush.bf16.msra.mxu0 0
  %482 = vmatpush.bf16.msra.mxu0 0
  %483 = vmatpush.bf16.msra.mxu0 0
  %484 = vmatpush.bf16.msra.mxu0 0
  %485 = vmatpush.bf16.msra.mxu0 0
  %486 = vmatpush.bf16.msra.mxu0 %v477
  %487 = vmatmul.bf16.gmra.mxu0 %v464
  %v488 = vpop.f32.mrf.mxu0
  %v489 = vadd.f32 0.0, %v488
  %v490 = vpop.f32.mrf.mxu0
  %v491 = vadd.f32 0.0, %v490
  %492 = vmatmul.bf16.gmra.mxu0 %v467
  %v493 = vpop.f32.mrf.mxu0
  %v494 = vadd.f32 0.0, %v493
  %v495 = vpop.f32.mrf.mxu0
  %v496 = vadd.f32 0.0, %v495
  %497 = vmatmul.bf16.gmra.mxu0 %v470
  %v498 = vpop.f32.mrf.mxu0
  %v499 = vadd.f32 0.0, %v498
  %v500 = vpop.f32.mrf.mxu0
  %v501 = vadd.f32 0.0, %v500
  %502 = vmatmul.bf16.gmra.mxu0 %v473
  %v503 = vpop.f32.mrf.mxu0
  %v504 = vadd.f32 0.0, %v503
  %v505 = vpop.f32.mrf.mxu0
  %v506 = vadd.f32 0.0, %v505
  %507 = vdwg.mxu0
  %v508 = vld [vmem:[%s10] sm:$0xff]
  %v509 = vld [vmem:[%s10 + $0x8] sm:$0xff]
  %v510 = vld [vmem:[%s10 + $0x10] sm:$0xff]
  %v511 = vld [vmem:[%s10 + $0x18] sm:$0xff]
  %v512 = vld [vmem:[%s10 + $0x20] sm:$0xff]
  %v513 = vld [vmem:[%s10 + $0x28] sm:$0xff]
  %v514 = vld [vmem:[%s10 + $0x30] sm:$0xff]
  %v515 = vld [vmem:[%s10 + $0x38] sm:$0xff]
  %v516 = vpack.c.bf16 %v356, %v355
  %v517 = vpack.c.bf16 %v358, %v357
  %v518 = vpack.c.bf16 %v360, %v359
  %v519 = vpack.c.bf16 %v362, %v361
  %v520 = vpack.c.bf16 %v509, %v508
  %v521 = vpack.c.bf16 %v511, %v510
  %v522 = vpack.c.bf16 %v513, %v512
  %v523 = vpack.c.bf16 %v515, %v514
  %v524 = vld [vmem:[%s11] sm:$0x1]
  %v526 = vperm.slane %v524, 0
  %v529 = vsel %vm216, %v516, 0
  %v532 = vsel %vm216, %v517, 0
  %v535 = vsel %vm216, %v518, 0
  %v538 = vsel %vm216, %v519, 0
  %540 = vmatpush.bf16.msra.mxu0 0
  %541 = vmatpush.bf16.msra.mxu0 0
  %542 = vmatpush.bf16.msra.mxu0 0
  %543 = vmatpush.bf16.msra.mxu0 0
  %544 = vmatpush.bf16.msra.mxu0 %v523
  %545 = vmatpush.bf16.msra.mxu0 %v522
  %546 = vmatpush.bf16.msra.mxu0 %v521
  %547 = vmatpush.bf16.msra.mxu0 %v520
  %548 = vmatmul.bf16.gmra.mxu0 %v529
  %v549 = vpop.f32.mrf.mxu0
  %v550 = vadd.f32 %v526, %v549
  %v551 = vpop.f32.mrf.mxu0
  %v552 = vadd.f32 %v526, %v551
  %553 = vmatmul.bf16.gmra.mxu0 %v532
  %v554 = vpop.f32.mrf.mxu0
  %v555 = vadd.f32 %v526, %v554
  %v556 = vpop.f32.mrf.mxu0
  %v557 = vadd.f32 %v526, %v556
  %558 = vmatmul.bf16.gmra.mxu0 %v535
  %v559 = vpop.f32.mrf.mxu0
  %v560 = vadd.f32 %v526, %v559
  %v561 = vpop.f32.mrf.mxu0
  %v562 = vadd.f32 %v526, %v561
  %563 = vmatmul.bf16.gmra.mxu0 %v538
  %v564 = vpop.f32.mrf.mxu0
  %v565 = vadd.f32 %v526, %v564
  %v566 = vpop.f32.mrf.mxu0
  %v567 = vadd.f32 %v526, %v566
  %568 = vdwg.mxu0
  %v569 = vmul.f32 %v550, 0.5
  %v570 = vmul.f32 %v552, 0.5
  %v571 = vmul.f32 %v555, 0.5
  %v572 = vmul.f32 %v557, 0.5
  %v573 = vmul.f32 %v560, 0.5
  %v574 = vmul.f32 %v562, 0.5
  %v575 = vmul.f32 %v565, 0.5
  %v576 = vmul.f32 %v567, 0.5
  %v577 = vtanh.pop %v569
  %v578 = vtanh.pop %v570
  %v579 = vtanh.pop %v571
  %v580 = vtanh.pop %v572
  %v581 = vtanh.pop %v573
  %v582 = vtanh.pop %v574
  %v583 = vtanh.pop %v575
  %v584 = vtanh.pop %v576
  %v585 = vmul.f32 %v577, 0.5
  %v586 = vmul.f32 %v578, 0.5
  %v587 = vmul.f32 %v579, 0.5
  %v588 = vmul.f32 %v580, 0.5
  %v589 = vmul.f32 %v581, 0.5
  %v590 = vmul.f32 %v582, 0.5
  %v591 = vmul.f32 %v583, 0.5
  %v592 = vmul.f32 %v584, 0.5
  %v593 = vadd.f32 %v585, 0.5
  %v594 = vadd.f32 %v586, 0.5
  %v595 = vadd.f32 %v587, 0.5
  %v596 = vadd.f32 %v588, 0.5
  %v597 = vadd.f32 %v589, 0.5
  %v598 = vadd.f32 %v590, 0.5
  %v599 = vadd.f32 %v591, 0.5
  %v600 = vadd.f32 %v592, 0.5
  %v601 = vmul.f32 %v550, %v593
  %v602 = vmul.f32 %v552, %v594
  %v603 = vmul.f32 %v555, %v595
  %v604 = vmul.f32 %v557, %v596
  %v605 = vmul.f32 %v560, %v597
  %v606 = vmul.f32 %v562, %v598
  %v607 = vmul.f32 %v565, %v599
  %v608 = vmul.f32 %v567, %v600
  %617 = vrot.lane.b32.xlu0 %v489, 64
  %v618 = vpop.permute.xlu0 %617
  %619 = vrot.lane.b32.xlu0 %v491, 64
  %v620 = vpop.permute.xlu0 %619
  %621 = vrot.lane.b32.xlu0 %v494, 64
  %v622 = vpop.permute.xlu0 %621
  %623 = vrot.lane.b32.xlu0 %v496, 64
  %v624 = vpop.permute.xlu0 %623
  %625 = vrot.lane.b32.xlu0 %v499, 64
  %v626 = vpop.permute.xlu0 %625
  %627 = vrot.lane.b32.xlu0 %v501, 64
  %v628 = vpop.permute.xlu0 %627
  %629 = vrot.lane.b32.xlu0 %v504, 64
  %v630 = vpop.permute.xlu0 %629
  %631 = vrot.lane.b32.xlu0 %v506, 64
  %v632 = vpop.permute.xlu0 %631
  %v641 = vmul.f32 %v601, %v618
  %v642 = vmul.f32 %v602, %v620
  %v643 = vmul.f32 %v603, %v622
  %v644 = vmul.f32 %v604, %v624
  %v645 = vmul.f32 %v605, %v626
  %v646 = vmul.f32 %v606, %v628
  %v647 = vmul.f32 %v607, %v630
  %v648 = vmul.f32 %v608, %v632
  %v649 = vld [vmem:[%s12] sm:$0xff]
  %v650 = vld [vmem:[%s12 + $0x8] sm:$0xff]
  %v651 = vld [vmem:[%s12 + $0x10] sm:$0xff]
  %v652 = vld [vmem:[%s12 + $0x18] sm:$0xff]
  %v653 = vld [vmem:[%s12 + $0x20] sm:$0xff]
  %v654 = vld [vmem:[%s12 + $0x28] sm:$0xff]
  %v655 = vld [vmem:[%s12 + $0x30] sm:$0xff]
  %v656 = vld [vmem:[%s12 + $0x38] sm:$0xff]
  %v657 = vpack.c.bf16 %v642, %v641
  %v658 = vpack.c.bf16 %v644, %v643
  %v659 = vpack.c.bf16 %v646, %v645
  %v660 = vpack.c.bf16 %v648, %v647
  %v661 = vpack.c.bf16 %v650, %v649
  %v662 = vpack.c.bf16 %v652, %v651
  %v663 = vpack.c.bf16 %v654, %v653
  %v664 = vpack.c.bf16 %v656, %v655
  %669 = vrot.lane.b32.xlu0 %v657, 64
  %v670 = vpop.permute.xlu0 %669
  %671 = vrot.lane.b32.xlu0 %v658, 64
  %v672 = vpop.permute.xlu0 %671
  %673 = vrot.lane.b32.xlu0 %v659, 64
  %v674 = vpop.permute.xlu0 %673
  %675 = vrot.lane.b32.xlu0 %v660, 64
  %v676 = vpop.permute.xlu0 %675
  %v678 = vsel %vm216, %v670, 0
  %v681 = vsel %vm216, %v672, 0
  %v684 = vsel %vm216, %v674, 0
  %v687 = vsel %vm216, %v676, 0
  %689 = vmatpush.bf16.msra.mxu0 0
  %690 = vmatpush.bf16.msra.mxu0 0
  %691 = vmatpush.bf16.msra.mxu0 0
  %692 = vmatpush.bf16.msra.mxu0 0
  %693 = vmatpush.bf16.msra.mxu0 %v664
  %694 = vmatpush.bf16.msra.mxu0 %v663
  %695 = vmatpush.bf16.msra.mxu0 %v662
  %696 = vmatpush.bf16.msra.mxu0 %v661
  %697 = vmatmul.bf16.gmra.mxu0 %v678
  %v698 = vpop.f32.mrf.mxu0
  %v699 = vadd.f32 0.0, %v698
  %v700 = vpop.f32.mrf.mxu0
  %v701 = vadd.f32 0.0, %v700
  %702 = vmatmul.bf16.gmra.mxu0 %v681
  %v703 = vpop.f32.mrf.mxu0
  %v704 = vadd.f32 0.0, %v703
  %v705 = vpop.f32.mrf.mxu0
  %v706 = vadd.f32 0.0, %v705
  %707 = vmatmul.bf16.gmra.mxu0 %v684
  %v708 = vpop.f32.mrf.mxu0
  %v709 = vadd.f32 0.0, %v708
  %v710 = vpop.f32.mrf.mxu0
  %v711 = vadd.f32 0.0, %v710
  %712 = vmatmul.bf16.gmra.mxu0 %v687
  %v713 = vpop.f32.mrf.mxu0
  %v714 = vadd.f32 0.0, %v713
  %v715 = vpop.f32.mrf.mxu0
  %v716 = vadd.f32 0.0, %v715
  %717 = vdwg.mxu0
  %v718 = vmul.f32 %v699, 0.5
  %v719 = vmul.f32 %v701, 0.5
  %v720 = vmul.f32 %v704, 0.5
  %v721 = vmul.f32 %v706, 0.5
  %v722 = vmul.f32 %v709, 0.5
  %v723 = vmul.f32 %v711, 0.5
  %v724 = vmul.f32 %v714, 0.5
  %v725 = vmul.f32 %v716, 0.5
  %v726 = vtanh.pop %v718
  %v727 = vtanh.pop %v719
  %v728 = vtanh.pop %v720
  %v729 = vtanh.pop %v721
  %v730 = vtanh.pop %v722
  %v731 = vtanh.pop %v723
  %v732 = vtanh.pop %v724
  %v733 = vtanh.pop %v725
  %v734 = vmul.f32 %v726, 0.5
  %v735 = vmul.f32 %v727, 0.5
  %v736 = vmul.f32 %v728, 0.5
  %v737 = vmul.f32 %v729, 0.5
  %v738 = vmul.f32 %v730, 0.5
  %v739 = vmul.f32 %v731, 0.5
  %v740 = vmul.f32 %v732, 0.5
  %v741 = vmul.f32 %v733, 0.5
  %v742 = vadd.f32 %v734, 0.5
  %v743 = vadd.f32 %v735, 0.5
  %v744 = vadd.f32 %v736, 0.5
  %v745 = vadd.f32 %v737, 0.5
  %v746 = vadd.f32 %v738, 0.5
  %v747 = vadd.f32 %v739, 0.5
  %v748 = vadd.f32 %v740, 0.5
  %v749 = vadd.f32 %v741, 0.5
  %v750 = vmul.f32 %v699, %v742
  %v751 = vmul.f32 %v701, %v743
  %v752 = vmul.f32 %v704, %v744
  %v753 = vmul.f32 %v706, %v745
  %v754 = vmul.f32 %v709, %v746
  %v755 = vmul.f32 %v711, %v747
  %v756 = vmul.f32 %v714, %v748
  %v757 = vmul.f32 %v716, %v749
  %v758 = vpack.c.bf16 %v750, %v750
  %v759 = vpack.c.bf16 %v751, %v751
  %v760 = vpack.c.bf16 %v752, %v752
  %v761 = vpack.c.bf16 %v753, %v753
  %v762 = vpack.c.bf16 %v754, %v754
  %v763 = vpack.c.bf16 %v755, %v755
  %v764 = vpack.c.bf16 %v756, %v756
  %v765 = vpack.c.bf16 %v757, %v757
  %vm766 = vcmask 257024
  %767 = vst.msk [vmem:[%s14] sm:$0xf] %vm766, %v758
  %768 = vst.msk [vmem:[%s14 + $0x4] sm:$0xf] %vm766, %v759
  %769 = vst.msk [vmem:[%s14 + $0x8] sm:$0xf] %vm766, %v760
  %770 = vst.msk [vmem:[%s14 + $0xc] sm:$0xf] %vm766, %v761
  %771 = vst.msk [vmem:[%s14 + $0x10] sm:$0xf] %vm766, %v762
  %772 = vst.msk [vmem:[%s14 + $0x14] sm:$0xf] %vm766, %v763
  %773 = vst.msk [vmem:[%s14 + $0x18] sm:$0xf] %vm766, %v764
  %774 = vst.msk [vmem:[%s14 + $0x1c] sm:$0xf] %vm766, %v765
  %783 = vrot.lane.b32.xlu0 %v601, 64
  %v784 = vpop.permute.xlu0 %783
  %785 = vrot.lane.b32.xlu0 %v602, 64
  %v786 = vpop.permute.xlu0 %785
  %787 = vrot.lane.b32.xlu0 %v603, 64
  %v788 = vpop.permute.xlu0 %787
  %789 = vrot.lane.b32.xlu0 %v604, 64
  %v790 = vpop.permute.xlu0 %789
  %791 = vrot.lane.b32.xlu0 %v605, 64
  %v792 = vpop.permute.xlu0 %791
  %793 = vrot.lane.b32.xlu0 %v606, 64
  %v794 = vpop.permute.xlu0 %793
  %795 = vrot.lane.b32.xlu0 %v607, 64
  %v796 = vpop.permute.xlu0 %795
  %797 = vrot.lane.b32.xlu0 %v608, 64
  %v798 = vpop.permute.xlu0 %797
  %v807 = vsel %vm216, %v355, %v784
  %v808 = vsel %vm216, %v356, %v786
  %v809 = vsel %vm216, %v357, %v788
  %v810 = vsel %vm216, %v358, %v790
  %v811 = vsel %vm216, %v359, %v792
  %v812 = vsel %vm216, %v360, %v794
  %v813 = vsel %vm216, %v361, %v796
  %v814 = vsel %vm216, %v362, %v798
  %v815 = vpack.c.bf16 %v807, %v807
  %v816 = vpack.c.bf16 %v808, %v808
  %v817 = vpack.c.bf16 %v809, %v809
  %v818 = vpack.c.bf16 %v810, %v810
  %v819 = vpack.c.bf16 %v811, %v811
  %v820 = vpack.c.bf16 %v812, %v812
  %v821 = vpack.c.bf16 %v813, %v813
  %v822 = vpack.c.bf16 %v814, %v814
  %823 = vst [vmem:[%s13] sm:$0xf] %v815
  %824 = vst [vmem:[%s13 + $0x4] sm:$0xf] %v816
  %825 = vst [vmem:[%s13 + $0x8] sm:$0xf] %v817
  %826 = vst [vmem:[%s13 + $0xc] sm:$0xf] %v818
  %827 = vst [vmem:[%s13 + $0x10] sm:$0xf] %v819
  %828 = vst [vmem:[%s13 + $0x14] sm:$0xf] %v820
  %829 = vst [vmem:[%s13 + $0x18] sm:$0xf] %v821
  %830 = vst [vmem:[%s13 + $0x1c] sm:$0xf] %v822
  // Predicated region
  $region54: #{_lambda_.6} parent=0 // pred_check
    _
  $region55: #{_lambda_.6} parent=0 // pred_check_branch
    %832 = sbr.rel (0) target = $region57
  $region56: #{_lambda_.6} parent=0 // pred_region
    _
  $region57: #{_lambda_.6} parent=0 // pred_fallthru
    _
  // Predicated region
  $region58: #{_lambda_.6} parent=0 // pred_check
    _
  $region59: #{_lambda_.6} parent=0 // pred_check_branch
    %834 = sbr.rel (0) target = $region61
  $region60: #{_lambda_.6} parent=0 // pred_region
    _
  $region61: #{_lambda_.6} parent=0 // pred_fallthru
    _
  // Predicated region
  $region62: #{_lambda_.6} parent=0 // pred_check
    _
  $region63: #{_lambda_.6} parent=0 // pred_check_branch
    %836 = sbr.rel (0) target = $region65
  $region64: #{_lambda_.6} parent=0 // pred_region
    _
  $region65: #{_lambda_.6} parent=0 // pred_fallthru
    _
  // Predicated region
  $region66: #{_lambda_.6} parent=0 // pred_check
    _
  $region67: #{_lambda_.6} parent=0 // pred_check_branch
    %838 = sbr.rel (0) target = $region69
  $region68: #{_lambda_.6} parent=0 // pred_region
    _
  $region69: #{_lambda_.6} parent=0 // pred_fallthru
    _
  // Predicated region
  $region70: #{_lambda_.6} parent=0 // pred_check
    _
  $region71: #{_lambda_.6} parent=0 // pred_check_branch
    %840 = sbr.rel (0) target = $region73
  $region72: #{_lambda_.6} parent=0 // pred_region
    _
  $region73: #{_lambda_.6} parent=0 // pred_fallthru
    _
  // Predicated region
  $region74: #{_lambda_.6} parent=0 // pred_check
    _
  $region75: #{_lambda_.6} parent=0 // pred_check_branch
    %842 = sbr.rel (0) target = $region77
  $region76: #{_lambda_.6} parent=0 // pred_region
    _
  $region77: #{_lambda_.6} parent=0 // pred_fallthru
    _

// kernel: _lambda_.5
$region0: #{_lambda_.5}
  #allocation0 [shape = 'u32[]', space=smem, size = 0x4, offset = 0x4, fixed_abs, tag = 'smem constant byte address 0x4 - core index']
  #allocation1 [shape = 'u32[72,128]{1,0:T(1,128)}', space=vmem, size = 0x9000, scoped, tag = 'internal scratch']
  %s0 = inlined_call_operand.vmem [shape: bf16[128,42], index: 0, kind: input, shape index: {}]
  %s1 = inlined_call_operand.vmem [shape: f32[42,16], index: 1, kind: input, shape index: {}]
  %s2 = inlined_call_operand.vmem [shape: f32[16,64], index: 2, kind: input, shape index: {}]
  %s3 = inlined_call_operand.vmem [shape: bf16[128,64], index: 3, kind: output, shape index: {}]
  %s4 = sld [smem:[#allocation0]]
  $region22: #{_lambda_.5} parent=0
    _
  %s6 = ssub.s32 1, %s4
  %s7 = scalar_select 0, %s6, %s4
  // Predicated region
  $region2: #{_lambda_.5} parent=0 // pred_check
    _
  $region3: #{_lambda_.5} parent=0 // pred_check_branch
    %9 = sbr.rel (0) target = $region5
  $region4: #{_lambda_.5} parent=0 // pred_region
    _
  $region5: #{_lambda_.5} parent=0 // pred_fallthru
    _
  // Predicated region
  $region6: #{_lambda_.5} parent=0 // pred_check
    _
  $region7: #{_lambda_.5} parent=0 // pred_check_branch
    %11 = sbr.rel (0) target = $region9
  $region8: #{_lambda_.5} parent=0 // pred_region
    _
  $region9: #{_lambda_.5} parent=0 // pred_fallthru
    _
  // Predicated region
  $region10: #{_lambda_.5} parent=0 // pred_check
    _
  $region11: #{_lambda_.5} parent=0 // pred_check_branch
    %13 = sbr.rel (0) target = $region13
  $region12: #{_lambda_.5} parent=0 // pred_region
    _
  $region13: #{_lambda_.5} parent=0 // pred_fallthru
    _
  %v15 = vld [vmem:[%s0] sm:$0xf]
  %v16 = vld [vmem:[%s0 + $0x4] sm:$0xf]
  %v17 = vld [vmem:[%s0 + $0x8] sm:$0xf]
  %v18 = vld [vmem:[%s0 + $0xc] sm:$0xf]
  %v19 = vld [vmem:[%s0 + $0x10] sm:$0xf]
  %v20 = vld [vmem:[%s0 + $0x14] sm:$0xf]
  %v21 = vld [vmem:[%s0 + $0x18] sm:$0xf]
  %v22 = vld [vmem:[%s0 + $0x1c] sm:$0xf]
  %v23 = vld [vmem:[%s0 + $0x20] sm:$0xf]
  %v24 = vld [vmem:[%s0 + $0x24] sm:$0xf]
  %v25 = vld [vmem:[%s0 + $0x28] sm:$0xf]
  %v26 = vld [vmem:[%s0 + $0x2c] sm:$0xf]
  %v27 = vld [vmem:[%s0 + $0x30] sm:$0xf]
  %v28 = vld [vmem:[%s0 + $0x34] sm:$0xf]
  %v29 = vld [vmem:[%s0 + $0x38] sm:$0xf]
  %v30 = vld [vmem:[%s0 + $0x3c] sm:$0xf]
  %v31 = vld [vmem:[%s1] sm:$0xff]
  %v32 = vld [vmem:[%s1 + $0x8] sm:$0xff]
  %v33 = vld [vmem:[%s1 + $0x10] sm:$0xff]
  %v34 = vld [vmem:[%s1 + $0x18] sm:$0xff]
  %v35 = vld [vmem:[%s1 + $0x20] sm:$0xff]
  %v36 = vld [vmem:[%s1 + $0x28] sm:$0x3]
  %v37 = vpack.c.bf16 %v32, %v31
  %v38 = vpack.c.bf16 %v34, %v33
  %v39 = vpack.c.bf16 %v36, %v35
  %v56 = vunpack.c.l.b16 %v15
  %v57 = vunpack.c.l.b16 %v16
  %v58 = vunpack.c.l.b16 %v17
  %v59 = vunpack.c.l.b16 %v18
  %v60 = vunpack.c.l.b16 %v19
  %v61 = vunpack.c.l.b16 %v20
  %v62 = vunpack.c.l.b16 %v21
  %v63 = vunpack.c.l.b16 %v22
  %v64 = vunpack.c.l.b16 %v23
  %v65 = vunpack.c.l.b16 %v24
  %v66 = vunpack.c.l.b16 %v25
  %v67 = vunpack.c.l.b16 %v26
  %v68 = vunpack.c.l.b16 %v27
  %v69 = vunpack.c.l.b16 %v28
  %v70 = vunpack.c.l.b16 %v29
  %v71 = vunpack.c.l.b16 %v30
  %v72 = vpack.c.b16 %v57, %v56
  %v73 = vpack.c.b16 %v59, %v58
  %v74 = vpack.c.b16 %v61, %v60
  %v75 = vpack.c.b16 %v63, %v62
  %v76 = vpack.c.b16 %v65, %v64
  %v77 = vpack.c.b16 %v67, %v66
  %v78 = vpack.c.b16 %v69, %v68
  %v79 = vpack.c.b16 %v71, %v70
  %vm80 = vcmask 343040
  %v82 = vsel %vm80, %v72, 0
  %v85 = vsel %vm80, %v73, 0
  %v88 = vsel %vm80, %v74, 0
  %v91 = vsel %vm80, %v75, 0
  %v94 = vsel %vm80, %v76, 0
  %v97 = vsel %vm80, %v77, 0
  %v100 = vsel %vm80, %v78, 0
  %v103 = vsel %vm80, %v79, 0
  %vm105 = vcmask 1044480
  %v107 = vsel %vm105, %v39, 0
  %109 = vmatpush.bf16.msra.mxu0 0
  %110 = vmatpush.bf16.msra.mxu0 0
  %111 = vmatpush.bf16.msra.mxu0 0
  %112 = vmatpush.bf16.msra.mxu0 0
  %113 = vmatpush.bf16.msra.mxu0 0
  %114 = vmatpush.bf16.msra.mxu0 %v107
  %115 = vmatpush.bf16.msra.mxu0 %v38
  %116 = vmatpush.bf16.msra.mxu0 %v37
  %117 = vmatmul.bf16.gmra.mxu0 %v82
  %v118 = vpop.f32.mrf.mxu0
  %v119 = vadd.f32 0.0, %v118
  %v120 = vpop.f32.mrf.mxu0
  %v121 = vadd.f32 0.0, %v120
  %122 = vmatmul.bf16.gmra.mxu0 %v85
  %v123 = vpop.f32.mrf.mxu0
  %v124 = vadd.f32 0.0, %v123
  %v125 = vpop.f32.mrf.mxu0
  %v126 = vadd.f32 0.0, %v125
  %127 = vmatmul.bf16.gmra.mxu0 %v88
  %v128 = vpop.f32.mrf.mxu0
  %v129 = vadd.f32 0.0, %v128
  %v130 = vpop.f32.mrf.mxu0
  %v131 = vadd.f32 0.0, %v130
  %132 = vmatmul.bf16.gmra.mxu0 %v91
  %v133 = vpop.f32.mrf.mxu0
  %v134 = vadd.f32 0.0, %v133
  %v135 = vpop.f32.mrf.mxu0
  %v136 = vadd.f32 0.0, %v135
  %137 = vmatmul.bf16.gmra.mxu0 %v94
  %v138 = vpop.f32.mrf.mxu0
  %v139 = vadd.f32 0.0, %v138
  %v140 = vpop.f32.mrf.mxu0
  %v141 = vadd.f32 0.0, %v140
  %142 = vmatmul.bf16.gmra.mxu0 %v97
  %v143 = vpop.f32.mrf.mxu0
  %v144 = vadd.f32 0.0, %v143
  %v145 = vpop.f32.mrf.mxu0
  %v146 = vadd.f32 0.0, %v145
  %147 = vmatmul.bf16.gmra.mxu0 %v100
  %v148 = vpop.f32.mrf.mxu0
  %v149 = vadd.f32 0.0, %v148
  %v150 = vpop.f32.mrf.mxu0
  %v151 = vadd.f32 0.0, %v150
  %152 = vmatmul.bf16.gmra.mxu0 %v103
  %v153 = vpop.f32.mrf.mxu0
  %v154 = vadd.f32 0.0, %v153
  %v155 = vpop.f32.mrf.mxu0
  %v156 = vadd.f32 0.0, %v155
  %157 = vdwg.mxu0
  %v158 = vld [vmem:[%s2] sm:$0xff]
  %v159 = vld [vmem:[%s2 + $0x8] sm:$0xff]
  %v160 = vpack.c.bf16 %v121, %v119
  %v161 = vpack.c.bf16 %v126, %v124
  %v162 = vpack.c.bf16 %v131, %v129
  %v163 = vpack.c.bf16 %v136, %v134
  %v164 = vpack.c.bf16 %v141, %v139
  %v165 = vpack.c.bf16 %v146, %v144
  %v166 = vpack.c.bf16 %v151, %v149
  %v167 = vpack.c.bf16 %v156, %v154
  %v168 = vpack.c.bf16 %v159, %v158
  %vm169 = vcmask 130048
  %v171 = vsel %vm169, %v160, 0
  %v174 = vsel %vm169, %v161, 0
  %v177 = vsel %vm169, %v162, 0
  %v180 = vsel %vm169, %v163, 0
  %v183 = vsel %vm169, %v164, 0
  %v186 = vsel %vm169, %v165, 0
  %v189 = vsel %vm169, %v166, 0
  %v192 = vsel %vm169, %v167, 0
  %194 = vmatpush.bf16.msra.mxu0 0
  %195 = vmatpush.bf16.msra.mxu0 0
  %196 = vmatpush.bf16.msra.mxu0 0
  %197 = vmatpush.bf16.msra.mxu0 0
  %198 = vmatpush.bf16.msra.mxu0 0
  %199 = vmatpush.bf16.msra.mxu0 0
  %200 = vmatpush.bf16.msra.mxu0 0
  %201 = vmatpush.bf16.msra.mxu0 %v168
  %202 = vmatmul.bf16.gmra.mxu0 %v171
  %v203 = vpop.f32.mrf.mxu0
  %v204 = vadd.f32 0.0, %v203
  %v205 = vpop.f32.mrf.mxu0
  %v206 = vadd.f32 0.0, %v205
  %207 = vmatmul.bf16.gmra.mxu0 %v174
  %v208 = vpop.f32.mrf.mxu0
  %v209 = vadd.f32 0.0, %v208
  %v210 = vpop.f32.mrf.mxu0
  %v211 = vadd.f32 0.0, %v210
  %212 = vmatmul.bf16.gmra.mxu0 %v177
  %v213 = vpop.f32.mrf.mxu0
  %v214 = vadd.f32 0.0, %v213
  %v215 = vpop.f32.mrf.mxu0
  %v216 = vadd.f32 0.0, %v215
  %217 = vmatmul.bf16.gmra.mxu0 %v180
  %v218 = vpop.f32.mrf.mxu0
  %v219 = vadd.f32 0.0, %v218
  %v220 = vpop.f32.mrf.mxu0
  %v221 = vadd.f32 0.0, %v220
  %222 = vmatmul.bf16.gmra.mxu0 %v183
  %v223 = vpop.f32.mrf.mxu0
  %v224 = vadd.f32 0.0, %v223
  %v225 = vpop.f32.mrf.mxu0
  %v226 = vadd.f32 0.0, %v225
  %227 = vmatmul.bf16.gmra.mxu0 %v186
  %v228 = vpop.f32.mrf.mxu0
  %v229 = vadd.f32 0.0, %v228
  %v230 = vpop.f32.mrf.mxu0
  %v231 = vadd.f32 0.0, %v230
  %232 = vmatmul.bf16.gmra.mxu0 %v189
  %v233 = vpop.f32.mrf.mxu0
  %v234 = vadd.f32 0.0, %v233
  %v235 = vpop.f32.mrf.mxu0
  %v236 = vadd.f32 0.0, %v235
  %237 = vmatmul.bf16.gmra.mxu0 %v192
  %v238 = vpop.f32.mrf.mxu0
  %v239 = vadd.f32 0.0, %v238
  %v240 = vpop.f32.mrf.mxu0
  %v241 = vadd.f32 0.0, %v240
  %242 = vdwg.mxu0
  %v243 = vpack.c.bf16 %v204, %v204
  %v244 = vpack.c.bf16 %v206, %v206
  %v245 = vpack.c.bf16 %v209, %v209
  %v246 = vpack.c.bf16 %v211, %v211
  %v247 = vpack.c.bf16 %v214, %v214
  %v248 = vpack.c.bf16 %v216, %v216
  %v249 = vpack.c.bf16 %v219, %v219
  %v250 = vpack.c.bf16 %v221, %v221
  %v251 = vpack.c.bf16 %v224, %v224
  %v252 = vpack.c.bf16 %v226, %v226
  %v253 = vpack.c.bf16 %v229, %v229
  %v254 = vpack.c.bf16 %v231, %v231
  %v255 = vpack.c.bf16 %v234, %v234
  %v256 = vpack.c.bf16 %v236, %v236
  %v257 = vpack.c.bf16 %v239, %v239
  %v258 = vpack.c.bf16 %v241, %v241
  %vm259 = vcmask 519168
  %260 = vst.msk [vmem:[%s3] sm:$0xf] %vm259, %v243
  %261 = vst.msk [vmem:[%s3 + $0x4] sm:$0xf] %vm259, %v244
  %262 = vst.msk [vmem:[%s3 + $0x8] sm:$0xf] %vm259, %v245
  %263 = vst.msk [vmem:[%s3 + $0xc] sm:$0xf] %vm259, %v246
  %264 = vst.msk [vmem:[%s3 + $0x10] sm:$0xf] %vm259, %v247
  %265 = vst.msk [vmem:[%s3 + $0x14] sm:$0xf] %vm259, %v248
  %266 = vst.msk [vmem:[%s3 + $0x18] sm:$0xf] %vm259, %v249
  %267 = vst.msk [vmem:[%s3 + $0x1c] sm:$0xf] %vm259, %v250
  %268 = vst.msk [vmem:[%s3 + $0x20] sm:$0xf] %vm259, %v251
  %269 = vst.msk [vmem:[%s3 + $0x24] sm:$0xf] %vm259, %v252
  %270 = vst.msk [vmem:[%s3 + $0x28] sm:$0xf] %vm259, %v253
  %271 = vst.msk [vmem:[%s3 + $0x2c] sm:$0xf] %vm259, %v254
  %272 = vst.msk [vmem:[%s3 + $0x30] sm:$0xf] %vm259, %v255
  %273 = vst.msk [vmem:[%s3 + $0x34] sm:$0xf] %vm259, %v256
  %274 = vst.msk [vmem:[%s3 + $0x38] sm:$0xf] %vm259, %v257
  %275 = vst.msk [vmem:[%s3 + $0x3c] sm:$0xf] %vm259, %v258
  // Predicated region
  $region14: #{_lambda_.5} parent=0 // pred_check
    _
  $region15: #{_lambda_.5} parent=0 // pred_check_branch
    %277 = sbr.rel (0) target = $region17
  $region16: #{_lambda_.5} parent=0 // pred_region
    _
  $region17: #{_lambda_.5} parent=0 // pred_fallthru
    _
  // Predicated region
  $region18: #{_lambda_.5} parent=0 // pred_check
    _
  $region19: #{_lambda_.5} parent=0 // pred_check_branch
    %279 = sbr.rel (0) target = $region21
  $region20: #{_lambda_.5} parent=0 // pred_region
    _
  $region21: #{_lambda_.5} parent=0 // pred_fallthru
    _

// kernel: _lambda_.7
$region0: #{_lambda_.7}
  #allocation0 [shape = 'u32[]', space=smem, size = 0x4, offset = 0x4, fixed_abs, tag = 'smem constant byte address 0x4 - core index']
  #allocation1 [shape = 'u32[72,128]{1,0:T(1,128)}', space=vmem, size = 0x9000, scoped, tag = 'internal scratch']
  %s0 = inlined_call_operand.vmem [shape: bf16[64,128], index: 0, kind: input, shape index: {}]
  %s1 = inlined_call_operand.vmem [shape: bf16[64,32], index: 1, kind: input, shape index: {}]
  %s2 = inlined_call_operand.vmem [shape: bf16[64,6], index: 2, kind: input, shape index: {}]
  %s3 = inlined_call_operand.vmem [shape: f32[32,64], index: 3, kind: input, shape index: {}]
  %s4 = inlined_call_operand.vmem [shape: f32[64,64], index: 4, kind: input, shape index: {}]
  %s5 = inlined_call_operand.vmem [shape: f32[1,64], index: 5, kind: input, shape index: {}]
  %s6 = inlined_call_operand.vmem [shape: f32[64,64], index: 6, kind: input, shape index: {}]
  %s7 = inlined_call_operand.vmem [shape: f32[1,64], index: 7, kind: input, shape index: {}]
  %s8 = inlined_call_operand.vmem [shape: f32[64,64], index: 8, kind: input, shape index: {}]
  %s9 = inlined_call_operand.vmem [shape: f32[1,64], index: 9, kind: input, shape index: {}]
  %s10 = inlined_call_operand.vmem [shape: f32[64,64], index: 10, kind: input, shape index: {}]
  %s11 = inlined_call_operand.vmem [shape: f32[1,64], index: 11, kind: input, shape index: {}]
  %s12 = inlined_call_operand.vmem [shape: f32[64,64], index: 12, kind: input, shape index: {}]
  %s13 = inlined_call_operand.vmem [shape: f32[1,64], index: 13, kind: input, shape index: {}]
  %s14 = inlined_call_operand.vmem [shape: f32[64,64], index: 14, kind: input, shape index: {}]
  %s15 = inlined_call_operand.vmem [shape: f32[1,64], index: 15, kind: input, shape index: {}]
  %s16 = inlined_call_operand.vmem [shape: f32[64,64], index: 16, kind: input, shape index: {}]
  %s17 = inlined_call_operand.vmem [shape: f32[1,64], index: 17, kind: input, shape index: {}]
  %s18 = inlined_call_operand.vmem [shape: f32[6,64], index: 18, kind: input, shape index: {}]
  %s19 = inlined_call_operand.vmem [shape: f32[6,8], index: 19, kind: input, shape index: {}]
  %s20 = inlined_call_operand.vmem [shape: f32[8,64], index: 20, kind: input, shape index: {}]
  %s21 = inlined_call_operand.vmem [shape: f32[64,128], index: 21, kind: input, shape index: {}]
  %s22 = inlined_call_operand.vmem [shape: f32[1,128], index: 22, kind: input, shape index: {}]
  %s23 = inlined_call_operand.vmem [shape: f32[64,32], index: 23, kind: input, shape index: {}]
  %s24 = inlined_call_operand.vmem [shape: bf16[64,128], index: 24, kind: output, shape index: {0}]
  %s25 = inlined_call_operand.vmem [shape: bf16[64,32], index: 25, kind: output, shape index: {1}]
  %s26 = inlined_call_operand.vmem [shape: bf16[64,64], index: 26, kind: output, shape index: {2}]
  %27 = xla_tuple %s24, %s25, %s26
  %s28 = sld [smem:[#allocation0]]
  $region122: #{_lambda_.7} parent=0
    _
  %s30 = ssub.s32 1, %s28
  %s31 = scalar_select 0, %s30, %s28
  // Predicated region
  $region2: #{_lambda_.7} parent=0 // pred_check
    _
  $region3: #{_lambda_.7} parent=0 // pred_check_branch
    %33 = sbr.rel (0) target = $region5
  $region4: #{_lambda_.7} parent=0 // pred_region
    _
  $region5: #{_lambda_.7} parent=0 // pred_fallthru
    _
  // Predicated region
  $region6: #{_lambda_.7} parent=0 // pred_check
    _
  $region7: #{_lambda_.7} parent=0 // pred_check_branch
    %35 = sbr.rel (0) target = $region9
  $region8: #{_lambda_.7} parent=0 // pred_region
    _
  $region9: #{_lambda_.7} parent=0 // pred_fallthru
    _
  // Predicated region
  $region10: #{_lambda_.7} parent=0 // pred_check
    _
  $region11: #{_lambda_.7} parent=0 // pred_check_branch
    %37 = sbr.rel (0) target = $region13
  $region12: #{_lambda_.7} parent=0 // pred_region
    _
  $region13: #{_lambda_.7} parent=0 // pred_fallthru
    _
  // Predicated region
  $region14: #{_lambda_.7} parent=0 // pred_check
    _
  $region15: #{_lambda_.7} parent=0 // pred_check_branch
    %39 = sbr.rel (0) target = $region17
  $region16: #{_lambda_.7} parent=0 // pred_region
    _
  $region17: #{_lambda_.7} parent=0 // pred_fallthru
    _
  // Predicated region
  $region18: #{_lambda_.7} parent=0 // pred_check
    _
  $region19: #{_lambda_.7} parent=0 // pred_check_branch
    %41 = sbr.rel (0) target = $region21
  $region20: #{_lambda_.7} parent=0 // pred_region
    _
  $region21: #{_lambda_.7} parent=0 // pred_fallthru
    _
  // Predicated region
  $region22: #{_lambda_.7} parent=0 // pred_check
    _
  $region23: #{_lambda_.7} parent=0 // pred_check_branch
    %43 = sbr.rel (0) target = $region25
  $region24: #{_lambda_.7} parent=0 // pred_region
    _
  $region25: #{_lambda_.7} parent=0 // pred_fallthru
    _
  // Predicated region
  $region26: #{_lambda_.7} parent=0 // pred_check
    _
  $region27: #{_lambda_.7} parent=0 // pred_check_branch
    %45 = sbr.rel (0) target = $region29
  $region28: #{_lambda_.7} parent=0 // pred_region
    _
  $region29: #{_lambda_.7} parent=0 // pred_fallthru
    _
  // Predicated region
  $region30: #{_lambda_.7} parent=0 // pred_check
    _
  $region31: #{_lambda_.7} parent=0 // pred_check_branch
    %47 = sbr.rel (0) target = $region33
  $region32: #{_lambda_.7} parent=0 // pred_region
    _
  $region33: #{_lambda_.7} parent=0 // pred_fallthru
    _
  // Predicated region
  $region34: #{_lambda_.7} parent=0 // pred_check
    _
  $region35: #{_lambda_.7} parent=0 // pred_check_branch
    %49 = sbr.rel (0) target = $region37
  $region36: #{_lambda_.7} parent=0 // pred_region
    _
  $region37: #{_lambda_.7} parent=0 // pred_fallthru
    _
  // Predicated region
  $region38: #{_lambda_.7} parent=0 // pred_check
    _
  $region39: #{_lambda_.7} parent=0 // pred_check_branch
    %51 = sbr.rel (0) target = $region41
  $region40: #{_lambda_.7} parent=0 // pred_region
    _
  $region41: #{_lambda_.7} parent=0 // pred_fallthru
    _
  // Predicated region
  $region42: #{_lambda_.7} parent=0 // pred_check
    _
  $region43: #{_lambda_.7} parent=0 // pred_check_branch
    %53 = sbr.rel (0) target = $region45
  $region44: #{_lambda_.7} parent=0 // pred_region
    _
  $region45: #{_lambda_.7} parent=0 // pred_fallthru
    _
  // Predicated region
  $region46: #{_lambda_.7} parent=0 // pred_check
    _
  $region47: #{_lambda_.7} parent=0 // pred_check_branch
    %55 = sbr.rel (0) target = $region49
  $region48: #{_lambda_.7} parent=0 // pred_region
    _
  $region49: #{_lambda_.7} parent=0 // pred_fallthru
    _
  // Predicated region
  $region50: #{_lambda_.7} parent=0 // pred_check
    _
  $region51: #{_lambda_.7} parent=0 // pred_check_branch
    %57 = sbr.rel (0) target = $region53
  $region52: #{_lambda_.7} parent=0 // pred_region
    _
  $region53: #{_lambda_.7} parent=0 // pred_fallthru
    _
  // Predicated region
  $region54: #{_lambda_.7} parent=0 // pred_check
    _
  $region55: #{_lambda_.7} parent=0 // pred_check_branch
    %59 = sbr.rel (0) target = $region57
  $region56: #{_lambda_.7} parent=0 // pred_region
    _
  $region57: #{_lambda_.7} parent=0 // pred_fallthru
    _
  // Predicated region
  $region58: #{_lambda_.7} parent=0 // pred_check
    _
  $region59: #{_lambda_.7} parent=0 // pred_check_branch
    %61 = sbr.rel (0) target = $region61
  $region60: #{_lambda_.7} parent=0 // pred_region
    _
  $region61: #{_lambda_.7} parent=0 // pred_fallthru
    _
  // Predicated region
  $region62: #{_lambda_.7} parent=0 // pred_check
    _
  $region63: #{_lambda_.7} parent=0 // pred_check_branch
    %63 = sbr.rel (0) target = $region65
  $region64: #{_lambda_.7} parent=0 // pred_region
    _
  $region65: #{_lambda_.7} parent=0 // pred_fallthru
    _
  // Predicated region
  $region66: #{_lambda_.7} parent=0 // pred_check
    _
  $region67: #{_lambda_.7} parent=0 // pred_check_branch
    %65 = sbr.rel (0) target = $region69
  $region68: #{_lambda_.7} parent=0 // pred_region
    _
  $region69: #{_lambda_.7} parent=0 // pred_fallthru
    _
  // Predicated region
  $region70: #{_lambda_.7} parent=0 // pred_check
    _
  $region71: #{_lambda_.7} parent=0 // pred_check_branch
    %67 = sbr.rel (0) target = $region73
  $region72: #{_lambda_.7} parent=0 // pred_region
    _
  $region73: #{_lambda_.7} parent=0 // pred_fallthru
    _
  // Predicated region
  $region74: #{_lambda_.7} parent=0 // pred_check
    _
  $region75: #{_lambda_.7} parent=0 // pred_check_branch
    %69 = sbr.rel (0) target = $region77
  $region76: #{_lambda_.7} parent=0 // pred_region
    _
  $region77: #{_lambda_.7} parent=0 // pred_fallthru
    _
  // Predicated region
  $region78: #{_lambda_.7} parent=0 // pred_check
    _
  $region79: #{_lambda_.7} parent=0 // pred_check_branch
    %71 = sbr.rel (0) target = $region81
  $region80: #{_lambda_.7} parent=0 // pred_region
    _
  $region81: #{_lambda_.7} parent=0 // pred_fallthru
    _
  // Predicated region
  $region82: #{_lambda_.7} parent=0 // pred_check
    _
  $region83: #{_lambda_.7} parent=0 // pred_check_branch
    %73 = sbr.rel (0) target = $region85
  $region84: #{_lambda_.7} parent=0 // pred_region
    _
  $region85: #{_lambda_.7} parent=0 // pred_fallthru
    _
  // Predicated region
  $region86: #{_lambda_.7} parent=0 // pred_check
    _
  $region87: #{_lambda_.7} parent=0 // pred_check_branch
    %75 = sbr.rel (0) target = $region89
  $region88: #{_lambda_.7} parent=0 // pred_region
    _
  $region89: #{_lambda_.7} parent=0 // pred_fallthru
    _
  // Predicated region
  $region90: #{_lambda_.7} parent=0 // pred_check
    _
  $region91: #{_lambda_.7} parent=0 // pred_check_branch
    %77 = sbr.rel (0) target = $region93
  $region92: #{_lambda_.7} parent=0 // pred_region
    _
  $region93: #{_lambda_.7} parent=0 // pred_fallthru
    _
  // Predicated region
  $region94: #{_lambda_.7} parent=0 // pred_check
    _
  $region95: #{_lambda_.7} parent=0 // pred_check_branch
    %79 = sbr.rel (0) target = $region97
  $region96: #{_lambda_.7} parent=0 // pred_region
    _
  $region97: #{_lambda_.7} parent=0 // pred_fallthru
    _
  %v81 = vld [vmem:[%s0] sm:$0xf]
  %v82 = vld [vmem:[%s0 + $0x4] sm:$0xf]
  %v83 = vld [vmem:[%s0 + $0x8] sm:$0xf]
  %v84 = vld [vmem:[%s0 + $0xc] sm:$0xf]
  %v85 = vld [vmem:[%s0 + $0x10] sm:$0xf]
  %v86 = vld [vmem:[%s0 + $0x14] sm:$0xf]
  %v87 = vld [vmem:[%s0 + $0x18] sm:$0xf]
  %v88 = vld [vmem:[%s0 + $0x1c] sm:$0xf]
  %v89 = vunpack.c.l.bf16 %v81
  %v90 = vunpack.c.l.bf16 %v82
  %v91 = vunpack.c.l.bf16 %v83
  %v92 = vunpack.c.l.bf16 %v84
  %v93 = vunpack.c.l.bf16 %v85
  %v94 = vunpack.c.l.bf16 %v86
  %v95 = vunpack.c.l.bf16 %v87
  %v96 = vunpack.c.l.bf16 %v88
  %v97 = vld [vmem:[%s1] sm:$0xf]
  %v98 = vld [vmem:[%s1 + $0x4] sm:$0xf]
  %v99 = vld [vmem:[%s1 + $0x8] sm:$0xf]
  %v100 = vld [vmem:[%s1 + $0xc] sm:$0xf]
  %v101 = vld [vmem:[%s1 + $0x10] sm:$0xf]
  %v102 = vld [vmem:[%s1 + $0x14] sm:$0xf]
  %v103 = vld [vmem:[%s1 + $0x18] sm:$0xf]
  %v104 = vld [vmem:[%s1 + $0x1c] sm:$0xf]
  %v105 = vld [vmem:[%s3] sm:$0xff]
  %v106 = vld [vmem:[%s3 + $0x8] sm:$0xff]
  %v107 = vld [vmem:[%s3 + $0x10] sm:$0xff]
  %v108 = vld [vmem:[%s3 + $0x18] sm:$0xff]
  %v109 = vpack.c.bf16 %v106, %v105
  %v110 = vpack.c.bf16 %v108, %v107
  %v119 = vunpack.c.l.b16 %v97
  %v120 = vunpack.c.l.b16 %v98
  %v121 = vunpack.c.l.b16 %v99
  %v122 = vunpack.c.l.b16 %v100
  %v123 = vunpack.c.l.b16 %v101
  %v124 = vunpack.c.l.b16 %v102
  %v125 = vunpack.c.l.b16 %v103
  %v126 = vunpack.c.l.b16 %v104
  %v127 = vpack.c.b16 %v120, %v119
  %v128 = vpack.c.b16 %v122, %v121
  %v129 = vpack.c.b16 %v124, %v123
  %v130 = vpack.c.b16 %v126, %v125
  %vm131 = vcmask 261120
  %v133 = vsel %vm131, %v127, 0
  %v136 = vsel %vm131, %v128, 0
  %v139 = vsel %vm131, %v129, 0
  %v142 = vsel %vm131, %v130, 0
  %144 = vmatpush.bf16.msra.mxu0 0
  %145 = vmatpush.bf16.msra.mxu0 0
  %146 = vmatpush.bf16.msra.mxu0 0
  %147 = vmatpush.bf16.msra.mxu0 0
  %148 = vmatpush.bf16.msra.mxu0 0
  %149 = vmatpush.bf16.msra.mxu0 0
  %150 = vmatpush.bf16.msra.mxu0 %v110
  %151 = vmatpush.bf16.msra.mxu0 %v109
  %152 = vmatmul.bf16.gmra.mxu0 %v133
  %v153 = vpop.f32.mrf.mxu0
  %v154 = vadd.f32 0.0, %v153
  %v155 = vpop.f32.mrf.mxu0
  %v156 = vadd.f32 0.0, %v155
  %157 = vmatmul.bf16.gmra.mxu0 %v136
  %v158 = vpop.f32.mrf.mxu0
  %v159 = vadd.f32 0.0, %v158
  %v160 = vpop.f32.mrf.mxu0
  %v161 = vadd.f32 0.0, %v160
  %162 = vmatmul.bf16.gmra.mxu0 %v139
  %v163 = vpop.f32.mrf.mxu0
  %v164 = vadd.f32 0.0, %v163
  %v165 = vpop.f32.mrf.mxu0
  %v166 = vadd.f32 0.0, %v165
  %167 = vmatmul.bf16.gmra.mxu0 %v142
  %v168 = vpop.f32.mrf.mxu0
  %v169 = vadd.f32 0.0, %v168
  %v170 = vpop.f32.mrf.mxu0
  %v171 = vadd.f32 0.0, %v170
  %172 = vdwg.mxu0
  %v173 = vmul.f32 %v154, 0.5
  %v174 = vmul.f32 %v156, 0.5
  %v175 = vmul.f32 %v159, 0.5
  %v176 = vmul.f32 %v161, 0.5
  %v177 = vmul.f32 %v164, 0.5
  %v178 = vmul.f32 %v166, 0.5
  %v179 = vmul.f32 %v169, 0.5
  %v180 = vmul.f32 %v171, 0.5
  %v181 = vtanh.pop %v173
  %v182 = vtanh.pop %v174
  %v183 = vtanh.pop %v175
  %v184 = vtanh.pop %v176
  %v185 = vtanh.pop %v177
  %v186 = vtanh.pop %v178
  %v187 = vtanh.pop %v179
  %v188 = vtanh.pop %v180
  %v189 = vmul.f32 %v181, 0.5
  %v190 = vmul.f32 %v182, 0.5
  %v191 = vmul.f32 %v183, 0.5
  %v192 = vmul.f32 %v184, 0.5
  %v193 = vmul.f32 %v185, 0.5
  %v194 = vmul.f32 %v186, 0.5
  %v195 = vmul.f32 %v187, 0.5
  %v196 = vmul.f32 %v188, 0.5
  %v197 = vadd.f32 %v189, 0.5
  %v198 = vadd.f32 %v190, 0.5
  %v199 = vadd.f32 %v191, 0.5
  %v200 = vadd.f32 %v192, 0.5
  %v201 = vadd.f32 %v193, 0.5
  %v202 = vadd.f32 %v194, 0.5
  %v203 = vadd.f32 %v195, 0.5
  %v204 = vadd.f32 %v196, 0.5
  %v205 = vmul.f32 %v154, %v197
  %v206 = vmul.f32 %v156, %v198
  %v207 = vmul.f32 %v159, %v199
  %v208 = vmul.f32 %v161, %v200
  %v209 = vmul.f32 %v164, %v201
  %v210 = vmul.f32 %v166, %v202
  %v211 = vmul.f32 %v169, %v203
  %v212 = vmul.f32 %v171, %v204
  %221 = vrot.lane.b32.xlu0 %v205, 64
  %v222 = vpop.permute.xlu0 %221
  %223 = vrot.lane.b32.xlu0 %v206, 64
  %v224 = vpop.permute.xlu0 %223
  %225 = vrot.lane.b32.xlu0 %v207, 64
  %v226 = vpop.permute.xlu0 %225
  %227 = vrot.lane.b32.xlu0 %v208, 64
  %v228 = vpop.permute.xlu0 %227
  %229 = vrot.lane.b32.xlu0 %v209, 64
  %v230 = vpop.permute.xlu0 %229
  %231 = vrot.lane.b32.xlu0 %v210, 64
  %v232 = vpop.permute.xlu0 %231
  %233 = vrot.lane.b32.xlu0 %v211, 64
  %v234 = vpop.permute.xlu0 %233
  %235 = vrot.lane.b32.xlu0 %v212, 64
  %v236 = vpop.permute.xlu0 %235
  %v245 = vadd.f32 %v89, %v222
  %v246 = vadd.f32 %v90, %v224
  %v247 = vadd.f32 %v91, %v226
  %v248 = vadd.f32 %v92, %v228
  %v249 = vadd.f32 %v93, %v230
  %v250 = vadd.f32 %v94, %v232
  %v251 = vadd.f32 %v95, %v234
  %v252 = vadd.f32 %v96, %v236
  %v253 = vld [vmem:[%s4] sm:$0xff]
  %v254 = vld [vmem:[%s4 + $0x8] sm:$0xff]
  %v255 = vld [vmem:[%s4 + $0x10] sm:$0xff]
  %v256 = vld [vmem:[%s4 + $0x18] sm:$0xff]
  %v257 = vld [vmem:[%s4 + $0x20] sm:$0xff]
  %v258 = vld [vmem:[%s4 + $0x28] sm:$0xff]
  %v259 = vld [vmem:[%s4 + $0x30] sm:$0xff]
  %v260 = vld [vmem:[%s4 + $0x38] sm:$0xff]
  %v261 = vpack.c.bf16 %v246, %v245
  %v262 = vpack.c.bf16 %v248, %v247
  %v263 = vpack.c.bf16 %v250, %v249
  %v264 = vpack.c.bf16 %v252, %v251
  %v265 = vpack.c.bf16 %v254, %v253
  %v266 = vpack.c.bf16 %v256, %v255
  %v267 = vpack.c.bf16 %v258, %v257
  %v268 = vpack.c.bf16 %v260, %v259
  %v269 = vld [vmem:[%s5] sm:$0x1]
  %v271 = vperm.slane %v269, 0
  %277 = vrot.lane.b32.xlu0 %v261, 64
  %v278 = vpop.permute.xlu0 %277
  %279 = vrot.lane.b32.xlu0 %v262, 64
  %v280 = vpop.permute.xlu0 %279
  %281 = vrot.lane.b32.xlu0 %v263, 64
  %v282 = vpop.permute.xlu0 %281
  %283 = vrot.lane.b32.xlu0 %v264, 64
  %v284 = vpop.permute.xlu0 %283
  %vm285 = vcmask 523264
  %v287 = vsel %vm285, %v278, 0
  %v290 = vsel %vm285, %v280, 0
  %v293 = vsel %vm285, %v282, 0
  %v296 = vsel %vm285, %v284, 0
  %298 = vmatpush.bf16.msra.mxu0 0
  %299 = vmatpush.bf16.msra.mxu0 0
  %300 = vmatpush.bf16.msra.mxu0 0
  %301 = vmatpush.bf16.msra.mxu0 0
  %302 = vmatpush.bf16.msra.mxu0 %v268
  %303 = vmatpush.bf16.msra.mxu0 %v267
  %304 = vmatpush.bf16.msra.mxu0 %v266
  %305 = vmatpush.bf16.msra.mxu0 %v265
  %306 = vmatmul.bf16.gmra.mxu0 %v287
  %v307 = vpop.f32.mrf.mxu0
  %v308 = vadd.f32 %v271, %v307
  %v309 = vpop.f32.mrf.mxu0
  %v310 = vadd.f32 %v271, %v309
  %311 = vmatmul.bf16.gmra.mxu0 %v290
  %v312 = vpop.f32.mrf.mxu0
  %v313 = vadd.f32 %v271, %v312
  %v314 = vpop.f32.mrf.mxu0
  %v315 = vadd.f32 %v271, %v314
  %316 = vmatmul.bf16.gmra.mxu0 %v293
  %v317 = vpop.f32.mrf.mxu0
  %v318 = vadd.f32 %v271, %v317
  %v319 = vpop.f32.mrf.mxu0
  %v320 = vadd.f32 %v271, %v319
  %321 = vmatmul.bf16.gmra.mxu0 %v296
  %v322 = vpop.f32.mrf.mxu0
  %v323 = vadd.f32 %v271, %v322
  %v324 = vpop.f32.mrf.mxu0
  %v325 = vadd.f32 %v271, %v324
  %326 = vdwg.mxu0
  %v327 = vmul.f32 %v308, 0.5
  %v328 = vmul.f32 %v310, 0.5
  %v329 = vmul.f32 %v313, 0.5
  %v330 = vmul.f32 %v315, 0.5
  %v331 = vmul.f32 %v318, 0.5
  %v332 = vmul.f32 %v320, 0.5
  %v333 = vmul.f32 %v323, 0.5
  %v334 = vmul.f32 %v325, 0.5
  %v335 = vtanh.pop %v327
  %v336 = vtanh.pop %v328
  %v337 = vtanh.pop %v329
  %v338 = vtanh.pop %v330
  %v339 = vtanh.pop %v331
  %v340 = vtanh.pop %v332
  %v341 = vtanh.pop %v333
  %v342 = vtanh.pop %v334
  %v343 = vmul.f32 %v335, 0.5
  %v344 = vmul.f32 %v336, 0.5
  %v345 = vmul.f32 %v337, 0.5
  %v346 = vmul.f32 %v338, 0.5
  %v347 = vmul.f32 %v339, 0.5
  %v348 = vmul.f32 %v340, 0.5
  %v349 = vmul.f32 %v341, 0.5
  %v350 = vmul.f32 %v342, 0.5
  %v351 = vadd.f32 %v343, 0.5
  %v352 = vadd.f32 %v344, 0.5
  %v353 = vadd.f32 %v345, 0.5
  %v354 = vadd.f32 %v346, 0.5
  %v355 = vadd.f32 %v347, 0.5
  %v356 = vadd.f32 %v348, 0.5
  %v357 = vadd.f32 %v349, 0.5
  %v358 = vadd.f32 %v350, 0.5
  %v359 = vmul.f32 %v308, %v351
  %v360 = vmul.f32 %v310, %v352
  %v361 = vmul.f32 %v313, %v353
  %v362 = vmul.f32 %v315, %v354
  %v363 = vmul.f32 %v318, %v355
  %v364 = vmul.f32 %v320, %v356
  %v365 = vmul.f32 %v323, %v357
  %v366 = vmul.f32 %v325, %v358
  %v367 = vld [vmem:[%s6] sm:$0xff]
  %v368 = vld [vmem:[%s6 + $0x8] sm:$0xff]
  %v369 = vld [vmem:[%s6 + $0x10] sm:$0xff]
  %v370 = vld [vmem:[%s6 + $0x18] sm:$0xff]
  %v371 = vld [vmem:[%s6 + $0x20] sm:$0xff]
  %v372 = vld [vmem:[%s6 + $0x28] sm:$0xff]
  %v373 = vld [vmem:[%s6 + $0x30] sm:$0xff]
  %v374 = vld [vmem:[%s6 + $0x38] sm:$0xff]
  %v375 = vpack.c.bf16 %v360, %v359
  %v376 = vpack.c.bf16 %v362, %v361
  %v377 = vpack.c.bf16 %v364, %v363
  %v378 = vpack.c.bf16 %v366, %v365
  %v379 = vpack.c.bf16 %v368, %v367
  %v380 = vpack.c.bf16 %v370, %v369
  %v381 = vpack.c.bf16 %v372, %v371
  %v382 = vpack.c.bf16 %v374, %v373
  %v383 = vld [vmem:[%s7] sm:$0x1]
  %v385 = vperm.slane %v383, 0
  %v388 = vsel %vm285, %v375, 0
  %v391 = vsel %vm285, %v376, 0
  %v394 = vsel %vm285, %v377, 0
  %v397 = vsel %vm285, %v378, 0
  %399 = vmatpush.bf16.msra.mxu0 0
  %400 = vmatpush.bf16.msra.mxu0 0
  %401 = vmatpush.bf16.msra.mxu0 0
  %402 = vmatpush.bf16.msra.mxu0 0
  %403 = vmatpush.bf16.msra.mxu0 %v382
  %404 = vmatpush.bf16.msra.mxu0 %v381
  %405 = vmatpush.bf16.msra.mxu0 %v380
  %406 = vmatpush.bf16.msra.mxu0 %v379
  %407 = vmatmul.bf16.gmra.mxu0 %v388
  %v408 = vpop.f32.mrf.mxu0
  %v409 = vadd.f32 %v385, %v408
  %v410 = vpop.f32.mrf.mxu0
  %v411 = vadd.f32 %v385, %v410
  %412 = vmatmul.bf16.gmra.mxu0 %v391
  %v413 = vpop.f32.mrf.mxu0
  %v414 = vadd.f32 %v385, %v413
  %v415 = vpop.f32.mrf.mxu0
  %v416 = vadd.f32 %v385, %v415
  %417 = vmatmul.bf16.gmra.mxu0 %v394
  %v418 = vpop.f32.mrf.mxu0
  %v419 = vadd.f32 %v385, %v418
  %v420 = vpop.f32.mrf.mxu0
  %v421 = vadd.f32 %v385, %v420
  %422 = vmatmul.bf16.gmra.mxu0 %v397
  %v423 = vpop.f32.mrf.mxu0
  %v424 = vadd.f32 %v385, %v423
  %v425 = vpop.f32.mrf.mxu0
  %v426 = vadd.f32 %v385, %v425
  %427 = vdwg.mxu0
  %v428 = vmul.f32 %v409, 0.5
  %v429 = vmul.f32 %v411, 0.5
  %v430 = vmul.f32 %v414, 0.5
  %v431 = vmul.f32 %v416, 0.5
  %v432 = vmul.f32 %v419, 0.5
  %v433 = vmul.f32 %v421, 0.5
  %v434 = vmul.f32 %v424, 0.5
  %v435 = vmul.f32 %v426, 0.5
  %v436 = vtanh.pop %v428
  %v437 = vtanh.pop %v429
  %v438 = vtanh.pop %v430
  %v439 = vtanh.pop %v431
  %v440 = vtanh.pop %v432
  %v441 = vtanh.pop %v433
  %v442 = vtanh.pop %v434
  %v443 = vtanh.pop %v435
  %v444 = vmul.f32 %v436, 0.5
  %v445 = vmul.f32 %v437, 0.5
  %v446 = vmul.f32 %v438, 0.5
  %v447 = vmul.f32 %v439, 0.5
  %v448 = vmul.f32 %v440, 0.5
  %v449 = vmul.f32 %v441, 0.5
  %v450 = vmul.f32 %v442, 0.5
  %v451 = vmul.f32 %v443, 0.5
  %v452 = vadd.f32 %v444, 0.5
  %v453 = vadd.f32 %v445, 0.5
  %v454 = vadd.f32 %v446, 0.5
  %v455 = vadd.f32 %v447, 0.5
  %v456 = vadd.f32 %v448, 0.5
  %v457 = vadd.f32 %v449, 0.5
  %v458 = vadd.f32 %v450, 0.5
  %v459 = vadd.f32 %v451, 0.5
  %v460 = vmul.f32 %v409, %v452
  %v461 = vmul.f32 %v411, %v453
  %v462 = vmul.f32 %v414, %v454
  %v463 = vmul.f32 %v416, %v455
  %v464 = vmul.f32 %v419, %v456
  %v465 = vmul.f32 %v421, %v457
  %v466 = vmul.f32 %v424, %v458
  %v467 = vmul.f32 %v426, %v459
  %476 = vrot.lane.b32.xlu0 %v460, 64
  %v477 = vpop.permute.xlu0 %476
  %478 = vrot.lane.b32.xlu0 %v461, 64
  %v479 = vpop.permute.xlu0 %478
  %480 = vrot.lane.b32.xlu0 %v462, 64
  %v481 = vpop.permute.xlu0 %480
  %482 = vrot.lane.b32.xlu0 %v463, 64
  %v483 = vpop.permute.xlu0 %482
  %484 = vrot.lane.b32.xlu0 %v464, 64
  %v485 = vpop.permute.xlu0 %484
  %486 = vrot.lane.b32.xlu0 %v465, 64
  %v487 = vpop.permute.xlu0 %486
  %488 = vrot.lane.b32.xlu0 %v466, 64
  %v489 = vpop.permute.xlu0 %488
  %490 = vrot.lane.b32.xlu0 %v467, 64
  %v491 = vpop.permute.xlu0 %490
  %v500 = vadd.f32 %v245, %v477
  %v501 = vadd.f32 %v246, %v479
  %v502 = vadd.f32 %v247, %v481
  %v503 = vadd.f32 %v248, %v483
  %v504 = vadd.f32 %v249, %v485
  %v505 = vadd.f32 %v250, %v487
  %v506 = vadd.f32 %v251, %v489
  %v507 = vadd.f32 %v252, %v491
  %v508 = vld [vmem:[%s8] sm:$0xff]
  %v509 = vld [vmem:[%s8 + $0x8] sm:$0xff]
  %v510 = vld [vmem:[%s8 + $0x10] sm:$0xff]
  %v511 = vld [vmem:[%s8 + $0x18] sm:$0xff]
  %v512 = vld [vmem:[%s8 + $0x20] sm:$0xff]
  %v513 = vld [vmem:[%s8 + $0x28] sm:$0xff]
  %v514 = vld [vmem:[%s8 + $0x30] sm:$0xff]
  %v515 = vld [vmem:[%s8 + $0x38] sm:$0xff]
  %v516 = vpack.c.bf16 %v501, %v500
  %v517 = vpack.c.bf16 %v503, %v502
  %v518 = vpack.c.bf16 %v505, %v504
  %v519 = vpack.c.bf16 %v507, %v506
  %v520 = vpack.c.bf16 %v509, %v508
  %v521 = vpack.c.bf16 %v511, %v510
  %v522 = vpack.c.bf16 %v513, %v512
  %v523 = vpack.c.bf16 %v515, %v514
  %v524 = vld [vmem:[%s9] sm:$0x1]
  %v526 = vperm.slane %v524, 0
  %532 = vrot.lane.b32.xlu0 %v516, 64
  %v533 = vpop.permute.xlu0 %532
  %534 = vrot.lane.b32.xlu0 %v517, 64
  %v535 = vpop.permute.xlu0 %534
  %536 = vrot.lane.b32.xlu0 %v518, 64
  %v537 = vpop.permute.xlu0 %536
  %538 = vrot.lane.b32.xlu0 %v519, 64
  %v539 = vpop.permute.xlu0 %538
  %v541 = vsel %vm285, %v533, 0
  %v544 = vsel %vm285, %v535, 0
  %v547 = vsel %vm285, %v537, 0
  %v550 = vsel %vm285, %v539, 0
  %552 = vmatpush.bf16.msra.mxu0 0
  %553 = vmatpush.bf16.msra.mxu0 0
  %554 = vmatpush.bf16.msra.mxu0 0
  %555 = vmatpush.bf16.msra.mxu0 0
  %556 = vmatpush.bf16.msra.mxu0 %v523
  %557 = vmatpush.bf16.msra.mxu0 %v522
  %558 = vmatpush.bf16.msra.mxu0 %v521
  %559 = vmatpush.bf16.msra.mxu0 %v520
  %560 = vmatmul.bf16.gmra.mxu0 %v541
  %v561 = vpop.f32.mrf.mxu0
  %v562 = vadd.f32 %v526, %v561
  %v563 = vpop.f32.mrf.mxu0
  %v564 = vadd.f32 %v526, %v563
  %565 = vmatmul.bf16.gmra.mxu0 %v544
  %v566 = vpop.f32.mrf.mxu0
  %v567 = vadd.f32 %v526, %v566
  %v568 = vpop.f32.mrf.mxu0
  %v569 = vadd.f32 %v526, %v568
  %570 = vmatmul.bf16.gmra.mxu0 %v547
  %v571 = vpop.f32.mrf.mxu0
  %v572 = vadd.f32 %v526, %v571
  %v573 = vpop.f32.mrf.mxu0
  %v574 = vadd.f32 %v526, %v573
  %575 = vmatmul.bf16.gmra.mxu0 %v550
  %v576 = vpop.f32.mrf.mxu0
  %v577 = vadd.f32 %v526, %v576
  %v578 = vpop.f32.mrf.mxu0
  %v579 = vadd.f32 %v526, %v578
  %580 = vdwg.mxu0
  %v581 = vmul.f32 %v562, 0.5
  %v582 = vmul.f32 %v564, 0.5
  %v583 = vmul.f32 %v567, 0.5
  %v584 = vmul.f32 %v569, 0.5
  %v585 = vmul.f32 %v572, 0.5
  %v586 = vmul.f32 %v574, 0.5
  %v587 = vmul.f32 %v577, 0.5
  %v588 = vmul.f32 %v579, 0.5
  %v589 = vtanh.pop %v581
  %v590 = vtanh.pop %v582
  %v591 = vtanh.pop %v583
  %v592 = vtanh.pop %v584
  %v593 = vtanh.pop %v585
  %v594 = vtanh.pop %v586
  %v595 = vtanh.pop %v587
  %v596 = vtanh.pop %v588
  %v597 = vmul.f32 %v589, 0.5
  %v598 = vmul.f32 %v590, 0.5
  %v599 = vmul.f32 %v591, 0.5
  %v600 = vmul.f32 %v592, 0.5
  %v601 = vmul.f32 %v593, 0.5
  %v602 = vmul.f32 %v594, 0.5
  %v603 = vmul.f32 %v595, 0.5
  %v604 = vmul.f32 %v596, 0.5
  %v605 = vadd.f32 %v597, 0.5
  %v606 = vadd.f32 %v598, 0.5
  %v607 = vadd.f32 %v599, 0.5
  %v608 = vadd.f32 %v600, 0.5
  %v609 = vadd.f32 %v601, 0.5
  %v610 = vadd.f32 %v602, 0.5
  %v611 = vadd.f32 %v603, 0.5
  %v612 = vadd.f32 %v604, 0.5
  %v613 = vmul.f32 %v562, %v605
  %v614 = vmul.f32 %v564, %v606
  %v615 = vmul.f32 %v567, %v607
  %v616 = vmul.f32 %v569, %v608
  %v617 = vmul.f32 %v572, %v609
  %v618 = vmul.f32 %v574, %v610
  %v619 = vmul.f32 %v577, %v611
  %v620 = vmul.f32 %v579, %v612
  %v621 = vadd.f32 %v613, %v89
  %v622 = vadd.f32 %v614, %v90
  %v623 = vadd.f32 %v615, %v91
  %v624 = vadd.f32 %v616, %v92
  %v625 = vadd.f32 %v617, %v93
  %v626 = vadd.f32 %v618, %v94
  %v627 = vadd.f32 %v619, %v95
  %v628 = vadd.f32 %v620, %v96
  %v629 = vld [vmem:[%s10] sm:$0xff]
  %v630 = vld [vmem:[%s10 + $0x8] sm:$0xff]
  %v631 = vld [vmem:[%s10 + $0x10] sm:$0xff]
  %v632 = vld [vmem:[%s10 + $0x18] sm:$0xff]
  %v633 = vld [vmem:[%s10 + $0x20] sm:$0xff]
  %v634 = vld [vmem:[%s10 + $0x28] sm:$0xff]
  %v635 = vld [vmem:[%s10 + $0x30] sm:$0xff]
  %v636 = vld [vmem:[%s10 + $0x38] sm:$0xff]
  %v637 = vpack.c.bf16 %v622, %v621
  %v638 = vpack.c.bf16 %v624, %v623
  %v639 = vpack.c.bf16 %v626, %v625
  %v640 = vpack.c.bf16 %v628, %v627
  %v641 = vpack.c.bf16 %v630, %v629
  %v642 = vpack.c.bf16 %v632, %v631
  %v643 = vpack.c.bf16 %v634, %v633
  %v644 = vpack.c.bf16 %v636, %v635
  %v645 = vld [vmem:[%s11] sm:$0x1]
  %v647 = vperm.slane %v645, 0
  %v650 = vsel %vm285, %v637, 0
  %v653 = vsel %vm285, %v638, 0
  %v656 = vsel %vm285, %v639, 0
  %v659 = vsel %vm285, %v640, 0
  %661 = vmatpush.bf16.msra.mxu0 0
  %662 = vmatpush.bf16.msra.mxu0 0
  %663 = vmatpush.bf16.msra.mxu0 0
  %664 = vmatpush.bf16.msra.mxu0 0
  %665 = vmatpush.bf16.msra.mxu0 %v644
  %666 = vmatpush.bf16.msra.mxu0 %v643
  %667 = vmatpush.bf16.msra.mxu0 %v642
  %668 = vmatpush.bf16.msra.mxu0 %v641
  %669 = vmatmul.bf16.gmra.mxu0 %v650
  %v670 = vpop.f32.mrf.mxu0
  %v671 = vadd.f32 %v647, %v670
  %v672 = vpop.f32.mrf.mxu0
  %v673 = vadd.f32 %v647, %v672
  %674 = vmatmul.bf16.gmra.mxu0 %v653
  %v675 = vpop.f32.mrf.mxu0
  %v676 = vadd.f32 %v647, %v675
  %v677 = vpop.f32.mrf.mxu0
  %v678 = vadd.f32 %v647, %v677
  %679 = vmatmul.bf16.gmra.mxu0 %v656
  %v680 = vpop.f32.mrf.mxu0
  %v681 = vadd.f32 %v647, %v680
  %v682 = vpop.f32.mrf.mxu0
  %v683 = vadd.f32 %v647, %v682
  %684 = vmatmul.bf16.gmra.mxu0 %v659
  %v685 = vpop.f32.mrf.mxu0
  %v686 = vadd.f32 %v647, %v685
  %v687 = vpop.f32.mrf.mxu0
  %v688 = vadd.f32 %v647, %v687
  %689 = vdwg.mxu0
  %v690 = vmul.f32 %v671, 0.5
  %v691 = vmul.f32 %v673, 0.5
  %v692 = vmul.f32 %v676, 0.5
  %v693 = vmul.f32 %v678, 0.5
  %v694 = vmul.f32 %v681, 0.5
  %v695 = vmul.f32 %v683, 0.5
  %v696 = vmul.f32 %v686, 0.5
  %v697 = vmul.f32 %v688, 0.5
  %v698 = vtanh.pop %v690
  %v699 = vtanh.pop %v691
  %v700 = vtanh.pop %v692
  %v701 = vtanh.pop %v693
  %v702 = vtanh.pop %v694
  %v703 = vtanh.pop %v695
  %v704 = vtanh.pop %v696
  %v705 = vtanh.pop %v697
  %v706 = vmul.f32 %v698, 0.5
  %v707 = vmul.f32 %v699, 0.5
  %v708 = vmul.f32 %v700, 0.5
  %v709 = vmul.f32 %v701, 0.5
  %v710 = vmul.f32 %v702, 0.5
  %v711 = vmul.f32 %v703, 0.5
  %v712 = vmul.f32 %v704, 0.5
  %v713 = vmul.f32 %v705, 0.5
  %v714 = vadd.f32 %v706, 0.5
  %v715 = vadd.f32 %v707, 0.5
  %v716 = vadd.f32 %v708, 0.5
  %v717 = vadd.f32 %v709, 0.5
  %v718 = vadd.f32 %v710, 0.5
  %v719 = vadd.f32 %v711, 0.5
  %v720 = vadd.f32 %v712, 0.5
  %v721 = vadd.f32 %v713, 0.5
  %v722 = vmul.f32 %v671, %v714
  %v723 = vmul.f32 %v673, %v715
  %v724 = vmul.f32 %v676, %v716
  %v725 = vmul.f32 %v678, %v717
  %v726 = vmul.f32 %v681, %v718
  %v727 = vmul.f32 %v683, %v719
  %v728 = vmul.f32 %v686, %v720
  %v729 = vmul.f32 %v688, %v721
  %v730 = vld [vmem:[%s12] sm:$0xff]
  %v731 = vld [vmem:[%s12 + $0x8] sm:$0xff]
  %v732 = vld [vmem:[%s12 + $0x10] sm:$0xff]
  %v733 = vld [vmem:[%s12 + $0x18] sm:$0xff]
  %v734 = vld [vmem:[%s12 + $0x20] sm:$0xff]
  %v735 = vld [vmem:[%s12 + $0x28] sm:$0xff]
  %v736 = vld [vmem:[%s12 + $0x30] sm:$0xff]
  %v737 = vld [vmem:[%s12 + $0x38] sm:$0xff]
  %v738 = vpack.c.bf16 %v723, %v722
  %v739 = vpack.c.bf16 %v725, %v724
  %v740 = vpack.c.bf16 %v727, %v726
  %v741 = vpack.c.bf16 %v729, %v728
  %v742 = vpack.c.bf16 %v731, %v730
  %v743 = vpack.c.bf16 %v733, %v732
  %v744 = vpack.c.bf16 %v735, %v734
  %v745 = vpack.c.bf16 %v737, %v736
  %v746 = vld [vmem:[%s13] sm:$0x1]
  %v748 = vperm.slane %v746, 0
  %v751 = vsel %vm285, %v738, 0
  %v754 = vsel %vm285, %v739, 0
  %v757 = vsel %vm285, %v740, 0
  %v760 = vsel %vm285, %v741, 0
  %762 = vmatpush.bf16.msra.mxu0 0
  %763 = vmatpush.bf16.msra.mxu0 0
  %764 = vmatpush.bf16.msra.mxu0 0
  %765 = vmatpush.bf16.msra.mxu0 0
  %766 = vmatpush.bf16.msra.mxu0 %v745
  %767 = vmatpush.bf16.msra.mxu0 %v744
  %768 = vmatpush.bf16.msra.mxu0 %v743
  %769 = vmatpush.bf16.msra.mxu0 %v742
  %770 = vmatmul.bf16.gmra.mxu0 %v751
  %v771 = vpop.f32.mrf.mxu0
  %v772 = vadd.f32 %v748, %v771
  %v773 = vpop.f32.mrf.mxu0
  %v774 = vadd.f32 %v748, %v773
  %775 = vmatmul.bf16.gmra.mxu0 %v754
  %v776 = vpop.f32.mrf.mxu0
  %v777 = vadd.f32 %v748, %v776
  %v778 = vpop.f32.mrf.mxu0
  %v779 = vadd.f32 %v748, %v778
  %780 = vmatmul.bf16.gmra.mxu0 %v757
  %v781 = vpop.f32.mrf.mxu0
  %v782 = vadd.f32 %v748, %v781
  %v783 = vpop.f32.mrf.mxu0
  %v784 = vadd.f32 %v748, %v783
  %785 = vmatmul.bf16.gmra.mxu0 %v760
  %v786 = vpop.f32.mrf.mxu0
  %v787 = vadd.f32 %v748, %v786
  %v788 = vpop.f32.mrf.mxu0
  %v789 = vadd.f32 %v748, %v788
  %790 = vdwg.mxu0
  %v791 = vmul.f32 %v772, 0.5
  %v792 = vmul.f32 %v774, 0.5
  %v793 = vmul.f32 %v777, 0.5
  %v794 = vmul.f32 %v779, 0.5
  %v795 = vmul.f32 %v782, 0.5
  %v796 = vmul.f32 %v784, 0.5
  %v797 = vmul.f32 %v787, 0.5
  %v798 = vmul.f32 %v789, 0.5
  %v799 = vtanh.pop %v791
  %v800 = vtanh.pop %v792
  %v801 = vtanh.pop %v793
  %v802 = vtanh.pop %v794
  %v803 = vtanh.pop %v795
  %v804 = vtanh.pop %v796
  %v805 = vtanh.pop %v797
  %v806 = vtanh.pop %v798
  %v807 = vmul.f32 %v799, 0.5
  %v808 = vmul.f32 %v800, 0.5
  %v809 = vmul.f32 %v801, 0.5
  %v810 = vmul.f32 %v802, 0.5
  %v811 = vmul.f32 %v803, 0.5
  %v812 = vmul.f32 %v804, 0.5
  %v813 = vmul.f32 %v805, 0.5
  %v814 = vmul.f32 %v806, 0.5
  %v815 = vadd.f32 %v807, 0.5
  %v816 = vadd.f32 %v808, 0.5
  %v817 = vadd.f32 %v809, 0.5
  %v818 = vadd.f32 %v810, 0.5
  %v819 = vadd.f32 %v811, 0.5
  %v820 = vadd.f32 %v812, 0.5
  %v821 = vadd.f32 %v813, 0.5
  %v822 = vadd.f32 %v814, 0.5
  %v823 = vmul.f32 %v772, %v815
  %v824 = vmul.f32 %v774, %v816
  %v825 = vmul.f32 %v777, %v817
  %v826 = vmul.f32 %v779, %v818
  %v827 = vmul.f32 %v782, %v819
  %v828 = vmul.f32 %v784, %v820
  %v829 = vmul.f32 %v787, %v821
  %v830 = vmul.f32 %v789, %v822
  %v831 = vadd.f32 %v621, %v823
  %v832 = vadd.f32 %v622, %v824
  %v833 = vadd.f32 %v623, %v825
  %v834 = vadd.f32 %v624, %v826
  %v835 = vadd.f32 %v625, %v827
  %v836 = vadd.f32 %v626, %v828
  %v837 = vadd.f32 %v627, %v829
  %v838 = vadd.f32 %v628, %v830
  %v839 = vld [vmem:[%s14] sm:$0xff]
  %v840 = vld [vmem:[%s14 + $0x8] sm:$0xff]
  %v841 = vld [vmem:[%s14 + $0x10] sm:$0xff]
  %v842 = vld [vmem:[%s14 + $0x18] sm:$0xff]
  %v843 = vld [vmem:[%s14 + $0x20] sm:$0xff]
  %v844 = vld [vmem:[%s14 + $0x28] sm:$0xff]
  %v845 = vld [vmem:[%s14 + $0x30] sm:$0xff]
  %v846 = vld [vmem:[%s14 + $0x38] sm:$0xff]
  %v847 = vpack.c.bf16 %v832, %v831
  %v848 = vpack.c.bf16 %v834, %v833
  %v849 = vpack.c.bf16 %v836, %v835
  %v850 = vpack.c.bf16 %v838, %v837
  %v851 = vpack.c.bf16 %v840, %v839
  %v852 = vpack.c.bf16 %v842, %v841
  %v853 = vpack.c.bf16 %v844, %v843
  %v854 = vpack.c.bf16 %v846, %v845
  %v855 = vld [vmem:[%s15] sm:$0x1]
  %v857 = vperm.slane %v855, 0
  %v860 = vsel %vm285, %v847, 0
  %v863 = vsel %vm285, %v848, 0
  %v866 = vsel %vm285, %v849, 0
  %v869 = vsel %vm285, %v850, 0
  %871 = vmatpush.bf16.msra.mxu0 0
  %872 = vmatpush.bf16.msra.mxu0 0
  %873 = vmatpush.bf16.msra.mxu0 0
  %874 = vmatpush.bf16.msra.mxu0 0
  %875 = vmatpush.bf16.msra.mxu0 %v854
  %876 = vmatpush.bf16.msra.mxu0 %v853
  %877 = vmatpush.bf16.msra.mxu0 %v852
  %878 = vmatpush.bf16.msra.mxu0 %v851
  %879 = vmatmul.bf16.gmra.mxu0 %v860
  %v880 = vpop.f32.mrf.mxu0
  %v881 = vadd.f32 %v857, %v880
  %v882 = vpop.f32.mrf.mxu0
  %v883 = vadd.f32 %v857, %v882
  %884 = vmatmul.bf16.gmra.mxu0 %v863
  %v885 = vpop.f32.mrf.mxu0
  %v886 = vadd.f32 %v857, %v885
  %v887 = vpop.f32.mrf.mxu0
  %v888 = vadd.f32 %v857, %v887
  %889 = vmatmul.bf16.gmra.mxu0 %v866
  %v890 = vpop.f32.mrf.mxu0
  %v891 = vadd.f32 %v857, %v890
  %v892 = vpop.f32.mrf.mxu0
  %v893 = vadd.f32 %v857, %v892
  %894 = vmatmul.bf16.gmra.mxu0 %v869
  %v895 = vpop.f32.mrf.mxu0
  %v896 = vadd.f32 %v857, %v895
  %v897 = vpop.f32.mrf.mxu0
  %v898 = vadd.f32 %v857, %v897
  %899 = vdwg.mxu0
  %v900 = vmul.f32 %v881, 0.5
  %v901 = vmul.f32 %v883, 0.5
  %v902 = vmul.f32 %v886, 0.5
  %v903 = vmul.f32 %v888, 0.5
  %v904 = vmul.f32 %v891, 0.5
  %v905 = vmul.f32 %v893, 0.5
  %v906 = vmul.f32 %v896, 0.5
  %v907 = vmul.f32 %v898, 0.5
  %v908 = vtanh.pop %v900
  %v909 = vtanh.pop %v901
  %v910 = vtanh.pop %v902
  %v911 = vtanh.pop %v903
  %v912 = vtanh.pop %v904
  %v913 = vtanh.pop %v905
  %v914 = vtanh.pop %v906
  %v915 = vtanh.pop %v907
  %v916 = vmul.f32 %v908, 0.5
  %v917 = vmul.f32 %v909, 0.5
  %v918 = vmul.f32 %v910, 0.5
  %v919 = vmul.f32 %v911, 0.5
  %v920 = vmul.f32 %v912, 0.5
  %v921 = vmul.f32 %v913, 0.5
  %v922 = vmul.f32 %v914, 0.5
  %v923 = vmul.f32 %v915, 0.5
  %v924 = vadd.f32 %v916, 0.5
  %v925 = vadd.f32 %v917, 0.5
  %v926 = vadd.f32 %v918, 0.5
  %v927 = vadd.f32 %v919, 0.5
  %v928 = vadd.f32 %v920, 0.5
  %v929 = vadd.f32 %v921, 0.5
  %v930 = vadd.f32 %v922, 0.5
  %v931 = vadd.f32 %v923, 0.5
  %v932 = vmul.f32 %v881, %v924
  %v933 = vmul.f32 %v883, %v925
  %v934 = vmul.f32 %v886, %v926
  %v935 = vmul.f32 %v888, %v927
  %v936 = vmul.f32 %v891, %v928
  %v937 = vmul.f32 %v893, %v929
  %v938 = vmul.f32 %v896, %v930
  %v939 = vmul.f32 %v898, %v931
  %v940 = vld [vmem:[%s16] sm:$0xff]
  %v941 = vld [vmem:[%s16 + $0x8] sm:$0xff]
  %v942 = vld [vmem:[%s16 + $0x10] sm:$0xff]
  %v943 = vld [vmem:[%s16 + $0x18] sm:$0xff]
  %v944 = vld [vmem:[%s16 + $0x20] sm:$0xff]
  %v945 = vld [vmem:[%s16 + $0x28] sm:$0xff]
  %v946 = vld [vmem:[%s16 + $0x30] sm:$0xff]
  %v947 = vld [vmem:[%s16 + $0x38] sm:$0xff]
  %v948 = vpack.c.bf16 %v933, %v932
  %v949 = vpack.c.bf16 %v935, %v934
  %v950 = vpack.c.bf16 %v937, %v936
  %v951 = vpack.c.bf16 %v939, %v938
  %v952 = vpack.c.bf16 %v941, %v940
  %v953 = vpack.c.bf16 %v943, %v942
  %v954 = vpack.c.bf16 %v945, %v944
  %v955 = vpack.c.bf16 %v947, %v946
  %v956 = vld [vmem:[%s17] sm:$0x1]
  %v958 = vperm.slane %v956, 0
  %v961 = vsel %vm285, %v948, 0
  %v964 = vsel %vm285, %v949, 0
  %v967 = vsel %vm285, %v950, 0
  %v970 = vsel %vm285, %v951, 0
  %972 = vmatpush.bf16.msra.mxu0 0
  %973 = vmatpush.bf16.msra.mxu0 0
  %974 = vmatpush.bf16.msra.mxu0 0
  %975 = vmatpush.bf16.msra.mxu0 0
  %976 = vmatpush.bf16.msra.mxu0 %v955
  %977 = vmatpush.bf16.msra.mxu0 %v954
  %978 = vmatpush.bf16.msra.mxu0 %v953
  %979 = vmatpush.bf16.msra.mxu0 %v952
  %980 = vmatmul.bf16.gmra.mxu0 %v961
  %v981 = vpop.f32.mrf.mxu0
  %v982 = vadd.f32 %v958, %v981
  %v983 = vpop.f32.mrf.mxu0
  %v984 = vadd.f32 %v958, %v983
  %985 = vmatmul.bf16.gmra.mxu0 %v964
  %v986 = vpop.f32.mrf.mxu0
  %v987 = vadd.f32 %v958, %v986
  %v988 = vpop.f32.mrf.mxu0
  %v989 = vadd.f32 %v958, %v988
  %990 = vmatmul.bf16.gmra.mxu0 %v967
  %v991 = vpop.f32.mrf.mxu0
  %v992 = vadd.f32 %v958, %v991
  %v993 = vpop.f32.mrf.mxu0
  %v994 = vadd.f32 %v958, %v993
  %995 = vmatmul.bf16.gmra.mxu0 %v970
  %v996 = vpop.f32.mrf.mxu0
  %v997 = vadd.f32 %v958, %v996
  %v998 = vpop.f32.mrf.mxu0
  %v999 = vadd.f32 %v958, %v998
  %1000 = vdwg.mxu0
  %v1001 = vmul.f32 %v982, 0.5
  %v1002 = vmul.f32 %v984, 0.5
  %v1003 = vmul.f32 %v987, 0.5
  %v1004 = vmul.f32 %v989, 0.5
  %v1005 = vmul.f32 %v992, 0.5
  %v1006 = vmul.f32 %v994, 0.5
  %v1007 = vmul.f32 %v997, 0.5
  %v1008 = vmul.f32 %v999, 0.5
  %v1009 = vtanh.pop %v1001
  %v1010 = vtanh.pop %v1002
  %v1011 = vtanh.pop %v1003
  %v1012 = vtanh.pop %v1004
  %v1013 = vtanh.pop %v1005
  %v1014 = vtanh.pop %v1006
  %v1015 = vtanh.pop %v1007
  %v1016 = vtanh.pop %v1008
  %v1017 = vmul.f32 %v1009, 0.5
  %v1018 = vmul.f32 %v1010, 0.5
  %v1019 = vmul.f32 %v1011, 0.5
  %v1020 = vmul.f32 %v1012, 0.5
  %v1021 = vmul.f32 %v1013, 0.5
  %v1022 = vmul.f32 %v1014, 0.5
  %v1023 = vmul.f32 %v1015, 0.5
  %v1024 = vmul.f32 %v1016, 0.5
  %v1025 = vadd.f32 %v1017, 0.5
  %v1026 = vadd.f32 %v1018, 0.5
  %v1027 = vadd.f32 %v1019, 0.5
  %v1028 = vadd.f32 %v1020, 0.5
  %v1029 = vadd.f32 %v1021, 0.5
  %v1030 = vadd.f32 %v1022, 0.5
  %v1031 = vadd.f32 %v1023, 0.5
  %v1032 = vadd.f32 %v1024, 0.5
  %v1033 = vmul.f32 %v982, %v1025
  %v1034 = vmul.f32 %v984, %v1026
  %v1035 = vmul.f32 %v987, %v1027
  %v1036 = vmul.f32 %v989, %v1028
  %v1037 = vmul.f32 %v992, %v1029
  %v1038 = vmul.f32 %v994, %v1030
  %v1039 = vmul.f32 %v997, %v1031
  %v1040 = vmul.f32 %v999, %v1032
  %v1041 = vadd.f32 %v831, %v1033
  %v1042 = vadd.f32 %v832, %v1034
  %v1043 = vadd.f32 %v833, %v1035
  %v1044 = vadd.f32 %v834, %v1036
  %v1045 = vadd.f32 %v835, %v1037
  %v1046 = vadd.f32 %v836, %v1038
  %v1047 = vadd.f32 %v837, %v1039
  %v1048 = vadd.f32 %v838, %v1040
  %v1049 = vld [vmem:[%s2] sm:$0xf]
  %v1050 = vld [vmem:[%s2 + $0x4] sm:$0xf]
  %v1051 = vld [vmem:[%s2 + $0x8] sm:$0xf]
  %v1052 = vld [vmem:[%s2 + $0xc] sm:$0xf]
  %v1053 = vld [vmem:[%s2 + $0x10] sm:$0xf]
  %v1054 = vld [vmem:[%s2 + $0x14] sm:$0xf]
  %v1055 = vld [vmem:[%s2 + $0x18] sm:$0xf]
  %v1056 = vld [vmem:[%s2 + $0x1c] sm:$0xf]
  %v1057 = vld [vmem:[%s18] sm:$0x3f]
  %v1058 = vpack.c.bf16 %v1057, %v1057
  %v1067 = vunpack.c.l.b16 %v1049
  %v1068 = vunpack.c.l.b16 %v1050
  %v1069 = vunpack.c.l.b16 %v1051
  %v1070 = vunpack.c.l.b16 %v1052
  %v1071 = vunpack.c.l.b16 %v1053
  %v1072 = vunpack.c.l.b16 %v1054
  %v1073 = vunpack.c.l.b16 %v1055
  %v1074 = vunpack.c.l.b16 %v1056
  %v1075 = vpack.c.b16 %v1068, %v1067
  %v1076 = vpack.c.b16 %v1070, %v1069
  %v1077 = vpack.c.b16 %v1072, %v1071
  %v1078 = vpack.c.b16 %v1074, %v1073
  %vm1079 = vcmask 48128
  %v1081 = vsel %vm1079, %v1075, 0
  %v1084 = vsel %vm1079, %v1076, 0
  %v1087 = vsel %vm1079, %v1077, 0
  %v1090 = vsel %vm1079, %v1078, 0
  %vm1092 = vcmask 1042432
  %v1094 = vsel %vm1092, %v1058, 0
  %1096 = vmatpush.bf16.msra.mxu0 0
  %1097 = vmatpush.bf16.msra.mxu0 0
  %1098 = vmatpush.bf16.msra.mxu0 0
  %1099 = vmatpush.bf16.msra.mxu0 0
  %1100 = vmatpush.bf16.msra.mxu0 0
  %1101 = vmatpush.bf16.msra.mxu0 0
  %1102 = vmatpush.bf16.msra.mxu0 0
  %1103 = vmatpush.bf16.msra.mxu0 %v1094
  %1104 = vmatmul.bf16.gmra.mxu0 %v1081
  %v1105 = vpop.f32.mrf.mxu0
  %v1106 = vadd.f32 0.0, %v1105
  %v1107 = vpop.f32.mrf.mxu0
  %v1108 = vadd.f32 0.0, %v1107
  %1109 = vmatmul.bf16.gmra.mxu0 %v1084
  %v1110 = vpop.f32.mrf.mxu0
  %v1111 = vadd.f32 0.0, %v1110
  %v1112 = vpop.f32.mrf.mxu0
  %v1113 = vadd.f32 0.0, %v1112
  %1114 = vmatmul.bf16.gmra.mxu0 %v1087
  %v1115 = vpop.f32.mrf.mxu0
  %v1116 = vadd.f32 0.0, %v1115
  %v1117 = vpop.f32.mrf.mxu0
  %v1118 = vadd.f32 0.0, %v1117
  %1119 = vmatmul.bf16.gmra.mxu0 %v1090
  %v1120 = vpop.f32.mrf.mxu0
  %v1121 = vadd.f32 0.0, %v1120
  %v1122 = vpop.f32.mrf.mxu0
  %v1123 = vadd.f32 0.0, %v1122
  %1124 = vdwg.mxu0
  %v1125 = vmul.f32 %v1106, %v1041
  %v1126 = vmul.f32 %v1108, %v1042
  %v1127 = vmul.f32 %v1111, %v1043
  %v1128 = vmul.f32 %v1113, %v1044
  %v1129 = vmul.f32 %v1116, %v1045
  %v1130 = vmul.f32 %v1118, %v1046
  %v1131 = vmul.f32 %v1121, %v1047
  %v1132 = vmul.f32 %v1123, %v1048
  %v1133 = vpack.c.bf16 %v1125, %v1125
  %v1134 = vpack.c.bf16 %v1126, %v1126
  %v1135 = vpack.c.bf16 %v1127, %v1127
  %v1136 = vpack.c.bf16 %v1128, %v1128
  %v1137 = vpack.c.bf16 %v1129, %v1129
  %v1138 = vpack.c.bf16 %v1130, %v1130
  %v1139 = vpack.c.bf16 %v1131, %v1131
  %v1140 = vpack.c.bf16 %v1132, %v1132
  %vm1141 = vcmask 519168
  %1142 = vst.msk [vmem:[%s26] sm:$0xf] %vm1141, %v1133
  %1143 = vst.msk [vmem:[%s26 + $0x4] sm:$0xf] %vm1141, %v1134
  %1144 = vst.msk [vmem:[%s26 + $0x8] sm:$0xf] %vm1141, %v1135
  %1145 = vst.msk [vmem:[%s26 + $0xc] sm:$0xf] %vm1141, %v1136
  %1146 = vst.msk [vmem:[%s26 + $0x10] sm:$0xf] %vm1141, %v1137
  %1147 = vst.msk [vmem:[%s26 + $0x14] sm:$0xf] %vm1141, %v1138
  %1148 = vst.msk [vmem:[%s26 + $0x18] sm:$0xf] %vm1141, %v1139
  %1149 = vst.msk [vmem:[%s26 + $0x1c] sm:$0xf] %vm1141, %v1140
  %v1150 = vld [vmem:[%s19] sm:$0x3f]
  %v1151 = vpack.c.bf16 %v1150, %v1150
  %v1153 = vsel %vm1092, %v1151, 0
  %1155 = vmatpush.bf16.msra.mxu0 0
  %1156 = vmatpush.bf16.msra.mxu0 0
  %1157 = vmatpush.bf16.msra.mxu0 0
  %1158 = vmatpush.bf16.msra.mxu0 0
  %1159 = vmatpush.bf16.msra.mxu0 0
  %1160 = vmatpush.bf16.msra.mxu0 0
  %1161 = vmatpush.bf16.msra.mxu0 0
  %1162 = vmatpush.bf16.msra.mxu0 %v1153
  %1163 = vmatmul.bf16.gmra.mxu0 %v1081
  %v1164 = vpop.f32.mrf.mxu0
  %v1165 = vadd.f32 0.0, %v1164
  %v1166 = vpop.f32.mrf.mxu0
  %v1167 = vadd.f32 0.0, %v1166
  %1168 = vmatmul.bf16.gmra.mxu0 %v1084
  %v1169 = vpop.f32.mrf.mxu0
  %v1170 = vadd.f32 0.0, %v1169
  %v1171 = vpop.f32.mrf.mxu0
  %v1172 = vadd.f32 0.0, %v1171
  %1173 = vmatmul.bf16.gmra.mxu0 %v1087
  %v1174 = vpop.f32.mrf.mxu0
  %v1175 = vadd.f32 0.0, %v1174
  %v1176 = vpop.f32.mrf.mxu0
  %v1177 = vadd.f32 0.0, %v1176
  %1178 = vmatmul.bf16.gmra.mxu0 %v1090
  %v1179 = vpop.f32.mrf.mxu0
  %v1180 = vadd.f32 0.0, %v1179
  %v1181 = vpop.f32.mrf.mxu0
  %v1182 = vadd.f32 0.0, %v1181
  %1183 = vdwg.mxu0
  %v1184 = vld [vmem:[%s20] sm:$0xff]
  %v1185 = vpack.c.bf16 %v1167, %v1165
  %v1186 = vpack.c.bf16 %v1172, %v1170
  %v1187 = vpack.c.bf16 %v1177, %v1175
  %v1188 = vpack.c.bf16 %v1182, %v1180
  %v1189 = vpack.c.bf16 %v1184, %v1184
  %vm1190 = vcmask 64512
  %v1192 = vsel %vm1190, %v1185, 0
  %v1195 = vsel %vm1190, %v1186, 0
  %v1198 = vsel %vm1190, %v1187, 0
  %v1201 = vsel %vm1190, %v1188, 0
  %vm1203 = vcmask 1043456
  %v1205 = vsel %vm1203, %v1189, 0
  %1207 = vmatpush.bf16.msra.mxu0 0
  %1208 = vmatpush.bf16.msra.mxu0 0
  %1209 = vmatpush.bf16.msra.mxu0 0
  %1210 = vmatpush.bf16.msra.mxu0 0
  %1211 = vmatpush.bf16.msra.mxu0 0
  %1212 = vmatpush.bf16.msra.mxu0 0
  %1213 = vmatpush.bf16.msra.mxu0 0
  %1214 = vmatpush.bf16.msra.mxu0 %v1205
  %1215 = vmatmul.bf16.gmra.mxu0 %v1192
  %v1216 = vpop.f32.mrf.mxu0
  %v1217 = vadd.f32 0.0, %v1216
  %v1218 = vpop.f32.mrf.mxu0
  %v1219 = vadd.f32 0.0, %v1218
  %1220 = vmatmul.bf16.gmra.mxu0 %v1195
  %v1221 = vpop.f32.mrf.mxu0
  %v1222 = vadd.f32 0.0, %v1221
  %v1223 = vpop.f32.mrf.mxu0
  %v1224 = vadd.f32 0.0, %v1223
  %1225 = vmatmul.bf16.gmra.mxu0 %v1198
  %v1226 = vpop.f32.mrf.mxu0
  %v1227 = vadd.f32 0.0, %v1226
  %v1228 = vpop.f32.mrf.mxu0
  %v1229 = vadd.f32 0.0, %v1228
  %1230 = vmatmul.bf16.gmra.mxu0 %v1201
  %v1231 = vpop.f32.mrf.mxu0
  %v1232 = vadd.f32 0.0, %v1231
  %v1233 = vpop.f32.mrf.mxu0
  %v1234 = vadd.f32 0.0, %v1233
  %1235 = vdwg.mxu0
  %v1236 = vld [vmem:[%s21] sm:$0xff]
  %v1237 = vld [vmem:[%s21 + $0x8] sm:$0xff]
  %v1238 = vld [vmem:[%s21 + $0x10] sm:$0xff]
  %v1239 = vld [vmem:[%s21 + $0x18] sm:$0xff]
  %v1240 = vld [vmem:[%s21 + $0x20] sm:$0xff]
  %v1241 = vld [vmem:[%s21 + $0x28] sm:$0xff]
  %v1242 = vld [vmem:[%s21 + $0x30] sm:$0xff]
  %v1243 = vld [vmem:[%s21 + $0x38] sm:$0xff]
  %v1244 = vpack.c.bf16 %v1042, %v1041
  %v1245 = vpack.c.bf16 %v1044, %v1043
  %v1246 = vpack.c.bf16 %v1046, %v1045
  %v1247 = vpack.c.bf16 %v1048, %v1047
  %v1248 = vpack.c.bf16 %v1237, %v1236
  %v1249 = vpack.c.bf16 %v1239, %v1238
  %v1250 = vpack.c.bf16 %v1241, %v1240
  %v1251 = vpack.c.bf16 %v1243, %v1242
  %v1252 = vld [vmem:[%s22] sm:$0x1]
  %v1254 = vperm.slane %v1252, 0
  %v1257 = vsel %vm285, %v1244, 0
  %v1260 = vsel %vm285, %v1245, 0
  %v1263 = vsel %vm285, %v1246, 0
  %v1266 = vsel %vm285, %v1247, 0
  %1268 = vmatpush.bf16.msra.mxu0 0
  %1269 = vmatpush.bf16.msra.mxu0 0
  %1270 = vmatpush.bf16.msra.mxu0 0
  %1271 = vmatpush.bf16.msra.mxu0 0
  %1272 = vmatpush.bf16.msra.mxu0 %v1251
  %1273 = vmatpush.bf16.msra.mxu0 %v1250
  %1274 = vmatpush.bf16.msra.mxu0 %v1249
  %1275 = vmatpush.bf16.msra.mxu0 %v1248
  %1276 = vmatmul.bf16.gmra.mxu0 %v1257
  %v1277 = vpop.f32.mrf.mxu0
  %v1278 = vadd.f32 %v1254, %v1277
  %v1279 = vpop.f32.mrf.mxu0
  %v1280 = vadd.f32 %v1254, %v1279
  %1281 = vmatmul.bf16.gmra.mxu0 %v1260
  %v1282 = vpop.f32.mrf.mxu0
  %v1283 = vadd.f32 %v1254, %v1282
  %v1284 = vpop.f32.mrf.mxu0
  %v1285 = vadd.f32 %v1254, %v1284
  %1286 = vmatmul.bf16.gmra.mxu0 %v1263
  %v1287 = vpop.f32.mrf.mxu0
  %v1288 = vadd.f32 %v1254, %v1287
  %v1289 = vpop.f32.mrf.mxu0
  %v1290 = vadd.f32 %v1254, %v1289
  %1291 = vmatmul.bf16.gmra.mxu0 %v1266
  %v1292 = vpop.f32.mrf.mxu0
  %v1293 = vadd.f32 %v1254, %v1292
  %v1294 = vpop.f32.mrf.mxu0
  %v1295 = vadd.f32 %v1254, %v1294
  %1296 = vdwg.mxu0
  %v1297 = vmul.f32 %v1278, 0.5
  %v1298 = vmul.f32 %v1280, 0.5
  %v1299 = vmul.f32 %v1283, 0.5
  %v1300 = vmul.f32 %v1285, 0.5
  %v1301 = vmul.f32 %v1288, 0.5
  %v1302 = vmul.f32 %v1290, 0.5
  %v1303 = vmul.f32 %v1293, 0.5
  %v1304 = vmul.f32 %v1295, 0.5
  %v1305 = vtanh.pop %v1297
  %v1306 = vtanh.pop %v1298
  %v1307 = vtanh.pop %v1299
  %v1308 = vtanh.pop %v1300
  %v1309 = vtanh.pop %v1301
  %v1310 = vtanh.pop %v1302
  %v1311 = vtanh.pop %v1303
  %v1312 = vtanh.pop %v1304
  %v1313 = vmul.f32 %v1305, 0.5
  %v1314 = vmul.f32 %v1306, 0.5
  %v1315 = vmul.f32 %v1307, 0.5
  %v1316 = vmul.f32 %v1308, 0.5
  %v1317 = vmul.f32 %v1309, 0.5
  %v1318 = vmul.f32 %v1310, 0.5
  %v1319 = vmul.f32 %v1311, 0.5
  %v1320 = vmul.f32 %v1312, 0.5
  %v1321 = vadd.f32 %v1313, 0.5
  %v1322 = vadd.f32 %v1314, 0.5
  %v1323 = vadd.f32 %v1315, 0.5
  %v1324 = vadd.f32 %v1316, 0.5
  %v1325 = vadd.f32 %v1317, 0.5
  %v1326 = vadd.f32 %v1318, 0.5
  %v1327 = vadd.f32 %v1319, 0.5
  %v1328 = vadd.f32 %v1320, 0.5
  %v1329 = vmul.f32 %v1278, %v1321
  %v1330 = vmul.f32 %v1280, %v1322
  %v1331 = vmul.f32 %v1283, %v1323
  %v1332 = vmul.f32 %v1285, %v1324
  %v1333 = vmul.f32 %v1288, %v1325
  %v1334 = vmul.f32 %v1290, %v1326
  %v1335 = vmul.f32 %v1293, %v1327
  %v1336 = vmul.f32 %v1295, %v1328
  %1345 = vrot.lane.b32.xlu0 %v1217, 64
  %v1346 = vpop.permute.xlu0 %1345
  %1347 = vrot.lane.b32.xlu0 %v1219, 64
  %v1348 = vpop.permute.xlu0 %1347
  %1349 = vrot.lane.b32.xlu0 %v1222, 64
  %v1350 = vpop.permute.xlu0 %1349
  %1351 = vrot.lane.b32.xlu0 %v1224, 64
  %v1352 = vpop.permute.xlu0 %1351
  %1353 = vrot.lane.b32.xlu0 %v1227, 64
  %v1354 = vpop.permute.xlu0 %1353
  %1355 = vrot.lane.b32.xlu0 %v1229, 64
  %v1356 = vpop.permute.xlu0 %1355
  %1357 = vrot.lane.b32.xlu0 %v1232, 64
  %v1358 = vpop.permute.xlu0 %1357
  %1359 = vrot.lane.b32.xlu0 %v1234, 64
  %v1360 = vpop.permute.xlu0 %1359
  %v1369 = vmul.f32 %v1329, %v1346
  %v1370 = vmul.f32 %v1330, %v1348
  %v1371 = vmul.f32 %v1331, %v1350
  %v1372 = vmul.f32 %v1332, %v1352
  %v1373 = vmul.f32 %v1333, %v1354
  %v1374 = vmul.f32 %v1334, %v1356
  %v1375 = vmul.f32 %v1335, %v1358
  %v1376 = vmul.f32 %v1336, %v1360
  %v1377 = vld [vmem:[%s23] sm:$0xff]
  %v1378 = vld [vmem:[%s23 + $0x8] sm:$0xff]
  %v1379 = vld [vmem:[%s23 + $0x10] sm:$0xff]
  %v1380 = vld [vmem:[%s23 + $0x18] sm:$0xff]
  %v1381 = vld [vmem:[%s23 + $0x20] sm:$0xff]
  %v1382 = vld [vmem:[%s23 + $0x28] sm:$0xff]
  %v1383 = vld [vmem:[%s23 + $0x30] sm:$0xff]
  %v1384 = vld [vmem:[%s23 + $0x38] sm:$0xff]
  %v1385 = vpack.c.bf16 %v1370, %v1369
  %v1386 = vpack.c.bf16 %v1372, %v1371
  %v1387 = vpack.c.bf16 %v1374, %v1373
  %v1388 = vpack.c.bf16 %v1376, %v1375
  %v1389 = vpack.c.bf16 %v1378, %v1377
  %v1390 = vpack.c.bf16 %v1380, %v1379
  %v1391 = vpack.c.bf16 %v1382, %v1381
  %v1392 = vpack.c.bf16 %v1384, %v1383
  %1397 = vrot.lane.b32.xlu0 %v1385, 64
  %v1398 = vpop.permute.xlu0 %1397
  %1399 = vrot.lane.b32.xlu0 %v1386, 64
  %v1400 = vpop.permute.xlu0 %1399
  %1401 = vrot.lane.b32.xlu0 %v1387, 64
  %v1402 = vpop.permute.xlu0 %1401
  %1403 = vrot.lane.b32.xlu0 %v1388, 64
  %v1404 = vpop.permute.xlu0 %1403
  %v1406 = vsel %vm285, %v1398, 0
  %v1409 = vsel %vm285, %v1400, 0
  %v1412 = vsel %vm285, %v1402, 0
  %v1415 = vsel %vm285, %v1404, 0
  %1417 = vmatpush.bf16.msra.mxu0 0
  %1418 = vmatpush.bf16.msra.mxu0 0
  %1419 = vmatpush.bf16.msra.mxu0 0
  %1420 = vmatpush.bf16.msra.mxu0 0
  %1421 = vmatpush.bf16.msra.mxu0 %v1392
  %1422 = vmatpush.bf16.msra.mxu0 %v1391
  %1423 = vmatpush.bf16.msra.mxu0 %v1390
  %1424 = vmatpush.bf16.msra.mxu0 %v1389
  %1425 = vmatmul.bf16.gmra.mxu0 %v1406
  %v1426 = vpop.f32.mrf.mxu0
  %v1427 = vadd.f32 0.0, %v1426
  %v1428 = vpop.f32.mrf.mxu0
  %v1429 = vadd.f32 0.0, %v1428
  %1430 = vmatmul.bf16.gmra.mxu0 %v1409
  %v1431 = vpop.f32.mrf.mxu0
  %v1432 = vadd.f32 0.0, %v1431
  %v1433 = vpop.f32.mrf.mxu0
  %v1434 = vadd.f32 0.0, %v1433
  %1435 = vmatmul.bf16.gmra.mxu0 %v1412
  %v1436 = vpop.f32.mrf.mxu0
  %v1437 = vadd.f32 0.0, %v1436
  %v1438 = vpop.f32.mrf.mxu0
  %v1439 = vadd.f32 0.0, %v1438
  %1440 = vmatmul.bf16.gmra.mxu0 %v1415
  %v1441 = vpop.f32.mrf.mxu0
  %v1442 = vadd.f32 0.0, %v1441
  %v1443 = vpop.f32.mrf.mxu0
  %v1444 = vadd.f32 0.0, %v1443
  %1445 = vdwg.mxu0
  %v1446 = vmul.f32 %v1427, 0.5
  %v1447 = vmul.f32 %v1429, 0.5
  %v1448 = vmul.f32 %v1432, 0.5
  %v1449 = vmul.f32 %v1434, 0.5
  %v1450 = vmul.f32 %v1437, 0.5
  %v1451 = vmul.f32 %v1439, 0.5
  %v1452 = vmul.f32 %v1442, 0.5
  %v1453 = vmul.f32 %v1444, 0.5
  %v1454 = vtanh.pop %v1446
  %v1455 = vtanh.pop %v1447
  %v1456 = vtanh.pop %v1448
  %v1457 = vtanh.pop %v1449
  %v1458 = vtanh.pop %v1450
  %v1459 = vtanh.pop %v1451
  %v1460 = vtanh.pop %v1452
  %v1461 = vtanh.pop %v1453
  %v1462 = vmul.f32 %v1454, 0.5
  %v1463 = vmul.f32 %v1455, 0.5
  %v1464 = vmul.f32 %v1456, 0.5
  %v1465 = vmul.f32 %v1457, 0.5
  %v1466 = vmul.f32 %v1458, 0.5
  %v1467 = vmul.f32 %v1459, 0.5
  %v1468 = vmul.f32 %v1460, 0.5
  %v1469 = vmul.f32 %v1461, 0.5
  %v1470 = vadd.f32 %v1462, 0.5
  %v1471 = vadd.f32 %v1463, 0.5
  %v1472 = vadd.f32 %v1464, 0.5
  %v1473 = vadd.f32 %v1465, 0.5
  %v1474 = vadd.f32 %v1466, 0.5
  %v1475 = vadd.f32 %v1467, 0.5
  %v1476 = vadd.f32 %v1468, 0.5
  %v1477 = vadd.f32 %v1469, 0.5
  %v1478 = vmul.f32 %v1427, %v1470
  %v1479 = vmul.f32 %v1429, %v1471
  %v1480 = vmul.f32 %v1432, %v1472
  %v1481 = vmul.f32 %v1434, %v1473
  %v1482 = vmul.f32 %v1437, %v1474
  %v1483 = vmul.f32 %v1439, %v1475
  %v1484 = vmul.f32 %v1442, %v1476
  %v1485 = vmul.f32 %v1444, %v1477
  %v1486 = vpack.c.bf16 %v1478, %v1478
  %v1487 = vpack.c.bf16 %v1479, %v1479
  %v1488 = vpack.c.bf16 %v1480, %v1480
  %v1489 = vpack.c.bf16 %v1481, %v1481
  %v1490 = vpack.c.bf16 %v1482, %v1482
  %v1491 = vpack.c.bf16 %v1483, %v1483
  %v1492 = vpack.c.bf16 %v1484, %v1484
  %v1493 = vpack.c.bf16 %v1485, %v1485
  %vm1494 = vcmask 257024
  %1495 = vst.msk [vmem:[%s25] sm:$0xf] %vm1494, %v1486
  %1496 = vst.msk [vmem:[%s25 + $0x4] sm:$0xf] %vm1494, %v1487
  %1497 = vst.msk [vmem:[%s25 + $0x8] sm:$0xf] %vm1494, %v1488
  %1498 = vst.msk [vmem:[%s25 + $0xc] sm:$0xf] %vm1494, %v1489
  %1499 = vst.msk [vmem:[%s25 + $0x10] sm:$0xf] %vm1494, %v1490
  %1500 = vst.msk [vmem:[%s25 + $0x14] sm:$0xf] %vm1494, %v1491
  %1501 = vst.msk [vmem:[%s25 + $0x18] sm:$0xf] %vm1494, %v1492
  %1502 = vst.msk [vmem:[%s25 + $0x1c] sm:$0xf] %vm1494, %v1493
  %1511 = vrot.lane.b32.xlu0 %v1329, 64
  %v1512 = vpop.permute.xlu0 %1511
  %1513 = vrot.lane.b32.xlu0 %v1330, 64
  %v1514 = vpop.permute.xlu0 %1513
  %1515 = vrot.lane.b32.xlu0 %v1331, 64
  %v1516 = vpop.permute.xlu0 %1515
  %1517 = vrot.lane.b32.xlu0 %v1332, 64
  %v1518 = vpop.permute.xlu0 %1517
  %1519 = vrot.lane.b32.xlu0 %v1333, 64
  %v1520 = vpop.permute.xlu0 %1519
  %1521 = vrot.lane.b32.xlu0 %v1334, 64
  %v1522 = vpop.permute.xlu0 %1521
  %1523 = vrot.lane.b32.xlu0 %v1335, 64
  %v1524 = vpop.permute.xlu0 %1523
  %1525 = vrot.lane.b32.xlu0 %v1336, 64
  %v1526 = vpop.permute.xlu0 %1525
  %v1535 = vsel %vm285, %v1041, %v1512
  %v1536 = vsel %vm285, %v1042, %v1514
  %v1537 = vsel %vm285, %v1043, %v1516
  %v1538 = vsel %vm285, %v1044, %v1518
  %v1539 = vsel %vm285, %v1045, %v1520
  %v1540 = vsel %vm285, %v1046, %v1522
  %v1541 = vsel %vm285, %v1047, %v1524
  %v1542 = vsel %vm285, %v1048, %v1526
  %v1543 = vpack.c.bf16 %v1535, %v1535
  %v1544 = vpack.c.bf16 %v1536, %v1536
  %v1545 = vpack.c.bf16 %v1537, %v1537
  %v1546 = vpack.c.bf16 %v1538, %v1538
  %v1547 = vpack.c.bf16 %v1539, %v1539
  %v1548 = vpack.c.bf16 %v1540, %v1540
  %v1549 = vpack.c.bf16 %v1541, %v1541
  %v1550 = vpack.c.bf16 %v1542, %v1542
  %1551 = vst [vmem:[%s24] sm:$0xf] %v1543
  %1552 = vst [vmem:[%s24 + $0x4] sm:$0xf] %v1544
  %1553 = vst [vmem:[%s24 + $0x8] sm:$0xf] %v1545
  %1554 = vst [vmem:[%s24 + $0xc] sm:$0xf] %v1546
  %1555 = vst [vmem:[%s24 + $0x10] sm:$0xf] %v1547
  %1556 = vst [vmem:[%s24 + $0x14] sm:$0xf] %v1548
  %1557 = vst [vmem:[%s24 + $0x18] sm:$0xf] %v1549
  %1558 = vst [vmem:[%s24 + $0x1c] sm:$0xf] %v1550
  // Predicated region
  $region98: #{_lambda_.7} parent=0 // pred_check
    _
  $region99: #{_lambda_.7} parent=0 // pred_check_branch
    %1560 = sbr.rel (0) target = $region101
  $region100: #{_lambda_.7} parent=0 // pred_region
    _
  $region101: #{_lambda_.7} parent=0 // pred_fallthru
    _
  // Predicated region
  $region102: #{_lambda_.7} parent=0 // pred_check
    _
  $region103: #{_lambda_.7} parent=0 // pred_check_branch
    %1562 = sbr.rel (0) target = $region105
  $region104: #{_lambda_.7} parent=0 // pred_region
    _
  $region105: #{_lambda_.7} parent=0 // pred_fallthru
    _
  // Predicated region
  $region106: #{_lambda_.7} parent=0 // pred_check
    _
  $region107: #{_lambda_.7} parent=0 // pred_check_branch
    %1564 = sbr.rel (0) target = $region109
  $region108: #{_lambda_.7} parent=0 // pred_region
    _
  $region109: #{_lambda_.7} parent=0 // pred_fallthru
    _
  // Predicated region
  $region110: #{_lambda_.7} parent=0 // pred_check
    _
  $region111: #{_lambda_.7} parent=0 // pred_check_branch
    %1566 = sbr.rel (0) target = $region113
  $region112: #{_lambda_.7} parent=0 // pred_region
    _
  $region113: #{_lambda_.7} parent=0 // pred_fallthru
    _
  // Predicated region
  $region114: #{_lambda_.7} parent=0 // pred_check
    _
  $region115: #{_lambda_.7} parent=0 // pred_check_branch
    %1568 = sbr.rel (0) target = $region117
  $region116: #{_lambda_.7} parent=0 // pred_region
    _
  $region117: #{_lambda_.7} parent=0 // pred_fallthru
    _
  // Predicated region
  $region118: #{_lambda_.7} parent=0 // pred_check
    _
  $region119: #{_lambda_.7} parent=0 // pred_check_branch
    %1570 = sbr.rel (0) target = $region121
  $region120: #{_lambda_.7} parent=0 // pred_region
    _
  $region121: #{_lambda_.7} parent=0 // pred_fallthru
    _

// kernel: _lambda_.8
$region0: #{_lambda_.8}
  #allocation0 [shape = 'u32[]', space=smem, size = 0x4, offset = 0x4, fixed_abs, tag = 'smem constant byte address 0x4 - core index']
  #allocation1 [shape = 'u32[72,128]{1,0:T(1,128)}', space=vmem, size = 0x9000, scoped, tag = 'internal scratch']
  %s0 = inlined_call_operand.vmem [shape: bf16[64,128], index: 0, kind: input, shape index: {}]
  %s1 = inlined_call_operand.vmem [shape: bf16[64,32], index: 1, kind: input, shape index: {}]
  %s2 = inlined_call_operand.vmem [shape: bf16[64,6], index: 2, kind: input, shape index: {}]
  %s3 = inlined_call_operand.vmem [shape: f32[32,64], index: 3, kind: input, shape index: {}]
  %s4 = inlined_call_operand.vmem [shape: f32[64,64], index: 4, kind: input, shape index: {}]
  %s5 = inlined_call_operand.vmem [shape: f32[1,64], index: 5, kind: input, shape index: {}]
  %s6 = inlined_call_operand.vmem [shape: f32[64,64], index: 6, kind: input, shape index: {}]
  %s7 = inlined_call_operand.vmem [shape: f32[1,64], index: 7, kind: input, shape index: {}]
  %s8 = inlined_call_operand.vmem [shape: f32[64,64], index: 8, kind: input, shape index: {}]
  %s9 = inlined_call_operand.vmem [shape: f32[1,64], index: 9, kind: input, shape index: {}]
  %s10 = inlined_call_operand.vmem [shape: f32[64,64], index: 10, kind: input, shape index: {}]
  %s11 = inlined_call_operand.vmem [shape: f32[1,64], index: 11, kind: input, shape index: {}]
  %s12 = inlined_call_operand.vmem [shape: f32[64,64], index: 12, kind: input, shape index: {}]
  %s13 = inlined_call_operand.vmem [shape: f32[1,64], index: 13, kind: input, shape index: {}]
  %s14 = inlined_call_operand.vmem [shape: f32[64,64], index: 14, kind: input, shape index: {}]
  %s15 = inlined_call_operand.vmem [shape: f32[1,64], index: 15, kind: input, shape index: {}]
  %s16 = inlined_call_operand.vmem [shape: f32[64,64], index: 16, kind: input, shape index: {}]
  %s17 = inlined_call_operand.vmem [shape: f32[1,64], index: 17, kind: input, shape index: {}]
  %s18 = inlined_call_operand.vmem [shape: f32[6,64], index: 18, kind: input, shape index: {}]
  %s19 = inlined_call_operand.vmem [shape: bf16[64,64], index: 19, kind: output, shape index: {}]
  %s20 = sld [smem:[#allocation0]]
  $region86: #{_lambda_.8} parent=0
    _
  %s22 = ssub.s32 1, %s20
  %s23 = scalar_select 0, %s22, %s20
  // Predicated region
  $region2: #{_lambda_.8} parent=0 // pred_check
    _
  $region3: #{_lambda_.8} parent=0 // pred_check_branch
    %25 = sbr.rel (0) target = $region5
  $region4: #{_lambda_.8} parent=0 // pred_region
    _
  $region5: #{_lambda_.8} parent=0 // pred_fallthru
    _
  // Predicated region
  $region6: #{_lambda_.8} parent=0 // pred_check
    _
  $region7: #{_lambda_.8} parent=0 // pred_check_branch
    %27 = sbr.rel (0) target = $region9
  $region8: #{_lambda_.8} parent=0 // pred_region
    _
  $region9: #{_lambda_.8} parent=0 // pred_fallthru
    _
  // Predicated region
  $region10: #{_lambda_.8} parent=0 // pred_check
    _
  $region11: #{_lambda_.8} parent=0 // pred_check_branch
    %29 = sbr.rel (0) target = $region13
  $region12: #{_lambda_.8} parent=0 // pred_region
    _
  $region13: #{_lambda_.8} parent=0 // pred_fallthru
    _
  // Predicated region
  $region14: #{_lambda_.8} parent=0 // pred_check
    _
  $region15: #{_lambda_.8} parent=0 // pred_check_branch
    %31 = sbr.rel (0) target = $region17
  $region16: #{_lambda_.8} parent=0 // pred_region
    _
  $region17: #{_lambda_.8} parent=0 // pred_fallthru
    _
  // Predicated region
  $region18: #{_lambda_.8} parent=0 // pred_check
    _
  $region19: #{_lambda_.8} parent=0 // pred_check_branch
    %33 = sbr.rel (0) target = $region21
  $region20: #{_lambda_.8} parent=0 // pred_region
    _
  $region21: #{_lambda_.8} parent=0 // pred_fallthru
    _
  // Predicated region
  $region22: #{_lambda_.8} parent=0 // pred_check
    _
  $region23: #{_lambda_.8} parent=0 // pred_check_branch
    %35 = sbr.rel (0) target = $region25
  $region24: #{_lambda_.8} parent=0 // pred_region
    _
  $region25: #{_lambda_.8} parent=0 // pred_fallthru
    _
  // Predicated region
  $region26: #{_lambda_.8} parent=0 // pred_check
    _
  $region27: #{_lambda_.8} parent=0 // pred_check_branch
    %37 = sbr.rel (0) target = $region29
  $region28: #{_lambda_.8} parent=0 // pred_region
    _
  $region29: #{_lambda_.8} parent=0 // pred_fallthru
    _
  // Predicated region
  $region30: #{_lambda_.8} parent=0 // pred_check
    _
  $region31: #{_lambda_.8} parent=0 // pred_check_branch
    %39 = sbr.rel (0) target = $region33
  $region32: #{_lambda_.8} parent=0 // pred_region
    _
  $region33: #{_lambda_.8} parent=0 // pred_fallthru
    _
  // Predicated region
  $region34: #{_lambda_.8} parent=0 // pred_check
    _
  $region35: #{_lambda_.8} parent=0 // pred_check_branch
    %41 = sbr.rel (0) target = $region37
  $region36: #{_lambda_.8} parent=0 // pred_region
    _
  $region37: #{_lambda_.8} parent=0 // pred_fallthru
    _
  // Predicated region
  $region38: #{_lambda_.8} parent=0 // pred_check
    _
  $region39: #{_lambda_.8} parent=0 // pred_check_branch
    %43 = sbr.rel (0) target = $region41
  $region40: #{_lambda_.8} parent=0 // pred_region
    _
  $region41: #{_lambda_.8} parent=0 // pred_fallthru
    _
  // Predicated region
  $region42: #{_lambda_.8} parent=0 // pred_check
    _
  $region43: #{_lambda_.8} parent=0 // pred_check_branch
    %45 = sbr.rel (0) target = $region45
  $region44: #{_lambda_.8} parent=0 // pred_region
    _
  $region45: #{_lambda_.8} parent=0 // pred_fallthru
    _
  // Predicated region
  $region46: #{_lambda_.8} parent=0 // pred_check
    _
  $region47: #{_lambda_.8} parent=0 // pred_check_branch
    %47 = sbr.rel (0) target = $region49
  $region48: #{_lambda_.8} parent=0 // pred_region
    _
  $region49: #{_lambda_.8} parent=0 // pred_fallthru
    _
  // Predicated region
  $region50: #{_lambda_.8} parent=0 // pred_check
    _
  $region51: #{_lambda_.8} parent=0 // pred_check_branch
    %49 = sbr.rel (0) target = $region53
  $region52: #{_lambda_.8} parent=0 // pred_region
    _
  $region53: #{_lambda_.8} parent=0 // pred_fallthru
    _
  // Predicated region
  $region54: #{_lambda_.8} parent=0 // pred_check
    _
  $region55: #{_lambda_.8} parent=0 // pred_check_branch
    %51 = sbr.rel (0) target = $region57
  $region56: #{_lambda_.8} parent=0 // pred_region
    _
  $region57: #{_lambda_.8} parent=0 // pred_fallthru
    _
  // Predicated region
  $region58: #{_lambda_.8} parent=0 // pred_check
    _
  $region59: #{_lambda_.8} parent=0 // pred_check_branch
    %53 = sbr.rel (0) target = $region61
  $region60: #{_lambda_.8} parent=0 // pred_region
    _
  $region61: #{_lambda_.8} parent=0 // pred_fallthru
    _
  // Predicated region
  $region62: #{_lambda_.8} parent=0 // pred_check
    _
  $region63: #{_lambda_.8} parent=0 // pred_check_branch
    %55 = sbr.rel (0) target = $region65
  $region64: #{_lambda_.8} parent=0 // pred_region
    _
  $region65: #{_lambda_.8} parent=0 // pred_fallthru
    _
  // Predicated region
  $region66: #{_lambda_.8} parent=0 // pred_check
    _
  $region67: #{_lambda_.8} parent=0 // pred_check_branch
    %57 = sbr.rel (0) target = $region69
  $region68: #{_lambda_.8} parent=0 // pred_region
    _
  $region69: #{_lambda_.8} parent=0 // pred_fallthru
    _
  // Predicated region
  $region70: #{_lambda_.8} parent=0 // pred_check
    _
  $region71: #{_lambda_.8} parent=0 // pred_check_branch
    %59 = sbr.rel (0) target = $region73
  $region72: #{_lambda_.8} parent=0 // pred_region
    _
  $region73: #{_lambda_.8} parent=0 // pred_fallthru
    _
  // Predicated region
  $region74: #{_lambda_.8} parent=0 // pred_check
    _
  $region75: #{_lambda_.8} parent=0 // pred_check_branch
    %61 = sbr.rel (0) target = $region77
  $region76: #{_lambda_.8} parent=0 // pred_region
    _
  $region77: #{_lambda_.8} parent=0 // pred_fallthru
    _
  %v63 = vld [vmem:[%s0] sm:$0xf]
  %v64 = vld [vmem:[%s0 + $0x4] sm:$0xf]
  %v65 = vld [vmem:[%s0 + $0x8] sm:$0xf]
  %v66 = vld [vmem:[%s0 + $0xc] sm:$0xf]
  %v67 = vld [vmem:[%s0 + $0x10] sm:$0xf]
  %v68 = vld [vmem:[%s0 + $0x14] sm:$0xf]
  %v69 = vld [vmem:[%s0 + $0x18] sm:$0xf]
  %v70 = vld [vmem:[%s0 + $0x1c] sm:$0xf]
  %v71 = vunpack.c.l.bf16 %v63
  %v72 = vunpack.c.l.bf16 %v64
  %v73 = vunpack.c.l.bf16 %v65
  %v74 = vunpack.c.l.bf16 %v66
  %v75 = vunpack.c.l.bf16 %v67
  %v76 = vunpack.c.l.bf16 %v68
  %v77 = vunpack.c.l.bf16 %v69
  %v78 = vunpack.c.l.bf16 %v70
  %v79 = vld [vmem:[%s1] sm:$0xf]
  %v80 = vld [vmem:[%s1 + $0x4] sm:$0xf]
  %v81 = vld [vmem:[%s1 + $0x8] sm:$0xf]
  %v82 = vld [vmem:[%s1 + $0xc] sm:$0xf]
  %v83 = vld [vmem:[%s1 + $0x10] sm:$0xf]
  %v84 = vld [vmem:[%s1 + $0x14] sm:$0xf]
  %v85 = vld [vmem:[%s1 + $0x18] sm:$0xf]
  %v86 = vld [vmem:[%s1 + $0x1c] sm:$0xf]
  %v87 = vld [vmem:[%s3] sm:$0xff]
  %v88 = vld [vmem:[%s3 + $0x8] sm:$0xff]
  %v89 = vld [vmem:[%s3 + $0x10] sm:$0xff]
  %v90 = vld [vmem:[%s3 + $0x18] sm:$0xff]
  %v91 = vpack.c.bf16 %v88, %v87
  %v92 = vpack.c.bf16 %v90, %v89
  %v101 = vunpack.c.l.b16 %v79
  %v102 = vunpack.c.l.b16 %v80
  %v103 = vunpack.c.l.b16 %v81
  %v104 = vunpack.c.l.b16 %v82
  %v105 = vunpack.c.l.b16 %v83
  %v106 = vunpack.c.l.b16 %v84
  %v107 = vunpack.c.l.b16 %v85
  %v108 = vunpack.c.l.b16 %v86
  %v109 = vpack.c.b16 %v102, %v101
  %v110 = vpack.c.b16 %v104, %v103
  %v111 = vpack.c.b16 %v106, %v105
  %v112 = vpack.c.b16 %v108, %v107
  %vm113 = vcmask 261120
  %v115 = vsel %vm113, %v109, 0
  %v118 = vsel %vm113, %v110, 0
  %v121 = vsel %vm113, %v111, 0
  %v124 = vsel %vm113, %v112, 0
  %126 = vmatpush.bf16.msra.mxu0 0
  %127 = vmatpush.bf16.msra.mxu0 0
  %128 = vmatpush.bf16.msra.mxu0 0
  %129 = vmatpush.bf16.msra.mxu0 0
  %130 = vmatpush.bf16.msra.mxu0 0
  %131 = vmatpush.bf16.msra.mxu0 0
  %132 = vmatpush.bf16.msra.mxu0 %v92
  %133 = vmatpush.bf16.msra.mxu0 %v91
  %134 = vmatmul.bf16.gmra.mxu0 %v115
  %v135 = vpop.f32.mrf.mxu0
  %v136 = vadd.f32 0.0, %v135
  %v137 = vpop.f32.mrf.mxu0
  %v138 = vadd.f32 0.0, %v137
  %139 = vmatmul.bf16.gmra.mxu0 %v118
  %v140 = vpop.f32.mrf.mxu0
  %v141 = vadd.f32 0.0, %v140
  %v142 = vpop.f32.mrf.mxu0
  %v143 = vadd.f32 0.0, %v142
  %144 = vmatmul.bf16.gmra.mxu0 %v121
  %v145 = vpop.f32.mrf.mxu0
  %v146 = vadd.f32 0.0, %v145
  %v147 = vpop.f32.mrf.mxu0
  %v148 = vadd.f32 0.0, %v147
  %149 = vmatmul.bf16.gmra.mxu0 %v124
  %v150 = vpop.f32.mrf.mxu0
  %v151 = vadd.f32 0.0, %v150
  %v152 = vpop.f32.mrf.mxu0
  %v153 = vadd.f32 0.0, %v152
  %154 = vdwg.mxu0
  %v155 = vmul.f32 %v136, 0.5
  %v156 = vmul.f32 %v138, 0.5
  %v157 = vmul.f32 %v141, 0.5
  %v158 = vmul.f32 %v143, 0.5
  %v159 = vmul.f32 %v146, 0.5
  %v160 = vmul.f32 %v148, 0.5
  %v161 = vmul.f32 %v151, 0.5
  %v162 = vmul.f32 %v153, 0.5
  %v163 = vtanh.pop %v155
  %v164 = vtanh.pop %v156
  %v165 = vtanh.pop %v157
  %v166 = vtanh.pop %v158
  %v167 = vtanh.pop %v159
  %v168 = vtanh.pop %v160
  %v169 = vtanh.pop %v161
  %v170 = vtanh.pop %v162
  %v171 = vmul.f32 %v163, 0.5
  %v172 = vmul.f32 %v164, 0.5
  %v173 = vmul.f32 %v165, 0.5
  %v174 = vmul.f32 %v166, 0.5
  %v175 = vmul.f32 %v167, 0.5
  %v176 = vmul.f32 %v168, 0.5
  %v177 = vmul.f32 %v169, 0.5
  %v178 = vmul.f32 %v170, 0.5
  %v179 = vadd.f32 %v171, 0.5
  %v180 = vadd.f32 %v172, 0.5
  %v181 = vadd.f32 %v173, 0.5
  %v182 = vadd.f32 %v174, 0.5
  %v183 = vadd.f32 %v175, 0.5
  %v184 = vadd.f32 %v176, 0.5
  %v185 = vadd.f32 %v177, 0.5
  %v186 = vadd.f32 %v178, 0.5
  %v187 = vmul.f32 %v136, %v179
  %v188 = vmul.f32 %v138, %v180
  %v189 = vmul.f32 %v141, %v181
  %v190 = vmul.f32 %v143, %v182
  %v191 = vmul.f32 %v146, %v183
  %v192 = vmul.f32 %v148, %v184
  %v193 = vmul.f32 %v151, %v185
  %v194 = vmul.f32 %v153, %v186
  %203 = vrot.lane.b32.xlu0 %v187, 64
  %v204 = vpop.permute.xlu0 %203
  %205 = vrot.lane.b32.xlu0 %v188, 64
  %v206 = vpop.permute.xlu0 %205
  %207 = vrot.lane.b32.xlu0 %v189, 64
  %v208 = vpop.permute.xlu0 %207
  %209 = vrot.lane.b32.xlu0 %v190, 64
  %v210 = vpop.permute.xlu0 %209
  %211 = vrot.lane.b32.xlu0 %v191, 64
  %v212 = vpop.permute.xlu0 %211
  %213 = vrot.lane.b32.xlu0 %v192, 64
  %v214 = vpop.permute.xlu0 %213
  %215 = vrot.lane.b32.xlu0 %v193, 64
  %v216 = vpop.permute.xlu0 %215
  %217 = vrot.lane.b32.xlu0 %v194, 64
  %v218 = vpop.permute.xlu0 %217
  %v227 = vadd.f32 %v71, %v204
  %v228 = vadd.f32 %v72, %v206
  %v229 = vadd.f32 %v73, %v208
  %v230 = vadd.f32 %v74, %v210
  %v231 = vadd.f32 %v75, %v212
  %v232 = vadd.f32 %v76, %v214
  %v233 = vadd.f32 %v77, %v216
  %v234 = vadd.f32 %v78, %v218
  %v235 = vld [vmem:[%s4] sm:$0xff]
  %v236 = vld [vmem:[%s4 + $0x8] sm:$0xff]
  %v237 = vld [vmem:[%s4 + $0x10] sm:$0xff]
  %v238 = vld [vmem:[%s4 + $0x18] sm:$0xff]
  %v239 = vld [vmem:[%s4 + $0x20] sm:$0xff]
  %v240 = vld [vmem:[%s4 + $0x28] sm:$0xff]
  %v241 = vld [vmem:[%s4 + $0x30] sm:$0xff]
  %v242 = vld [vmem:[%s4 + $0x38] sm:$0xff]
  %v243 = vpack.c.bf16 %v228, %v227
  %v244 = vpack.c.bf16 %v230, %v229
  %v245 = vpack.c.bf16 %v232, %v231
  %v246 = vpack.c.bf16 %v234, %v233
  %v247 = vpack.c.bf16 %v236, %v235
  %v248 = vpack.c.bf16 %v238, %v237
  %v249 = vpack.c.bf16 %v240, %v239
  %v250 = vpack.c.bf16 %v242, %v241
  %v251 = vld [vmem:[%s5] sm:$0x1]
  %v253 = vperm.slane %v251, 0
  %259 = vrot.lane.b32.xlu0 %v243, 64
  %v260 = vpop.permute.xlu0 %259
  %261 = vrot.lane.b32.xlu0 %v244, 64
  %v262 = vpop.permute.xlu0 %261
  %263 = vrot.lane.b32.xlu0 %v245, 64
  %v264 = vpop.permute.xlu0 %263
  %265 = vrot.lane.b32.xlu0 %v246, 64
  %v266 = vpop.permute.xlu0 %265
  %vm267 = vcmask 523264
  %v269 = vsel %vm267, %v260, 0
  %v272 = vsel %vm267, %v262, 0
  %v275 = vsel %vm267, %v264, 0
  %v278 = vsel %vm267, %v266, 0
  %280 = vmatpush.bf16.msra.mxu0 0
  %281 = vmatpush.bf16.msra.mxu0 0
  %282 = vmatpush.bf16.msra.mxu0 0
  %283 = vmatpush.bf16.msra.mxu0 0
  %284 = vmatpush.bf16.msra.mxu0 %v250
  %285 = vmatpush.bf16.msra.mxu0 %v249
  %286 = vmatpush.bf16.msra.mxu0 %v248
  %287 = vmatpush.bf16.msra.mxu0 %v247
  %288 = vmatmul.bf16.gmra.mxu0 %v269
  %v289 = vpop.f32.mrf.mxu0
  %v290 = vadd.f32 %v253, %v289
  %v291 = vpop.f32.mrf.mxu0
  %v292 = vadd.f32 %v253, %v291
  %293 = vmatmul.bf16.gmra.mxu0 %v272
  %v294 = vpop.f32.mrf.mxu0
  %v295 = vadd.f32 %v253, %v294
  %v296 = vpop.f32.mrf.mxu0
  %v297 = vadd.f32 %v253, %v296
  %298 = vmatmul.bf16.gmra.mxu0 %v275
  %v299 = vpop.f32.mrf.mxu0
  %v300 = vadd.f32 %v253, %v299
  %v301 = vpop.f32.mrf.mxu0
  %v302 = vadd.f32 %v253, %v301
  %303 = vmatmul.bf16.gmra.mxu0 %v278
  %v304 = vpop.f32.mrf.mxu0
  %v305 = vadd.f32 %v253, %v304
  %v306 = vpop.f32.mrf.mxu0
  %v307 = vadd.f32 %v253, %v306
  %308 = vdwg.mxu0
  %v309 = vmul.f32 %v290, 0.5
  %v310 = vmul.f32 %v292, 0.5
  %v311 = vmul.f32 %v295, 0.5
  %v312 = vmul.f32 %v297, 0.5
  %v313 = vmul.f32 %v300, 0.5
  %v314 = vmul.f32 %v302, 0.5
  %v315 = vmul.f32 %v305, 0.5
  %v316 = vmul.f32 %v307, 0.5
  %v317 = vtanh.pop %v309
  %v318 = vtanh.pop %v310
  %v319 = vtanh.pop %v311
  %v320 = vtanh.pop %v312
  %v321 = vtanh.pop %v313
  %v322 = vtanh.pop %v314
  %v323 = vtanh.pop %v315
  %v324 = vtanh.pop %v316
  %v325 = vmul.f32 %v317, 0.5
  %v326 = vmul.f32 %v318, 0.5
  %v327 = vmul.f32 %v319, 0.5
  %v328 = vmul.f32 %v320, 0.5
  %v329 = vmul.f32 %v321, 0.5
  %v330 = vmul.f32 %v322, 0.5
  %v331 = vmul.f32 %v323, 0.5
  %v332 = vmul.f32 %v324, 0.5
  %v333 = vadd.f32 %v325, 0.5
  %v334 = vadd.f32 %v326, 0.5
  %v335 = vadd.f32 %v327, 0.5
  %v336 = vadd.f32 %v328, 0.5
  %v337 = vadd.f32 %v329, 0.5
  %v338 = vadd.f32 %v330, 0.5
  %v339 = vadd.f32 %v331, 0.5
  %v340 = vadd.f32 %v332, 0.5
  %v341 = vmul.f32 %v290, %v333
  %v342 = vmul.f32 %v292, %v334
  %v343 = vmul.f32 %v295, %v335
  %v344 = vmul.f32 %v297, %v336
  %v345 = vmul.f32 %v300, %v337
  %v346 = vmul.f32 %v302, %v338
  %v347 = vmul.f32 %v305, %v339
  %v348 = vmul.f32 %v307, %v340
  %v349 = vld [vmem:[%s6] sm:$0xff]
  %v350 = vld [vmem:[%s6 + $0x8] sm:$0xff]
  %v351 = vld [vmem:[%s6 + $0x10] sm:$0xff]
  %v352 = vld [vmem:[%s6 + $0x18] sm:$0xff]
  %v353 = vld [vmem:[%s6 + $0x20] sm:$0xff]
  %v354 = vld [vmem:[%s6 + $0x28] sm:$0xff]
  %v355 = vld [vmem:[%s6 + $0x30] sm:$0xff]
  %v356 = vld [vmem:[%s6 + $0x38] sm:$0xff]
  %v357 = vpack.c.bf16 %v342, %v341
  %v358 = vpack.c.bf16 %v344, %v343
  %v359 = vpack.c.bf16 %v346, %v345
  %v360 = vpack.c.bf16 %v348, %v347
  %v361 = vpack.c.bf16 %v350, %v349
  %v362 = vpack.c.bf16 %v352, %v351
  %v363 = vpack.c.bf16 %v354, %v353
  %v364 = vpack.c.bf16 %v356, %v355
  %v365 = vld [vmem:[%s7] sm:$0x1]
  %v367 = vperm.slane %v365, 0
  %v370 = vsel %vm267, %v357, 0
  %v373 = vsel %vm267, %v358, 0
  %v376 = vsel %vm267, %v359, 0
  %v379 = vsel %vm267, %v360, 0
  %381 = vmatpush.bf16.msra.mxu0 0
  %382 = vmatpush.bf16.msra.mxu0 0
  %383 = vmatpush.bf16.msra.mxu0 0
  %384 = vmatpush.bf16.msra.mxu0 0
  %385 = vmatpush.bf16.msra.mxu0 %v364
  %386 = vmatpush.bf16.msra.mxu0 %v363
  %387 = vmatpush.bf16.msra.mxu0 %v362
  %388 = vmatpush.bf16.msra.mxu0 %v361
  %389 = vmatmul.bf16.gmra.mxu0 %v370
  %v390 = vpop.f32.mrf.mxu0
  %v391 = vadd.f32 %v367, %v390
  %v392 = vpop.f32.mrf.mxu0
  %v393 = vadd.f32 %v367, %v392
  %394 = vmatmul.bf16.gmra.mxu0 %v373
  %v395 = vpop.f32.mrf.mxu0
  %v396 = vadd.f32 %v367, %v395
  %v397 = vpop.f32.mrf.mxu0
  %v398 = vadd.f32 %v367, %v397
  %399 = vmatmul.bf16.gmra.mxu0 %v376
  %v400 = vpop.f32.mrf.mxu0
  %v401 = vadd.f32 %v367, %v400
  %v402 = vpop.f32.mrf.mxu0
  %v403 = vadd.f32 %v367, %v402
  %404 = vmatmul.bf16.gmra.mxu0 %v379
  %v405 = vpop.f32.mrf.mxu0
  %v406 = vadd.f32 %v367, %v405
  %v407 = vpop.f32.mrf.mxu0
  %v408 = vadd.f32 %v367, %v407
  %409 = vdwg.mxu0
  %v410 = vmul.f32 %v391, 0.5
  %v411 = vmul.f32 %v393, 0.5
  %v412 = vmul.f32 %v396, 0.5
  %v413 = vmul.f32 %v398, 0.5
  %v414 = vmul.f32 %v401, 0.5
  %v415 = vmul.f32 %v403, 0.5
  %v416 = vmul.f32 %v406, 0.5
  %v417 = vmul.f32 %v408, 0.5
  %v418 = vtanh.pop %v410
  %v419 = vtanh.pop %v411
  %v420 = vtanh.pop %v412
  %v421 = vtanh.pop %v413
  %v422 = vtanh.pop %v414
  %v423 = vtanh.pop %v415
  %v424 = vtanh.pop %v416
  %v425 = vtanh.pop %v417
  %v426 = vmul.f32 %v418, 0.5
  %v427 = vmul.f32 %v419, 0.5
  %v428 = vmul.f32 %v420, 0.5
  %v429 = vmul.f32 %v421, 0.5
  %v430 = vmul.f32 %v422, 0.5
  %v431 = vmul.f32 %v423, 0.5
  %v432 = vmul.f32 %v424, 0.5
  %v433 = vmul.f32 %v425, 0.5
  %v434 = vadd.f32 %v426, 0.5
  %v435 = vadd.f32 %v427, 0.5
  %v436 = vadd.f32 %v428, 0.5
  %v437 = vadd.f32 %v429, 0.5
  %v438 = vadd.f32 %v430, 0.5
  %v439 = vadd.f32 %v431, 0.5
  %v440 = vadd.f32 %v432, 0.5
  %v441 = vadd.f32 %v433, 0.5
  %v442 = vmul.f32 %v391, %v434
  %v443 = vmul.f32 %v393, %v435
  %v444 = vmul.f32 %v396, %v436
  %v445 = vmul.f32 %v398, %v437
  %v446 = vmul.f32 %v401, %v438
  %v447 = vmul.f32 %v403, %v439
  %v448 = vmul.f32 %v406, %v440
  %v449 = vmul.f32 %v408, %v441
  %458 = vrot.lane.b32.xlu0 %v442, 64
  %v459 = vpop.permute.xlu0 %458
  %460 = vrot.lane.b32.xlu0 %v443, 64
  %v461 = vpop.permute.xlu0 %460
  %462 = vrot.lane.b32.xlu0 %v444, 64
  %v463 = vpop.permute.xlu0 %462
  %464 = vrot.lane.b32.xlu0 %v445, 64
  %v465 = vpop.permute.xlu0 %464
  %466 = vrot.lane.b32.xlu0 %v446, 64
  %v467 = vpop.permute.xlu0 %466
  %468 = vrot.lane.b32.xlu0 %v447, 64
  %v469 = vpop.permute.xlu0 %468
  %470 = vrot.lane.b32.xlu0 %v448, 64
  %v471 = vpop.permute.xlu0 %470
  %472 = vrot.lane.b32.xlu0 %v449, 64
  %v473 = vpop.permute.xlu0 %472
  %v482 = vadd.f32 %v227, %v459
  %v483 = vadd.f32 %v228, %v461
  %v484 = vadd.f32 %v229, %v463
  %v485 = vadd.f32 %v230, %v465
  %v486 = vadd.f32 %v231, %v467
  %v487 = vadd.f32 %v232, %v469
  %v488 = vadd.f32 %v233, %v471
  %v489 = vadd.f32 %v234, %v473
  %v490 = vld [vmem:[%s8] sm:$0xff]
  %v491 = vld [vmem:[%s8 + $0x8] sm:$0xff]
  %v492 = vld [vmem:[%s8 + $0x10] sm:$0xff]
  %v493 = vld [vmem:[%s8 + $0x18] sm:$0xff]
  %v494 = vld [vmem:[%s8 + $0x20] sm:$0xff]
  %v495 = vld [vmem:[%s8 + $0x28] sm:$0xff]
  %v496 = vld [vmem:[%s8 + $0x30] sm:$0xff]
  %v497 = vld [vmem:[%s8 + $0x38] sm:$0xff]
  %v498 = vpack.c.bf16 %v483, %v482
  %v499 = vpack.c.bf16 %v485, %v484
  %v500 = vpack.c.bf16 %v487, %v486
  %v501 = vpack.c.bf16 %v489, %v488
  %v502 = vpack.c.bf16 %v491, %v490
  %v503 = vpack.c.bf16 %v493, %v492
  %v504 = vpack.c.bf16 %v495, %v494
  %v505 = vpack.c.bf16 %v497, %v496
  %v506 = vld [vmem:[%s9] sm:$0x1]
  %v508 = vperm.slane %v506, 0
  %514 = vrot.lane.b32.xlu0 %v498, 64
  %v515 = vpop.permute.xlu0 %514
  %516 = vrot.lane.b32.xlu0 %v499, 64
  %v517 = vpop.permute.xlu0 %516
  %518 = vrot.lane.b32.xlu0 %v500, 64
  %v519 = vpop.permute.xlu0 %518
  %520 = vrot.lane.b32.xlu0 %v501, 64
  %v521 = vpop.permute.xlu0 %520
  %v523 = vsel %vm267, %v515, 0
  %v526 = vsel %vm267, %v517, 0
  %v529 = vsel %vm267, %v519, 0
  %v532 = vsel %vm267, %v521, 0
  %534 = vmatpush.bf16.msra.mxu0 0
  %535 = vmatpush.bf16.msra.mxu0 0
  %536 = vmatpush.bf16.msra.mxu0 0
  %537 = vmatpush.bf16.msra.mxu0 0
  %538 = vmatpush.bf16.msra.mxu0 %v505
  %539 = vmatpush.bf16.msra.mxu0 %v504
  %540 = vmatpush.bf16.msra.mxu0 %v503
  %541 = vmatpush.bf16.msra.mxu0 %v502
  %542 = vmatmul.bf16.gmra.mxu0 %v523
  %v543 = vpop.f32.mrf.mxu0
  %v544 = vadd.f32 %v508, %v543
  %v545 = vpop.f32.mrf.mxu0
  %v546 = vadd.f32 %v508, %v545
  %547 = vmatmul.bf16.gmra.mxu0 %v526
  %v548 = vpop.f32.mrf.mxu0
  %v549 = vadd.f32 %v508, %v548
  %v550 = vpop.f32.mrf.mxu0
  %v551 = vadd.f32 %v508, %v550
  %552 = vmatmul.bf16.gmra.mxu0 %v529
  %v553 = vpop.f32.mrf.mxu0
  %v554 = vadd.f32 %v508, %v553
  %v555 = vpop.f32.mrf.mxu0
  %v556 = vadd.f32 %v508, %v555
  %557 = vmatmul.bf16.gmra.mxu0 %v532
  %v558 = vpop.f32.mrf.mxu0
  %v559 = vadd.f32 %v508, %v558
  %v560 = vpop.f32.mrf.mxu0
  %v561 = vadd.f32 %v508, %v560
  %562 = vdwg.mxu0
  %v563 = vmul.f32 %v544, 0.5
  %v564 = vmul.f32 %v546, 0.5
  %v565 = vmul.f32 %v549, 0.5
  %v566 = vmul.f32 %v551, 0.5
  %v567 = vmul.f32 %v554, 0.5
  %v568 = vmul.f32 %v556, 0.5
  %v569 = vmul.f32 %v559, 0.5
  %v570 = vmul.f32 %v561, 0.5
  %v571 = vtanh.pop %v563
  %v572 = vtanh.pop %v564
  %v573 = vtanh.pop %v565
  %v574 = vtanh.pop %v566
  %v575 = vtanh.pop %v567
  %v576 = vtanh.pop %v568
  %v577 = vtanh.pop %v569
  %v578 = vtanh.pop %v570
  %v579 = vmul.f32 %v571, 0.5
  %v580 = vmul.f32 %v572, 0.5
  %v581 = vmul.f32 %v573, 0.5
  %v582 = vmul.f32 %v574, 0.5
  %v583 = vmul.f32 %v575, 0.5
  %v584 = vmul.f32 %v576, 0.5
  %v585 = vmul.f32 %v577, 0.5
  %v586 = vmul.f32 %v578, 0.5
  %v587 = vadd.f32 %v579, 0.5
  %v588 = vadd.f32 %v580, 0.5
  %v589 = vadd.f32 %v581, 0.5
  %v590 = vadd.f32 %v582, 0.5
  %v591 = vadd.f32 %v583, 0.5
  %v592 = vadd.f32 %v584, 0.5
  %v593 = vadd.f32 %v585, 0.5
  %v594 = vadd.f32 %v586, 0.5
  %v595 = vmul.f32 %v544, %v587
  %v596 = vmul.f32 %v546, %v588
  %v597 = vmul.f32 %v549, %v589
  %v598 = vmul.f32 %v551, %v590
  %v599 = vmul.f32 %v554, %v591
  %v600 = vmul.f32 %v556, %v592
  %v601 = vmul.f32 %v559, %v593
  %v602 = vmul.f32 %v561, %v594
  %v603 = vadd.f32 %v595, %v71
  %v604 = vadd.f32 %v596, %v72
  %v605 = vadd.f32 %v597, %v73
  %v606 = vadd.f32 %v598, %v74
  %v607 = vadd.f32 %v599, %v75
  %v608 = vadd.f32 %v600, %v76
  %v609 = vadd.f32 %v601, %v77
  %v610 = vadd.f32 %v602, %v78
  %v611 = vld [vmem:[%s10] sm:$0xff]
  %v612 = vld [vmem:[%s10 + $0x8] sm:$0xff]
  %v613 = vld [vmem:[%s10 + $0x10] sm:$0xff]
  %v614 = vld [vmem:[%s10 + $0x18] sm:$0xff]
  %v615 = vld [vmem:[%s10 + $0x20] sm:$0xff]
  %v616 = vld [vmem:[%s10 + $0x28] sm:$0xff]
  %v617 = vld [vmem:[%s10 + $0x30] sm:$0xff]
  %v618 = vld [vmem:[%s10 + $0x38] sm:$0xff]
  %v619 = vpack.c.bf16 %v604, %v603
  %v620 = vpack.c.bf16 %v606, %v605
  %v621 = vpack.c.bf16 %v608, %v607
  %v622 = vpack.c.bf16 %v610, %v609
  %v623 = vpack.c.bf16 %v612, %v611
  %v624 = vpack.c.bf16 %v614, %v613
  %v625 = vpack.c.bf16 %v616, %v615
  %v626 = vpack.c.bf16 %v618, %v617
  %v627 = vld [vmem:[%s11] sm:$0x1]
  %v629 = vperm.slane %v627, 0
  %v632 = vsel %vm267, %v619, 0
  %v635 = vsel %vm267, %v620, 0
  %v638 = vsel %vm267, %v621, 0
  %v641 = vsel %vm267, %v622, 0
  %643 = vmatpush.bf16.msra.mxu0 0
  %644 = vmatpush.bf16.msra.mxu0 0
  %645 = vmatpush.bf16.msra.mxu0 0
  %646 = vmatpush.bf16.msra.mxu0 0
  %647 = vmatpush.bf16.msra.mxu0 %v626
  %648 = vmatpush.bf16.msra.mxu0 %v625
  %649 = vmatpush.bf16.msra.mxu0 %v624
  %650 = vmatpush.bf16.msra.mxu0 %v623
  %651 = vmatmul.bf16.gmra.mxu0 %v632
  %v652 = vpop.f32.mrf.mxu0
  %v653 = vadd.f32 %v629, %v652
  %v654 = vpop.f32.mrf.mxu0
  %v655 = vadd.f32 %v629, %v654
  %656 = vmatmul.bf16.gmra.mxu0 %v635
  %v657 = vpop.f32.mrf.mxu0
  %v658 = vadd.f32 %v629, %v657
  %v659 = vpop.f32.mrf.mxu0
  %v660 = vadd.f32 %v629, %v659
  %661 = vmatmul.bf16.gmra.mxu0 %v638
  %v662 = vpop.f32.mrf.mxu0
  %v663 = vadd.f32 %v629, %v662
  %v664 = vpop.f32.mrf.mxu0
  %v665 = vadd.f32 %v629, %v664
  %666 = vmatmul.bf16.gmra.mxu0 %v641
  %v667 = vpop.f32.mrf.mxu0
  %v668 = vadd.f32 %v629, %v667
  %v669 = vpop.f32.mrf.mxu0
  %v670 = vadd.f32 %v629, %v669
  %671 = vdwg.mxu0
  %v672 = vmul.f32 %v653, 0.5
  %v673 = vmul.f32 %v655, 0.5
  %v674 = vmul.f32 %v658, 0.5
  %v675 = vmul.f32 %v660, 0.5
  %v676 = vmul.f32 %v663, 0.5
  %v677 = vmul.f32 %v665, 0.5
  %v678 = vmul.f32 %v668, 0.5
  %v679 = vmul.f32 %v670, 0.5
  %v680 = vtanh.pop %v672
  %v681 = vtanh.pop %v673
  %v682 = vtanh.pop %v674
  %v683 = vtanh.pop %v675
  %v684 = vtanh.pop %v676
  %v685 = vtanh.pop %v677
  %v686 = vtanh.pop %v678
  %v687 = vtanh.pop %v679
  %v688 = vmul.f32 %v680, 0.5
  %v689 = vmul.f32 %v681, 0.5
  %v690 = vmul.f32 %v682, 0.5
  %v691 = vmul.f32 %v683, 0.5
  %v692 = vmul.f32 %v684, 0.5
  %v693 = vmul.f32 %v685, 0.5
  %v694 = vmul.f32 %v686, 0.5
  %v695 = vmul.f32 %v687, 0.5
  %v696 = vadd.f32 %v688, 0.5
  %v697 = vadd.f32 %v689, 0.5
  %v698 = vadd.f32 %v690, 0.5
  %v699 = vadd.f32 %v691, 0.5
  %v700 = vadd.f32 %v692, 0.5
  %v701 = vadd.f32 %v693, 0.5
  %v702 = vadd.f32 %v694, 0.5
  %v703 = vadd.f32 %v695, 0.5
  %v704 = vmul.f32 %v653, %v696
  %v705 = vmul.f32 %v655, %v697
  %v706 = vmul.f32 %v658, %v698
  %v707 = vmul.f32 %v660, %v699
  %v708 = vmul.f32 %v663, %v700
  %v709 = vmul.f32 %v665, %v701
  %v710 = vmul.f32 %v668, %v702
  %v711 = vmul.f32 %v670, %v703
  %v712 = vld [vmem:[%s12] sm:$0xff]
  %v713 = vld [vmem:[%s12 + $0x8] sm:$0xff]
  %v714 = vld [vmem:[%s12 + $0x10] sm:$0xff]
  %v715 = vld [vmem:[%s12 + $0x18] sm:$0xff]
  %v716 = vld [vmem:[%s12 + $0x20] sm:$0xff]
  %v717 = vld [vmem:[%s12 + $0x28] sm:$0xff]
  %v718 = vld [vmem:[%s12 + $0x30] sm:$0xff]
  %v719 = vld [vmem:[%s12 + $0x38] sm:$0xff]
  %v720 = vpack.c.bf16 %v705, %v704
  %v721 = vpack.c.bf16 %v707, %v706
  %v722 = vpack.c.bf16 %v709, %v708
  %v723 = vpack.c.bf16 %v711, %v710
  %v724 = vpack.c.bf16 %v713, %v712
  %v725 = vpack.c.bf16 %v715, %v714
  %v726 = vpack.c.bf16 %v717, %v716
  %v727 = vpack.c.bf16 %v719, %v718
  %v728 = vld [vmem:[%s13] sm:$0x1]
  %v730 = vperm.slane %v728, 0
  %v733 = vsel %vm267, %v720, 0
  %v736 = vsel %vm267, %v721, 0
  %v739 = vsel %vm267, %v722, 0
  %v742 = vsel %vm267, %v723, 0
  %744 = vmatpush.bf16.msra.mxu0 0
  %745 = vmatpush.bf16.msra.mxu0 0
  %746 = vmatpush.bf16.msra.mxu0 0
  %747 = vmatpush.bf16.msra.mxu0 0
  %748 = vmatpush.bf16.msra.mxu0 %v727
  %749 = vmatpush.bf16.msra.mxu0 %v726
  %750 = vmatpush.bf16.msra.mxu0 %v725
  %751 = vmatpush.bf16.msra.mxu0 %v724
  %752 = vmatmul.bf16.gmra.mxu0 %v733
  %v753 = vpop.f32.mrf.mxu0
  %v754 = vadd.f32 %v730, %v753
  %v755 = vpop.f32.mrf.mxu0
  %v756 = vadd.f32 %v730, %v755
  %757 = vmatmul.bf16.gmra.mxu0 %v736
  %v758 = vpop.f32.mrf.mxu0
  %v759 = vadd.f32 %v730, %v758
  %v760 = vpop.f32.mrf.mxu0
  %v761 = vadd.f32 %v730, %v760
  %762 = vmatmul.bf16.gmra.mxu0 %v739
  %v763 = vpop.f32.mrf.mxu0
  %v764 = vadd.f32 %v730, %v763
  %v765 = vpop.f32.mrf.mxu0
  %v766 = vadd.f32 %v730, %v765
  %767 = vmatmul.bf16.gmra.mxu0 %v742
  %v768 = vpop.f32.mrf.mxu0
  %v769 = vadd.f32 %v730, %v768
  %v770 = vpop.f32.mrf.mxu0
  %v771 = vadd.f32 %v730, %v770
  %772 = vdwg.mxu0
  %v773 = vmul.f32 %v754, 0.5
  %v774 = vmul.f32 %v756, 0.5
  %v775 = vmul.f32 %v759, 0.5
  %v776 = vmul.f32 %v761, 0.5
  %v777 = vmul.f32 %v764, 0.5
  %v778 = vmul.f32 %v766, 0.5
  %v779 = vmul.f32 %v769, 0.5
  %v780 = vmul.f32 %v771, 0.5
  %v781 = vtanh.pop %v773
  %v782 = vtanh.pop %v774
  %v783 = vtanh.pop %v775
  %v784 = vtanh.pop %v776
  %v785 = vtanh.pop %v777
  %v786 = vtanh.pop %v778
  %v787 = vtanh.pop %v779
  %v788 = vtanh.pop %v780
  %v789 = vmul.f32 %v781, 0.5
  %v790 = vmul.f32 %v782, 0.5
  %v791 = vmul.f32 %v783, 0.5
  %v792 = vmul.f32 %v784, 0.5
  %v793 = vmul.f32 %v785, 0.5
  %v794 = vmul.f32 %v786, 0.5
  %v795 = vmul.f32 %v787, 0.5
  %v796 = vmul.f32 %v788, 0.5
  %v797 = vadd.f32 %v789, 0.5
  %v798 = vadd.f32 %v790, 0.5
  %v799 = vadd.f32 %v791, 0.5
  %v800 = vadd.f32 %v792, 0.5
  %v801 = vadd.f32 %v793, 0.5
  %v802 = vadd.f32 %v794, 0.5
  %v803 = vadd.f32 %v795, 0.5
  %v804 = vadd.f32 %v796, 0.5
  %v805 = vmul.f32 %v754, %v797
  %v806 = vmul.f32 %v756, %v798
  %v807 = vmul.f32 %v759, %v799
  %v808 = vmul.f32 %v761, %v800
  %v809 = vmul.f32 %v764, %v801
  %v810 = vmul.f32 %v766, %v802
  %v811 = vmul.f32 %v769, %v803
  %v812 = vmul.f32 %v771, %v804
  %v813 = vadd.f32 %v603, %v805
  %v814 = vadd.f32 %v604, %v806
  %v815 = vadd.f32 %v605, %v807
  %v816 = vadd.f32 %v606, %v808
  %v817 = vadd.f32 %v607, %v809
  %v818 = vadd.f32 %v608, %v810
  %v819 = vadd.f32 %v609, %v811
  %v820 = vadd.f32 %v610, %v812
  %v821 = vld [vmem:[%s14] sm:$0xff]
  %v822 = vld [vmem:[%s14 + $0x8] sm:$0xff]
  %v823 = vld [vmem:[%s14 + $0x10] sm:$0xff]
  %v824 = vld [vmem:[%s14 + $0x18] sm:$0xff]
  %v825 = vld [vmem:[%s14 + $0x20] sm:$0xff]
  %v826 = vld [vmem:[%s14 + $0x28] sm:$0xff]
  %v827 = vld [vmem:[%s14 + $0x30] sm:$0xff]
  %v828 = vld [vmem:[%s14 + $0x38] sm:$0xff]
  %v829 = vpack.c.bf16 %v814, %v813
  %v830 = vpack.c.bf16 %v816, %v815
  %v831 = vpack.c.bf16 %v818, %v817
  %v832 = vpack.c.bf16 %v820, %v819
  %v833 = vpack.c.bf16 %v822, %v821
  %v834 = vpack.c.bf16 %v824, %v823
  %v835 = vpack.c.bf16 %v826, %v825
  %v836 = vpack.c.bf16 %v828, %v827
  %v837 = vld [vmem:[%s15] sm:$0x1]
  %v839 = vperm.slane %v837, 0
  %v842 = vsel %vm267, %v829, 0
  %v845 = vsel %vm267, %v830, 0
  %v848 = vsel %vm267, %v831, 0
  %v851 = vsel %vm267, %v832, 0
  %853 = vmatpush.bf16.msra.mxu0 0
  %854 = vmatpush.bf16.msra.mxu0 0
  %855 = vmatpush.bf16.msra.mxu0 0
  %856 = vmatpush.bf16.msra.mxu0 0
  %857 = vmatpush.bf16.msra.mxu0 %v836
  %858 = vmatpush.bf16.msra.mxu0 %v835
  %859 = vmatpush.bf16.msra.mxu0 %v834
  %860 = vmatpush.bf16.msra.mxu0 %v833
  %861 = vmatmul.bf16.gmra.mxu0 %v842
  %v862 = vpop.f32.mrf.mxu0
  %v863 = vadd.f32 %v839, %v862
  %v864 = vpop.f32.mrf.mxu0
  %v865 = vadd.f32 %v839, %v864
  %866 = vmatmul.bf16.gmra.mxu0 %v845
  %v867 = vpop.f32.mrf.mxu0
  %v868 = vadd.f32 %v839, %v867
  %v869 = vpop.f32.mrf.mxu0
  %v870 = vadd.f32 %v839, %v869
  %871 = vmatmul.bf16.gmra.mxu0 %v848
  %v872 = vpop.f32.mrf.mxu0
  %v873 = vadd.f32 %v839, %v872
  %v874 = vpop.f32.mrf.mxu0
  %v875 = vadd.f32 %v839, %v874
  %876 = vmatmul.bf16.gmra.mxu0 %v851
  %v877 = vpop.f32.mrf.mxu0
  %v878 = vadd.f32 %v839, %v877
  %v879 = vpop.f32.mrf.mxu0
  %v880 = vadd.f32 %v839, %v879
  %881 = vdwg.mxu0
  %v882 = vmul.f32 %v863, 0.5
  %v883 = vmul.f32 %v865, 0.5
  %v884 = vmul.f32 %v868, 0.5
  %v885 = vmul.f32 %v870, 0.5
  %v886 = vmul.f32 %v873, 0.5
  %v887 = vmul.f32 %v875, 0.5
  %v888 = vmul.f32 %v878, 0.5
  %v889 = vmul.f32 %v880, 0.5
  %v890 = vtanh.pop %v882
  %v891 = vtanh.pop %v883
  %v892 = vtanh.pop %v884
  %v893 = vtanh.pop %v885
  %v894 = vtanh.pop %v886
  %v895 = vtanh.pop %v887
  %v896 = vtanh.pop %v888
  %v897 = vtanh.pop %v889
  %v898 = vmul.f32 %v890, 0.5
  %v899 = vmul.f32 %v891, 0.5
  %v900 = vmul.f32 %v892, 0.5
  %v901 = vmul.f32 %v893, 0.5
  %v902 = vmul.f32 %v894, 0.5
  %v903 = vmul.f32 %v895, 0.5
  %v904 = vmul.f32 %v896, 0.5
  %v905 = vmul.f32 %v897, 0.5
  %v906 = vadd.f32 %v898, 0.5
  %v907 = vadd.f32 %v899, 0.5
  %v908 = vadd.f32 %v900, 0.5
  %v909 = vadd.f32 %v901, 0.5
  %v910 = vadd.f32 %v902, 0.5
  %v911 = vadd.f32 %v903, 0.5
  %v912 = vadd.f32 %v904, 0.5
  %v913 = vadd.f32 %v905, 0.5
  %v914 = vmul.f32 %v863, %v906
  %v915 = vmul.f32 %v865, %v907
  %v916 = vmul.f32 %v868, %v908
  %v917 = vmul.f32 %v870, %v909
  %v918 = vmul.f32 %v873, %v910
  %v919 = vmul.f32 %v875, %v911
  %v920 = vmul.f32 %v878, %v912
  %v921 = vmul.f32 %v880, %v913
  %v922 = vld [vmem:[%s16] sm:$0xff]
  %v923 = vld [vmem:[%s16 + $0x8] sm:$0xff]
  %v924 = vld [vmem:[%s16 + $0x10] sm:$0xff]
  %v925 = vld [vmem:[%s16 + $0x18] sm:$0xff]
  %v926 = vld [vmem:[%s16 + $0x20] sm:$0xff]
  %v927 = vld [vmem:[%s16 + $0x28] sm:$0xff]
  %v928 = vld [vmem:[%s16 + $0x30] sm:$0xff]
  %v929 = vld [vmem:[%s16 + $0x38] sm:$0xff]
  %v930 = vpack.c.bf16 %v915, %v914
  %v931 = vpack.c.bf16 %v917, %v916
  %v932 = vpack.c.bf16 %v919, %v918
  %v933 = vpack.c.bf16 %v921, %v920
  %v934 = vpack.c.bf16 %v923, %v922
  %v935 = vpack.c.bf16 %v925, %v924
  %v936 = vpack.c.bf16 %v927, %v926
  %v937 = vpack.c.bf16 %v929, %v928
  %v938 = vld [vmem:[%s17] sm:$0x1]
  %v940 = vperm.slane %v938, 0
  %v943 = vsel %vm267, %v930, 0
  %v946 = vsel %vm267, %v931, 0
  %v949 = vsel %vm267, %v932, 0
  %v952 = vsel %vm267, %v933, 0
  %954 = vmatpush.bf16.msra.mxu0 0
  %955 = vmatpush.bf16.msra.mxu0 0
  %956 = vmatpush.bf16.msra.mxu0 0
  %957 = vmatpush.bf16.msra.mxu0 0
  %958 = vmatpush.bf16.msra.mxu0 %v937
  %959 = vmatpush.bf16.msra.mxu0 %v936
  %960 = vmatpush.bf16.msra.mxu0 %v935
  %961 = vmatpush.bf16.msra.mxu0 %v934
  %962 = vmatmul.bf16.gmra.mxu0 %v943
  %v963 = vpop.f32.mrf.mxu0
  %v964 = vadd.f32 %v940, %v963
  %v965 = vpop.f32.mrf.mxu0
  %v966 = vadd.f32 %v940, %v965
  %967 = vmatmul.bf16.gmra.mxu0 %v946
  %v968 = vpop.f32.mrf.mxu0
  %v969 = vadd.f32 %v940, %v968
  %v970 = vpop.f32.mrf.mxu0
  %v971 = vadd.f32 %v940, %v970
  %972 = vmatmul.bf16.gmra.mxu0 %v949
  %v973 = vpop.f32.mrf.mxu0
  %v974 = vadd.f32 %v940, %v973
  %v975 = vpop.f32.mrf.mxu0
  %v976 = vadd.f32 %v940, %v975
  %977 = vmatmul.bf16.gmra.mxu0 %v952
  %v978 = vpop.f32.mrf.mxu0
  %v979 = vadd.f32 %v940, %v978
  %v980 = vpop.f32.mrf.mxu0
  %v981 = vadd.f32 %v940, %v980
  %982 = vdwg.mxu0
  %v983 = vmul.f32 %v964, 0.5
  %v984 = vmul.f32 %v966, 0.5
  %v985 = vmul.f32 %v969, 0.5
  %v986 = vmul.f32 %v971, 0.5
  %v987 = vmul.f32 %v974, 0.5
  %v988 = vmul.f32 %v976, 0.5
  %v989 = vmul.f32 %v979, 0.5
  %v990 = vmul.f32 %v981, 0.5
  %v991 = vtanh.pop %v983
  %v992 = vtanh.pop %v984
  %v993 = vtanh.pop %v985
  %v994 = vtanh.pop %v986
  %v995 = vtanh.pop %v987
  %v996 = vtanh.pop %v988
  %v997 = vtanh.pop %v989
  %v998 = vtanh.pop %v990
  %v999 = vmul.f32 %v991, 0.5
  %v1000 = vmul.f32 %v992, 0.5
  %v1001 = vmul.f32 %v993, 0.5
  %v1002 = vmul.f32 %v994, 0.5
  %v1003 = vmul.f32 %v995, 0.5
  %v1004 = vmul.f32 %v996, 0.5
  %v1005 = vmul.f32 %v997, 0.5
  %v1006 = vmul.f32 %v998, 0.5
  %v1007 = vadd.f32 %v999, 0.5
  %v1008 = vadd.f32 %v1000, 0.5
  %v1009 = vadd.f32 %v1001, 0.5
  %v1010 = vadd.f32 %v1002, 0.5
  %v1011 = vadd.f32 %v1003, 0.5
  %v1012 = vadd.f32 %v1004, 0.5
  %v1013 = vadd.f32 %v1005, 0.5
  %v1014 = vadd.f32 %v1006, 0.5
  %v1015 = vmul.f32 %v964, %v1007
  %v1016 = vmul.f32 %v966, %v1008
  %v1017 = vmul.f32 %v969, %v1009
  %v1018 = vmul.f32 %v971, %v1010
  %v1019 = vmul.f32 %v974, %v1011
  %v1020 = vmul.f32 %v976, %v1012
  %v1021 = vmul.f32 %v979, %v1013
  %v1022 = vmul.f32 %v981, %v1014
  %v1023 = vadd.f32 %v813, %v1015
  %v1024 = vadd.f32 %v814, %v1016
  %v1025 = vadd.f32 %v815, %v1017
  %v1026 = vadd.f32 %v816, %v1018
  %v1027 = vadd.f32 %v817, %v1019
  %v1028 = vadd.f32 %v818, %v1020
  %v1029 = vadd.f32 %v819, %v1021
  %v1030 = vadd.f32 %v820, %v1022
  %v1031 = vld [vmem:[%s2] sm:$0xf]
  %v1032 = vld [vmem:[%s2 + $0x4] sm:$0xf]
  %v1033 = vld [vmem:[%s2 + $0x8] sm:$0xf]
  %v1034 = vld [vmem:[%s2 + $0xc] sm:$0xf]
  %v1035 = vld [vmem:[%s2 + $0x10] sm:$0xf]
  %v1036 = vld [vmem:[%s2 + $0x14] sm:$0xf]
  %v1037 = vld [vmem:[%s2 + $0x18] sm:$0xf]
  %v1038 = vld [vmem:[%s2 + $0x1c] sm:$0xf]
  %v1039 = vld [vmem:[%s18] sm:$0x3f]
  %v1040 = vpack.c.bf16 %v1039, %v1039
  %v1049 = vunpack.c.l.b16 %v1031
  %v1050 = vunpack.c.l.b16 %v1032
  %v1051 = vunpack.c.l.b16 %v1033
  %v1052 = vunpack.c.l.b16 %v1034
  %v1053 = vunpack.c.l.b16 %v1035
  %v1054 = vunpack.c.l.b16 %v1036
  %v1055 = vunpack.c.l.b16 %v1037
  %v1056 = vunpack.c.l.b16 %v1038
  %v1057 = vpack.c.b16 %v1050, %v1049
  %v1058 = vpack.c.b16 %v1052, %v1051
  %v1059 = vpack.c.b16 %v1054, %v1053
  %v1060 = vpack.c.b16 %v1056, %v1055
  %vm1061 = vcmask 48128
  %v1063 = vsel %vm1061, %v1057, 0
  %v1066 = vsel %vm1061, %v1058, 0
  %v1069 = vsel %vm1061, %v1059, 0
  %v1072 = vsel %vm1061, %v1060, 0
  %vm1074 = vcmask 1042432
  %v1076 = vsel %vm1074, %v1040, 0
  %1078 = vmatpush.bf16.msra.mxu0 0
  %1079 = vmatpush.bf16.msra.mxu0 0
  %1080 = vmatpush.bf16.msra.mxu0 0
  %1081 = vmatpush.bf16.msra.mxu0 0
  %1082 = vmatpush.bf16.msra.mxu0 0
  %1083 = vmatpush.bf16.msra.mxu0 0
  %1084 = vmatpush.bf16.msra.mxu0 0
  %1085 = vmatpush.bf16.msra.mxu0 %v1076
  %1086 = vmatmul.bf16.gmra.mxu0 %v1063
  %v1087 = vpop.f32.mrf.mxu0
  %v1088 = vadd.f32 0.0, %v1087
  %v1089 = vpop.f32.mrf.mxu0
  %v1090 = vadd.f32 0.0, %v1089
  %1091 = vmatmul.bf16.gmra.mxu0 %v1066
  %v1092 = vpop.f32.mrf.mxu0
  %v1093 = vadd.f32 0.0, %v1092
  %v1094 = vpop.f32.mrf.mxu0
  %v1095 = vadd.f32 0.0, %v1094
  %1096 = vmatmul.bf16.gmra.mxu0 %v1069
  %v1097 = vpop.f32.mrf.mxu0
  %v1098 = vadd.f32 0.0, %v1097
  %v1099 = vpop.f32.mrf.mxu0
  %v1100 = vadd.f32 0.0, %v1099
  %1101 = vmatmul.bf16.gmra.mxu0 %v1072
  %v1102 = vpop.f32.mrf.mxu0
  %v1103 = vadd.f32 0.0, %v1102
  %v1104 = vpop.f32.mrf.mxu0
  %v1105 = vadd.f32 0.0, %v1104
  %1106 = vdwg.mxu0
  %v1107 = vmul.f32 %v1088, %v1023
  %v1108 = vmul.f32 %v1090, %v1024
  %v1109 = vmul.f32 %v1093, %v1025
  %v1110 = vmul.f32 %v1095, %v1026
  %v1111 = vmul.f32 %v1098, %v1027
  %v1112 = vmul.f32 %v1100, %v1028
  %v1113 = vmul.f32 %v1103, %v1029
  %v1114 = vmul.f32 %v1105, %v1030
  %v1115 = vpack.c.bf16 %v1107, %v1107
  %v1116 = vpack.c.bf16 %v1108, %v1108
  %v1117 = vpack.c.bf16 %v1109, %v1109
  %v1118 = vpack.c.bf16 %v1110, %v1110
  %v1119 = vpack.c.bf16 %v1111, %v1111
  %v1120 = vpack.c.bf16 %v1112, %v1112
  %v1121 = vpack.c.bf16 %v1113, %v1113
  %v1122 = vpack.c.bf16 %v1114, %v1114
  %vm1123 = vcmask 519168
  %1124 = vst.msk [vmem:[%s19] sm:$0xf] %vm1123, %v1115
  %1125 = vst.msk [vmem:[%s19 + $0x4] sm:$0xf] %vm1123, %v1116
  %1126 = vst.msk [vmem:[%s19 + $0x8] sm:$0xf] %vm1123, %v1117
  %1127 = vst.msk [vmem:[%s19 + $0xc] sm:$0xf] %vm1123, %v1118
  %1128 = vst.msk [vmem:[%s19 + $0x10] sm:$0xf] %vm1123, %v1119
  %1129 = vst.msk [vmem:[%s19 + $0x14] sm:$0xf] %vm1123, %v1120
  %1130 = vst.msk [vmem:[%s19 + $0x18] sm:$0xf] %vm1123, %v1121
  %1131 = vst.msk [vmem:[%s19 + $0x1c] sm:$0xf] %vm1123, %v1122
  // Predicated region
  $region78: #{_lambda_.8} parent=0 // pred_check
    _
  $region79: #{_lambda_.8} parent=0 // pred_check_branch
    %1133 = sbr.rel (0) target = $region81
  $region80: #{_lambda_.8} parent=0 // pred_region
    _
  $region81: #{_lambda_.8} parent=0 // pred_fallthru
    _
  // Predicated region
  $region82: #{_lambda_.8} parent=0 // pred_check
    _
  $region83: #{_lambda_.8} parent=0 // pred_check_branch
    %1135 = sbr.rel (0) target = $region85
  $region84: #{_lambda_.8} parent=0 // pred_region
    _
  $region85: #{_lambda_.8} parent=0 // pred_fallthru
    _

// kernel: _lambda_.9
$region0: #{_lambda_.9}
  #allocation0 [shape = 'u32[]', space=smem, size = 0x4, offset = 0x4, fixed_abs, tag = 'smem constant byte address 0x4 - core index']
  #allocation1 [shape = 'u32[72,128]{1,0:T(1,128)}', space=vmem, size = 0x9000, scoped, tag = 'internal scratch']
  %s0 = inlined_call_operand.vmem [shape: f32[16,64], index: 0, kind: input, shape index: {}]
  %s1 = inlined_call_operand.vmem [shape: f32[16,64], index: 1, kind: input, shape index: {}]
  %s2 = inlined_call_operand.vmem [shape: f32[16,64], index: 2, kind: input, shape index: {}]
  %s3 = inlined_call_operand.vmem [shape: f32[3,64,64], index: 3, kind: input, shape index: {}]
  %s4 = inlined_call_operand.vmem [shape: f32[3,1,64], index: 4, kind: input, shape index: {}]
  %s5 = inlined_call_operand.vmem [shape: f32[3,64,64], index: 5, kind: input, shape index: {}]
  %s6 = inlined_call_operand.vmem [shape: f32[3,1,64], index: 6, kind: input, shape index: {}]
  %s7 = inlined_call_operand.vmem [shape: f32[3,64,64], index: 7, kind: input, shape index: {}]
  %s8 = inlined_call_operand.vmem [shape: f32[3,1,64], index: 8, kind: input, shape index: {}]
  %s9 = inlined_call_operand.vmem [shape: f32[3,64,4], index: 9, kind: input, shape index: {}]
  %s10 = inlined_call_operand.vmem [shape: f32[16,4], index: 10, kind: output, shape index: {}]
  %s11 = sld [smem:[#allocation0]]
  $region50: #{_lambda_.9} parent=0
    _
  %s13 = ssub.s32 1, %s11
  %s14 = scalar_select 0, %s13, %s11
  // Predicated region
  $region2: #{_lambda_.9} parent=0 // pred_check
    _
  $region3: #{_lambda_.9} parent=0 // pred_check_branch
    %16 = sbr.rel (0) target = $region5
  $region4: #{_lambda_.9} parent=0 // pred_region
    _
  $region5: #{_lambda_.9} parent=0 // pred_fallthru
    _
  // Predicated region
  $region6: #{_lambda_.9} parent=0 // pred_check
    _
  $region7: #{_lambda_.9} parent=0 // pred_check_branch
    %18 = sbr.rel (0) target = $region9
  $region8: #{_lambda_.9} parent=0 // pred_region
    _
  $region9: #{_lambda_.9} parent=0 // pred_fallthru
    _
  // Predicated region
  $region10: #{_lambda_.9} parent=0 // pred_check
    _
  $region11: #{_lambda_.9} parent=0 // pred_check_branch
    %20 = sbr.rel (0) target = $region13
  $region12: #{_lambda_.9} parent=0 // pred_region
    _
  $region13: #{_lambda_.9} parent=0 // pred_fallthru
    _
  // Predicated region
  $region14: #{_lambda_.9} parent=0 // pred_check
    _
  $region15: #{_lambda_.9} parent=0 // pred_check_branch
    %22 = sbr.rel (0) target = $region17
  $region16: #{_lambda_.9} parent=0 // pred_region
    _
  $region17: #{_lambda_.9} parent=0 // pred_fallthru
    _
  // Predicated region
  $region18: #{_lambda_.9} parent=0 // pred_check
    _
  $region19: #{_lambda_.9} parent=0 // pred_check_branch
    %24 = sbr.rel (0) target = $region21
  $region20: #{_lambda_.9} parent=0 // pred_region
    _
  $region21: #{_lambda_.9} parent=0 // pred_fallthru
    _
  // Predicated region
  $region22: #{_lambda_.9} parent=0 // pred_check
    _
  $region23: #{_lambda_.9} parent=0 // pred_check_branch
    %26 = sbr.rel (0) target = $region25
  $region24: #{_lambda_.9} parent=0 // pred_region
    _
  $region25: #{_lambda_.9} parent=0 // pred_fallthru
    _
  // Predicated region
  $region26: #{_lambda_.9} parent=0 // pred_check
    _
  $region27: #{_lambda_.9} parent=0 // pred_check_branch
    %28 = sbr.rel (0) target = $region29
  $region28: #{_lambda_.9} parent=0 // pred_region
    _
  $region29: #{_lambda_.9} parent=0 // pred_fallthru
    _
  // Predicated region
  $region30: #{_lambda_.9} parent=0 // pred_check
    _
  $region31: #{_lambda_.9} parent=0 // pred_check_branch
    %30 = sbr.rel (0) target = $region33
  $region32: #{_lambda_.9} parent=0 // pred_region
    _
  $region33: #{_lambda_.9} parent=0 // pred_fallthru
    _
  // Predicated region
  $region34: #{_lambda_.9} parent=0 // pred_check
    _
  $region35: #{_lambda_.9} parent=0 // pred_check_branch
    %32 = sbr.rel (0) target = $region37
  $region36: #{_lambda_.9} parent=0 // pred_region
    _
  $region37: #{_lambda_.9} parent=0 // pred_fallthru
    _
  // Predicated region
  $region38: #{_lambda_.9} parent=0 // pred_check
    _
  $region39: #{_lambda_.9} parent=0 // pred_check_branch
    %34 = sbr.rel (0) target = $region41
  $region40: #{_lambda_.9} parent=0 // pred_region
    _
  $region41: #{_lambda_.9} parent=0 // pred_fallthru
    _
  %v36 = vld [vmem:[%s0] sm:$0xff]
  %v37 = vld [vmem:[%s0 + $0x8] sm:$0xff]
  %v38 = vld [vmem:[%s3] sm:$0xff]
  %v39 = vld [vmem:[%s3 + $0x8] sm:$0xff]
  %v40 = vld [vmem:[%s3 + $0x10] sm:$0xff]
  %v41 = vld [vmem:[%s3 + $0x18] sm:$0xff]
  %v42 = vld [vmem:[%s3 + $0x20] sm:$0xff]
  %v43 = vld [vmem:[%s3 + $0x28] sm:$0xff]
  %v44 = vld [vmem:[%s3 + $0x30] sm:$0xff]
  %v45 = vld [vmem:[%s3 + $0x38] sm:$0xff]
  %v46 = vpack.c.bf16 %v37, %v36
  %v47 = vpack.c.bf16 %v39, %v38
  %v48 = vpack.c.bf16 %v41, %v40
  %v49 = vpack.c.bf16 %v43, %v42
  %v50 = vpack.c.bf16 %v45, %v44
  %v51 = vld [vmem:[%s4] sm:$0x1]
  %v53 = vperm.slane %v51, 0
  %vm55 = vcmask 523264
  %v57 = vsel %vm55, %v46, 0
  %59 = vmatpush.bf16.msra.mxu0 0
  %60 = vmatpush.bf16.msra.mxu0 0
  %61 = vmatpush.bf16.msra.mxu0 0
  %62 = vmatpush.bf16.msra.mxu0 0
  %63 = vmatpush.bf16.msra.mxu0 %v50
  %64 = vmatpush.bf16.msra.mxu0 %v49
  %65 = vmatpush.bf16.msra.mxu0 %v48
  %66 = vmatpush.bf16.msra.mxu0 %v47
  %67 = vmatmul.bf16.gmra.mxu0 %v57
  %v68 = vpop.f32.mrf.mxu0
  %v69 = vadd.f32 %v53, %v68
  %v70 = vpop.f32.mrf.mxu0
  %v71 = vadd.f32 %v53, %v70
  %72 = vdwg.mxu0
  %v73 = vld [vmem:[%s5] sm:$0xff]
  %v74 = vld [vmem:[%s5 + $0x8] sm:$0xff]
  %v75 = vld [vmem:[%s5 + $0x10] sm:$0xff]
  %v76 = vld [vmem:[%s5 + $0x18] sm:$0xff]
  %v77 = vld [vmem:[%s5 + $0x20] sm:$0xff]
  %v78 = vld [vmem:[%s5 + $0x28] sm:$0xff]
  %v79 = vld [vmem:[%s5 + $0x30] sm:$0xff]
  %v80 = vld [vmem:[%s5 + $0x38] sm:$0xff]
  %v81 = vpack.c.bf16 %v71, %v69
  %v82 = vpack.c.bf16 %v74, %v73
  %v83 = vpack.c.bf16 %v76, %v75
  %v84 = vpack.c.bf16 %v78, %v77
  %v85 = vpack.c.bf16 %v80, %v79
  %v86 = vld [vmem:[%s6] sm:$0x1]
  %v88 = vperm.slane %v86, 0
  %v91 = vsel %vm55, %v81, 0
  %93 = vmatpush.bf16.msra.mxu0 0
  %94 = vmatpush.bf16.msra.mxu0 0
  %95 = vmatpush.bf16.msra.mxu0 0
  %96 = vmatpush.bf16.msra.mxu0 0
  %97 = vmatpush.bf16.msra.mxu0 %v85
  %98 = vmatpush.bf16.msra.mxu0 %v84
  %99 = vmatpush.bf16.msra.mxu0 %v83
  %100 = vmatpush.bf16.msra.mxu0 %v82
  %101 = vmatmul.bf16.gmra.mxu0 %v91
  %v102 = vpop.f32.mrf.mxu0
  %v103 = vadd.f32 %v88, %v102
  %v104 = vpop.f32.mrf.mxu0
  %v105 = vadd.f32 %v88, %v104
  %106 = vdwg.mxu0
  %v107 = vmul.f32 %v103, 0.5
  %v108 = vmul.f32 %v105, 0.5
  %v109 = vtanh.pop %v107
  %v110 = vtanh.pop %v108
  %v111 = vmul.f32 %v109, 0.5
  %v112 = vmul.f32 %v110, 0.5
  %v113 = vadd.f32 %v111, 0.5
  %v114 = vadd.f32 %v112, 0.5
  %v115 = vmul.f32 %v103, %v113
  %v116 = vmul.f32 %v105, %v114
  %v117 = vld [vmem:[%s7] sm:$0xff]
  %v118 = vld [vmem:[%s7 + $0x8] sm:$0xff]
  %v119 = vld [vmem:[%s7 + $0x10] sm:$0xff]
  %v120 = vld [vmem:[%s7 + $0x18] sm:$0xff]
  %v121 = vld [vmem:[%s7 + $0x20] sm:$0xff]
  %v122 = vld [vmem:[%s7 + $0x28] sm:$0xff]
  %v123 = vld [vmem:[%s7 + $0x30] sm:$0xff]
  %v124 = vld [vmem:[%s7 + $0x38] sm:$0xff]
  %v125 = vpack.c.bf16 %v116, %v115
  %v126 = vpack.c.bf16 %v118, %v117
  %v127 = vpack.c.bf16 %v120, %v119
  %v128 = vpack.c.bf16 %v122, %v121
  %v129 = vpack.c.bf16 %v124, %v123
  %v130 = vld [vmem:[%s8] sm:$0x1]
  %v132 = vperm.slane %v130, 0
  %v135 = vsel %vm55, %v125, 0
  %137 = vmatpush.bf16.msra.mxu0 0
  %138 = vmatpush.bf16.msra.mxu0 0
  %139 = vmatpush.bf16.msra.mxu0 0
  %140 = vmatpush.bf16.msra.mxu0 0
  %141 = vmatpush.bf16.msra.mxu0 %v129
  %142 = vmatpush.bf16.msra.mxu0 %v128
  %143 = vmatpush.bf16.msra.mxu0 %v127
  %144 = vmatpush.bf16.msra.mxu0 %v126
  %145 = vmatmul.bf16.gmra.mxu0 %v135
  %v146 = vpop.f32.mrf.mxu0
  %v147 = vadd.f32 %v132, %v146
  %v148 = vpop.f32.mrf.mxu0
  %v149 = vadd.f32 %v132, %v148
  %150 = vdwg.mxu0
  %v151 = vmul.f32 %v147, 0.5
  %v152 = vmul.f32 %v149, 0.5
  %v153 = vtanh.pop %v151
  %v154 = vtanh.pop %v152
  %v155 = vmul.f32 %v153, 0.5
  %v156 = vmul.f32 %v154, 0.5
  %v157 = vadd.f32 %v155, 0.5
  %v158 = vadd.f32 %v156, 0.5
  %v159 = vmul.f32 %v147, %v157
  %v160 = vmul.f32 %v149, %v158
  %v161 = vld [vmem:[%s9] sm:$0xff]
  %v162 = vld [vmem:[%s9 + $0x8] sm:$0xff]
  %v163 = vld [vmem:[%s9 + $0x10] sm:$0xff]
  %v164 = vld [vmem:[%s9 + $0x18] sm:$0xff]
  %v165 = vld [vmem:[%s9 + $0x20] sm:$0xff]
  %v166 = vld [vmem:[%s9 + $0x28] sm:$0xff]
  %v167 = vld [vmem:[%s9 + $0x30] sm:$0xff]
  %v168 = vld [vmem:[%s9 + $0x38] sm:$0xff]
  %v169 = vpack.c.bf16 %v160, %v159
  %v170 = vpack.c.bf16 %v162, %v161
  %v171 = vpack.c.bf16 %v164, %v163
  %v172 = vpack.c.bf16 %v166, %v165
  %v173 = vpack.c.bf16 %v168, %v167
  %v174 = vld [vmem:[%s1] sm:$0xff]
  %v175 = vld [vmem:[%s1 + $0x8] sm:$0xff]
  %s176 = scalar_lea.vmem %s3, 64
  %v177 = vld [vmem:[%s176] sm:$0xff]
  %v178 = vld [vmem:[%s176 + $0x8] sm:$0xff]
  %v179 = vld [vmem:[%s176 + $0x10] sm:$0xff]
  %v180 = vld [vmem:[%s176 + $0x18] sm:$0xff]
  %v181 = vld [vmem:[%s176 + $0x20] sm:$0xff]
  %v182 = vld [vmem:[%s176 + $0x28] sm:$0xff]
  %v183 = vld [vmem:[%s176 + $0x30] sm:$0xff]
  %v184 = vld [vmem:[%s176 + $0x38] sm:$0xff]
  %v185 = vpack.c.bf16 %v175, %v174
  %v186 = vpack.c.bf16 %v178, %v177
  %v187 = vpack.c.bf16 %v180, %v179
  %v188 = vpack.c.bf16 %v182, %v181
  %v189 = vpack.c.bf16 %v184, %v183
  %s190 = scalar_lea.vmem %s4, 1
  %v191 = vld [vmem:[%s190] sm:$0x1]
  %v193 = vperm.slane %v191, 0
  %v196 = vsel %vm55, %v185, 0
  %198 = vmatpush.bf16.msra.mxu0 0
  %199 = vmatpush.bf16.msra.mxu0 0
  %200 = vmatpush.bf16.msra.mxu0 0
  %201 = vmatpush.bf16.msra.mxu0 0
  %202 = vmatpush.bf16.msra.mxu0 %v189
  %203 = vmatpush.bf16.msra.mxu0 %v188
  %204 = vmatpush.bf16.msra.mxu0 %v187
  %205 = vmatpush.bf16.msra.mxu0 %v186
  %206 = vmatmul.bf16.gmra.mxu0 %v196
  %v207 = vpop.f32.mrf.mxu0
  %v208 = vadd.f32 %v193, %v207
  %v209 = vpop.f32.mrf.mxu0
  %v210 = vadd.f32 %v193, %v209
  %211 = vdwg.mxu0
  %s212 = scalar_lea.vmem %s5, 64
  %v213 = vld [vmem:[%s212] sm:$0xff]
  %v214 = vld [vmem:[%s212 + $0x8] sm:$0xff]
  %v215 = vld [vmem:[%s212 + $0x10] sm:$0xff]
  %v216 = vld [vmem:[%s212 + $0x18] sm:$0xff]
  %v217 = vld [vmem:[%s212 + $0x20] sm:$0xff]
  %v218 = vld [vmem:[%s212 + $0x28] sm:$0xff]
  %v219 = vld [vmem:[%s212 + $0x30] sm:$0xff]
  %v220 = vld [vmem:[%s212 + $0x38] sm:$0xff]
  %v221 = vpack.c.bf16 %v210, %v208
  %v222 = vpack.c.bf16 %v214, %v213
  %v223 = vpack.c.bf16 %v216, %v215
  %v224 = vpack.c.bf16 %v218, %v217
  %v225 = vpack.c.bf16 %v220, %v219
  %s226 = scalar_lea.vmem %s6, 1
  %v227 = vld [vmem:[%s226] sm:$0x1]
  %v229 = vperm.slane %v227, 0
  %v232 = vsel %vm55, %v221, 0
  %234 = vmatpush.bf16.msra.mxu0 0
  %235 = vmatpush.bf16.msra.mxu0 0
  %236 = vmatpush.bf16.msra.mxu0 0
  %237 = vmatpush.bf16.msra.mxu0 0
  %238 = vmatpush.bf16.msra.mxu0 %v225
  %239 = vmatpush.bf16.msra.mxu0 %v224
  %240 = vmatpush.bf16.msra.mxu0 %v223
  %241 = vmatpush.bf16.msra.mxu0 %v222
  %242 = vmatmul.bf16.gmra.mxu0 %v232
  %v243 = vpop.f32.mrf.mxu0
  %v244 = vadd.f32 %v229, %v243
  %v245 = vpop.f32.mrf.mxu0
  %v246 = vadd.f32 %v229, %v245
  %247 = vdwg.mxu0
  %v248 = vmul.f32 %v244, 0.5
  %v249 = vmul.f32 %v246, 0.5
  %v250 = vtanh.pop %v248
  %v251 = vtanh.pop %v249
  %v252 = vmul.f32 %v250, 0.5
  %v253 = vmul.f32 %v251, 0.5
  %v254 = vadd.f32 %v252, 0.5
  %v255 = vadd.f32 %v253, 0.5
  %v256 = vmul.f32 %v244, %v254
  %v257 = vmul.f32 %v246, %v255
  %s258 = scalar_lea.vmem %s7, 64
  %v259 = vld [vmem:[%s258] sm:$0xff]
  %v260 = vld [vmem:[%s258 + $0x8] sm:$0xff]
  %v261 = vld [vmem:[%s258 + $0x10] sm:$0xff]
  %v262 = vld [vmem:[%s258 + $0x18] sm:$0xff]
  %v263 = vld [vmem:[%s258 + $0x20] sm:$0xff]
  %v264 = vld [vmem:[%s258 + $0x28] sm:$0xff]
  %v265 = vld [vmem:[%s258 + $0x30] sm:$0xff]
  %v266 = vld [vmem:[%s258 + $0x38] sm:$0xff]
  %v267 = vpack.c.bf16 %v257, %v256
  %v268 = vpack.c.bf16 %v260, %v259
  %v269 = vpack.c.bf16 %v262, %v261
  %v270 = vpack.c.bf16 %v264, %v263
  %v271 = vpack.c.bf16 %v266, %v265
  %s272 = scalar_lea.vmem %s8, 1
  %v273 = vld [vmem:[%s272] sm:$0x1]
  %v275 = vperm.slane %v273, 0
  %v278 = vsel %vm55, %v267, 0
  %280 = vmatpush.bf16.msra.mxu0 0
  %281 = vmatpush.bf16.msra.mxu0 0
  %282 = vmatpush.bf16.msra.mxu0 0
  %283 = vmatpush.bf16.msra.mxu0 0
  %284 = vmatpush.bf16.msra.mxu0 %v271
  %285 = vmatpush.bf16.msra.mxu0 %v270
  %286 = vmatpush.bf16.msra.mxu0 %v269
  %287 = vmatpush.bf16.msra.mxu0 %v268
  %288 = vmatmul.bf16.gmra.mxu0 %v278
  %v289 = vpop.f32.mrf.mxu0
  %v290 = vadd.f32 %v275, %v289
  %v291 = vpop.f32.mrf.mxu0
  %v292 = vadd.f32 %v275, %v291
  %293 = vdwg.mxu0
  %v294 = vmul.f32 %v290, 0.5
  %v295 = vmul.f32 %v292, 0.5
  %v296 = vtanh.pop %v294
  %v297 = vtanh.pop %v295
  %v298 = vmul.f32 %v296, 0.5
  %v299 = vmul.f32 %v297, 0.5
  %v300 = vadd.f32 %v298, 0.5
  %v301 = vadd.f32 %v299, 0.5
  %v302 = vmul.f32 %v290, %v300
  %v303 = vmul.f32 %v292, %v301
  %s304 = scalar_lea.vmem %s9, 64
  %v305 = vld [vmem:[%s304] sm:$0xff]
  %v306 = vld [vmem:[%s304 + $0x8] sm:$0xff]
  %v307 = vld [vmem:[%s304 + $0x10] sm:$0xff]
  %v308 = vld [vmem:[%s304 + $0x18] sm:$0xff]
  %v309 = vld [vmem:[%s304 + $0x20] sm:$0xff]
  %v310 = vld [vmem:[%s304 + $0x28] sm:$0xff]
  %v311 = vld [vmem:[%s304 + $0x30] sm:$0xff]
  %v312 = vld [vmem:[%s304 + $0x38] sm:$0xff]
  %v313 = vpack.c.bf16 %v303, %v302
  %v314 = vpack.c.bf16 %v306, %v305
  %v315 = vpack.c.bf16 %v308, %v307
  %v316 = vpack.c.bf16 %v310, %v309
  %v317 = vpack.c.bf16 %v312, %v311
  %v319 = vsel %vm55, %v313, 0
  %321 = vmatpush.bf16.msra.mxu0 0
  %322 = vmatpush.bf16.msra.mxu0 0
  %323 = vmatpush.bf16.msra.mxu0 0
  %324 = vmatpush.bf16.msra.mxu0 0
  %325 = vmatpush.bf16.msra.mxu0 %v317
  %326 = vmatpush.bf16.msra.mxu0 %v316
  %327 = vmatpush.bf16.msra.mxu0 %v315
  %328 = vmatpush.bf16.msra.mxu0 %v314
  %329 = vmatmul.bf16.gmra.mxu0 %v319
  %v330 = vpop.f32.mrf.mxu0
  %v331 = vadd.f32 0.0, %v330
  %v332 = vpop.f32.mrf.mxu0
  %v333 = vadd.f32 0.0, %v332
  %334 = vdwg.mxu0
  %v336 = vsel %vm55, %v169, 0
  %338 = vmatpush.bf16.msra.mxu0 0
  %339 = vmatpush.bf16.msra.mxu0 0
  %340 = vmatpush.bf16.msra.mxu0 0
  %341 = vmatpush.bf16.msra.mxu0 0
  %342 = vmatpush.bf16.msra.mxu0 %v173
  %343 = vmatpush.bf16.msra.mxu0 %v172
  %344 = vmatpush.bf16.msra.mxu0 %v171
  %345 = vmatpush.bf16.msra.mxu0 %v170
  %346 = vmatmul.bf16.gmra.mxu0 %v336
  %v347 = vpop.f32.mrf.mxu0
  %v348 = vadd.f32 %v331, %v347
  %v349 = vpop.f32.mrf.mxu0
  %v350 = vadd.f32 %v333, %v349
  %351 = vdwg.mxu0
  %v352 = vld [vmem:[%s2] sm:$0xff]
  %v353 = vld [vmem:[%s2 + $0x8] sm:$0xff]
  %s354 = scalar_lea.vmem %s3, 128
  %v355 = vld [vmem:[%s354] sm:$0xff]
  %v356 = vld [vmem:[%s354 + $0x8] sm:$0xff]
  %v357 = vld [vmem:[%s354 + $0x10] sm:$0xff]
  %v358 = vld [vmem:[%s354 + $0x18] sm:$0xff]
  %v359 = vld [vmem:[%s354 + $0x20] sm:$0xff]
  %v360 = vld [vmem:[%s354 + $0x28] sm:$0xff]
  %v361 = vld [vmem:[%s354 + $0x30] sm:$0xff]
  %v362 = vld [vmem:[%s354 + $0x38] sm:$0xff]
  %v363 = vpack.c.bf16 %v353, %v352
  %v364 = vpack.c.bf16 %v356, %v355
  %v365 = vpack.c.bf16 %v358, %v357
  %v366 = vpack.c.bf16 %v360, %v359
  %v367 = vpack.c.bf16 %v362, %v361
  %s368 = scalar_lea.vmem %s4, 2
  %v369 = vld [vmem:[%s368] sm:$0x1]
  %v371 = vperm.slane %v369, 0
  %v374 = vsel %vm55, %v363, 0
  %376 = vmatpush.bf16.msra.mxu0 0
  %377 = vmatpush.bf16.msra.mxu0 0
  %378 = vmatpush.bf16.msra.mxu0 0
  %379 = vmatpush.bf16.msra.mxu0 0
  %380 = vmatpush.bf16.msra.mxu0 %v367
  %381 = vmatpush.bf16.msra.mxu0 %v366
  %382 = vmatpush.bf16.msra.mxu0 %v365
  %383 = vmatpush.bf16.msra.mxu0 %v364
  %384 = vmatmul.bf16.gmra.mxu0 %v374
  %v385 = vpop.f32.mrf.mxu0
  %v386 = vadd.f32 %v371, %v385
  %v387 = vpop.f32.mrf.mxu0
  %v388 = vadd.f32 %v371, %v387
  %389 = vdwg.mxu0
  %s390 = scalar_lea.vmem %s5, 128
  %v391 = vld [vmem:[%s390] sm:$0xff]
  %v392 = vld [vmem:[%s390 + $0x8] sm:$0xff]
  %v393 = vld [vmem:[%s390 + $0x10] sm:$0xff]
  %v394 = vld [vmem:[%s390 + $0x18] sm:$0xff]
  %v395 = vld [vmem:[%s390 + $0x20] sm:$0xff]
  %v396 = vld [vmem:[%s390 + $0x28] sm:$0xff]
  %v397 = vld [vmem:[%s390 + $0x30] sm:$0xff]
  %v398 = vld [vmem:[%s390 + $0x38] sm:$0xff]
  %v399 = vpack.c.bf16 %v388, %v386
  %v400 = vpack.c.bf16 %v392, %v391
  %v401 = vpack.c.bf16 %v394, %v393
  %v402 = vpack.c.bf16 %v396, %v395
  %v403 = vpack.c.bf16 %v398, %v397
  %s404 = scalar_lea.vmem %s6, 2
  %v405 = vld [vmem:[%s404] sm:$0x1]
  %v407 = vperm.slane %v405, 0
  %v410 = vsel %vm55, %v399, 0
  %412 = vmatpush.bf16.msra.mxu0 0
  %413 = vmatpush.bf16.msra.mxu0 0
  %414 = vmatpush.bf16.msra.mxu0 0
  %415 = vmatpush.bf16.msra.mxu0 0
  %416 = vmatpush.bf16.msra.mxu0 %v403
  %417 = vmatpush.bf16.msra.mxu0 %v402
  %418 = vmatpush.bf16.msra.mxu0 %v401
  %419 = vmatpush.bf16.msra.mxu0 %v400
  %420 = vmatmul.bf16.gmra.mxu0 %v410
  %v421 = vpop.f32.mrf.mxu0
  %v422 = vadd.f32 %v407, %v421
  %v423 = vpop.f32.mrf.mxu0
  %v424 = vadd.f32 %v407, %v423
  %425 = vdwg.mxu0
  %v426 = vmul.f32 %v422, 0.5
  %v427 = vmul.f32 %v424, 0.5
  %v428 = vtanh.pop %v426
  %v429 = vtanh.pop %v427
  %v430 = vmul.f32 %v428, 0.5
  %v431 = vmul.f32 %v429, 0.5
  %v432 = vadd.f32 %v430, 0.5
  %v433 = vadd.f32 %v431, 0.5
  %v434 = vmul.f32 %v422, %v432
  %v435 = vmul.f32 %v424, %v433
  %s436 = scalar_lea.vmem %s7, 128
  %v437 = vld [vmem:[%s436] sm:$0xff]
  %v438 = vld [vmem:[%s436 + $0x8] sm:$0xff]
  %v439 = vld [vmem:[%s436 + $0x10] sm:$0xff]
  %v440 = vld [vmem:[%s436 + $0x18] sm:$0xff]
  %v441 = vld [vmem:[%s436 + $0x20] sm:$0xff]
  %v442 = vld [vmem:[%s436 + $0x28] sm:$0xff]
  %v443 = vld [vmem:[%s436 + $0x30] sm:$0xff]
  %v444 = vld [vmem:[%s436 + $0x38] sm:$0xff]
  %v445 = vpack.c.bf16 %v435, %v434
  %v446 = vpack.c.bf16 %v438, %v437
  %v447 = vpack.c.bf16 %v440, %v439
  %v448 = vpack.c.bf16 %v442, %v441
  %v449 = vpack.c.bf16 %v444, %v443
  %s450 = scalar_lea.vmem %s8, 2
  %v451 = vld [vmem:[%s450] sm:$0x1]
  %v453 = vperm.slane %v451, 0
  %v456 = vsel %vm55, %v445, 0
  %458 = vmatpush.bf16.msra.mxu0 0
  %459 = vmatpush.bf16.msra.mxu0 0
  %460 = vmatpush.bf16.msra.mxu0 0
  %461 = vmatpush.bf16.msra.mxu0 0
  %462 = vmatpush.bf16.msra.mxu0 %v449
  %463 = vmatpush.bf16.msra.mxu0 %v448
  %464 = vmatpush.bf16.msra.mxu0 %v447
  %465 = vmatpush.bf16.msra.mxu0 %v446
  %466 = vmatmul.bf16.gmra.mxu0 %v456
  %v467 = vpop.f32.mrf.mxu0
  %v468 = vadd.f32 %v453, %v467
  %v469 = vpop.f32.mrf.mxu0
  %v470 = vadd.f32 %v453, %v469
  %471 = vdwg.mxu0
  %v472 = vmul.f32 %v468, 0.5
  %v473 = vmul.f32 %v470, 0.5
  %v474 = vtanh.pop %v472
  %v475 = vtanh.pop %v473
  %v476 = vmul.f32 %v474, 0.5
  %v477 = vmul.f32 %v475, 0.5
  %v478 = vadd.f32 %v476, 0.5
  %v479 = vadd.f32 %v477, 0.5
  %v480 = vmul.f32 %v468, %v478
  %v481 = vmul.f32 %v470, %v479
  %s482 = scalar_lea.vmem %s9, 128
  %v483 = vld [vmem:[%s482] sm:$0xff]
  %v484 = vld [vmem:[%s482 + $0x8] sm:$0xff]
  %v485 = vld [vmem:[%s482 + $0x10] sm:$0xff]
  %v486 = vld [vmem:[%s482 + $0x18] sm:$0xff]
  %v487 = vld [vmem:[%s482 + $0x20] sm:$0xff]
  %v488 = vld [vmem:[%s482 + $0x28] sm:$0xff]
  %v489 = vld [vmem:[%s482 + $0x30] sm:$0xff]
  %v490 = vld [vmem:[%s482 + $0x38] sm:$0xff]
  %v491 = vpack.c.bf16 %v481, %v480
  %v492 = vpack.c.bf16 %v484, %v483
  %v493 = vpack.c.bf16 %v486, %v485
  %v494 = vpack.c.bf16 %v488, %v487
  %v495 = vpack.c.bf16 %v490, %v489
  %v497 = vsel %vm55, %v491, 0
  %499 = vmatpush.bf16.msra.mxu0 0
  %500 = vmatpush.bf16.msra.mxu0 0
  %501 = vmatpush.bf16.msra.mxu0 0
  %502 = vmatpush.bf16.msra.mxu0 0
  %503 = vmatpush.bf16.msra.mxu0 %v495
  %504 = vmatpush.bf16.msra.mxu0 %v494
  %505 = vmatpush.bf16.msra.mxu0 %v493
  %506 = vmatpush.bf16.msra.mxu0 %v492
  %507 = vmatmul.bf16.gmra.mxu0 %v497
  %v508 = vpop.f32.mrf.mxu0
  %v509 = vadd.f32 0.0, %v508
  %v510 = vpop.f32.mrf.mxu0
  %v511 = vadd.f32 0.0, %v510
  %512 = vdwg.mxu0
  %v513 = vadd.f32 %v348, %v509
  %v514 = vadd.f32 %v350, %v511
  %vm515 = vcmask 31744
  %516 = vst.msk [vmem:[%s10] sm:$0xff] %vm515, %v513
  %517 = vst.msk [vmem:[%s10 + $0x8] sm:$0xff] %vm515, %v514
  // Predicated region
  $region42: #{_lambda_.9} parent=0 // pred_check
    _
  $region43: #{_lambda_.9} parent=0 // pred_check_branch
    %519 = sbr.rel (0) target = $region45
  $region44: #{_lambda_.9} parent=0 // pred_region
    _
  $region45: #{_lambda_.9} parent=0 // pred_fallthru
    _
  // Predicated region
  $region46: #{_lambda_.9} parent=0 // pred_check
    _
  $region47: #{_lambda_.9} parent=0 // pred_check_branch
    %521 = sbr.rel (0) target = $region49
  $region48: #{_lambda_.9} parent=0 // pred_region
    _
  $region49: #{_lambda_.9} parent=0 // pred_fallthru
    _

</llo_original>
